<compile_context>
chip_gen: v7x
topology: tpu7x:2x2x1
jax: 0.10.0
libtpu: 0.0.40
codegen_flags: <defaults>
</compile_context>

<pallas_src>
import functools

import jax
import jax.numpy as jnp
from jax import lax
from jax.experimental import pallas as pl
from jax.experimental.pallas import tpu as pltpu

EPS = 1e-5
LANES = 128


def _round_up(x, m):
    return (x + m - 1) // m * m


def _pad2d(a, rows, cols):
    r, c = a.shape
    return jnp.pad(a, ((0, rows - r), (0, cols - c)))


def _im2col(x_nhwc, kh, kw, stride, pad):
    """Extract conv patches. Returns ((M, kh*kw*C), Ho, Wo)."""
    N, H, W, C = x_nhwc.shape
    xp = jnp.pad(x_nhwc, ((0, 0), (pad, pad), (pad, pad), (0, 0)))
    Ho = (H + 2 * pad - kh) // stride + 1
    Wo = (W + 2 * pad - kw) // stride + 1
    cols = []
    for i in range(kh):
        for j in range(kw):
            cols.append(xp[:, i:i + (Ho - 1) * stride + 1:stride,
                            j:j + (Wo - 1) * stride + 1:stride, :])
    patches = jnp.stack(cols, axis=3)                 # (N, Ho, Wo, kh*kw, C)
    return patches.reshape(N * Ho * Wo, kh * kw * C), Ho, Wo


def init_params(key, in_channels, out_channels, stride):
    """Deterministic parameter init (PyTorch-style uniform for conv w/b)."""
    ks = jax.random.split(key, 6)

    def conv_w(k, kh, kw, ci, co):
        bound = 1.0 / float(jnp.sqrt(ci * kh * kw))
        return jax.random.uniform(k, (kh, kw, ci, co), jnp.float32,
                                  -bound, bound)

    def conv_b(k, kh, kw, ci, co):
        bound = 1.0 / float(jnp.sqrt(ci * kh * kw))
        return jax.random.uniform(k, (1, co), jnp.float32, -bound, bound)

    p = {
        'w1': conv_w(ks[0], 3, 3, in_channels, out_channels),
        'b1': conv_b(ks[1], 3, 3, in_channels, out_channels),
        'g1': jnp.ones((1, out_channels), jnp.float32),
        'be1': jnp.zeros((1, out_channels), jnp.float32),
        'w2': conv_w(ks[2], 3, 3, out_channels, out_channels),
        'b2': conv_b(ks[3], 3, 3, out_channels, out_channels),
        'g2': jnp.ones((1, out_channels), jnp.float32),
        'be2': jnp.zeros((1, out_channels), jnp.float32),
    }
    if stride != 1 or in_channels != out_channels:
        p['ws'] = conv_w(ks[4], 1, 1, in_channels, out_channels)
        p['bs'] = conv_b(ks[5], 1, 1, in_channels, out_channels)
        p['gs'] = jnp.ones((1, out_channels), jnp.float32)
        p['bes'] = jnp.zeros((1, out_channels), jnp.float32)
    return p


# ------------------------------ forward pass --------------------------------

@functools.partial(jax.jit, static_argnames=("stride", "tm"))
def basic_block_forward(x_nchw, params, stride, tm=None):
    x = jnp.transpose(x_nchw, (0, 2, 3, 1)).astype(jnp.float32)  # NCHW -> NHWC
    N, H, W, Cin = x.shape
    Cout = params['w1'].shape[-1]
    Cp = _round_up(Cout, LANES)                  # lane-dense channel padding
    has_proj = 'ws' in params

    # -------- conv1 (strided) + projection shortcut as im2col matmuls -------
    p1, Ho, Wo = _im2col(x, 3, 3, stride, 1)
    HW = Ho * Wo
    M = N * HW
    K1 = 9 * Cin
    K1p = _round_up(K1, 8)

    if tm is None:                               # M-tile: big tiles amortize
        tm = 512 if M >= 512 else _round_up(M, 16)   # per-step overhead
    tm = min(tm, _round_up(M, 16))
    assert tm % 8 == 0 and tm > 0
    Mpad = _round_up(M, tm)
    ntiles = Mpad // tm

    # bf16 MXU operands (f32 accumulation); weights padded to lane-dense Cp.
    p1 = _pad2d(p1, Mpad, K1p).astype(jnp.bfloat16)
    w1 = _pad2d(params['w1'].reshape(K1, Cout), K1p, Cp).astype(jnp.bfloat16)
    b1 = _pad2d(params['b1'], 1, Cp)
    row_mask = (jnp.arange(Mpad) < M).astype(jnp.float32).reshape(Mpad, 1)

    cparams = pltpu.CompilerParams(
        dimension_semantics=("parallel",),        # megacore on v7x
        vmem_limit_bytes=64 * 1024 * 1024)        # above the 32 MiB default

    row_spec = pl.BlockSpec((tm, 1), lambda i: (i, 0))
    vec_spec = pl.BlockSpec((1, Cp), lambda i: (0, 0))      # resident vectors
    y_spec = pl.BlockSpec((tm, Cp), lambda i: (i, 0))
    st_spec = pl.BlockSpec((1, 2, Cp), lambda i: (i, 0, 0))

    # ---- kernel 1: conv matmul + partial BN statistics (per M-tile) --------
    def conv1_proj_kernel(p_ref, w_ref, b_ref, sp_ref, ws_ref, bs_ref, m_ref,
                          y_ref, ys_ref, st1_ref, sts_ref):
        valid = m_ref[...]                                    # (tm, 1) row mask
        y = jnp.dot(p_ref[...], w_ref[...],
                    preferred_element_type=jnp.float32) + b_ref[...]
        y_ref[...] = y
        yv = y * valid
        st1_ref[0, 0:1, :] = jnp.sum(yv, axis=0, keepdims=True)
        st1_ref[0, 1:2, :] = jnp.sum(yv * y, axis=0, keepdims=True)

        s = jnp.dot(sp_ref[...], ws_ref[...],
                    preferred_element_type=jnp.float32) + bs_ref[...]
        ys_ref[...] = s
        sv = s * valid
        sts_ref[0, 0:1, :] = jnp.sum(sv, axis=0, keepdims=True)
        sts_ref[0, 1:2, :] = jnp.sum(sv * s, axis=0, keepdims=True)

    def conv1_id_kernel(p_ref, w_ref, b_ref, m_ref, y_ref, st1_ref):
        valid = m_ref[...]
        y = jnp.dot(p_ref[...], w_ref[...],
                    preferred_element_type=jnp.float32) + b_ref[...]
        y_ref[...] = y
        yv = y * valid
        st1_ref[0, 0:1, :] = jnp.sum(yv, axis=0, keepdims=True)
        st1_ref[0, 1:2, :] = jnp.sum(yv * y, axis=0, keepdims=True)

    ysc = None
    sts = None
    if has_proj:
        Cip = _round_up(Cin, 8)
        sp = x[:, ::stride, ::stride, :].reshape(M, Cin)       # 1x1, stride s
        sp = _pad2d(sp, Mpad, Cip).astype(jnp.bfloat16)
        ws = _pad2d(params['ws'].reshape(Cin, Cout), Cip, Cp).astype(jnp.bfloat16)
        bs = _pad2d(params['bs'], 1, Cp)

        flops1 = 2 * Mpad * Cp * (K1p + Cip)
        bytes1 = ((p1.size + sp.size + w1.size + ws.size) * 2
                  + (2 * Mpad * Cp + 2 * ntiles * 2 * Cp) * 4)
        y1, ysc, st1, sts = pl.pallas_call(
            conv1_proj_kernel,
            grid=(ntiles,),
            in_specs=[pl.BlockSpec((tm, K1p), lambda i: (i, 0)),
                      pl.BlockSpec((K1p, Cp), lambda i: (0, 0)),
                      vec_spec,
                      pl.BlockSpec((tm, Cip), lambda i: (i, 0)),
                      pl.BlockSpec((Cip, Cp), lambda i: (0, 0)),
                      vec_spec,
                      row_spec],
            out_specs=(y_spec, y_spec, st_spec, st_spec),
            out_shape=(jax.ShapeDtypeStruct((Mpad, Cp), jnp.float32),
                       jax.ShapeDtypeStruct((Mpad, Cp), jnp.float32),
                       jax.ShapeDtypeStruct((ntiles, 2, Cp), jnp.float32),
                       jax.ShapeDtypeStruct((ntiles, 2, Cp), jnp.float32)),
            compiler_params=cparams,
            cost_estimate=pl.CostEstimate(flops=flops1, transcendentals=0,
                                          bytes_accessed=bytes1),
        )(p1, w1, b1, sp, ws, bs, row_mask)
    else:
        flops1 = 2 * Mpad * Cp * K1p
        bytes1 = ((p1.size + w1.size) * 2
                  + (Mpad * Cp + ntiles * 2 * Cp) * 4)
        y1, st1 = pl.pallas_call(
            conv1_id_kernel,
            grid=(ntiles,),
            in_specs=[pl.BlockSpec((tm, K1p), lambda i: (i, 0)),
                      pl.BlockSpec((K1p, Cp), lambda i: (0, 0)),
                      vec_spec,
                      row_spec],
            out_specs=(y_spec, st_spec),
            out_shape=(jax.ShapeDtypeStruct((Mpad, Cp), jnp.float32),
                       jax.ShapeDtypeStruct((ntiles, 2, Cp), jnp.float32)),
            compiler_params=cparams,
            cost_estimate=pl.CostEstimate(flops=flops1, transcendentals=0,
                                          bytes_accessed=bytes1),
        )(p1, w1, b1, row_mask)

    # Combine partial stats -> per-channel affine (biased var, PyTorch train).
    def bn_scale_shift(stats, g, be):
        st = jnp.sum(stats, axis=0)                           # (2, Cp)
        mean = st[0:1, :] * (1.0 / M)
        var = jnp.maximum(st[1:2, :] * (1.0 / M) - mean * mean, 0.0)
        scale = g * lax.rsqrt(var + EPS)
        shift = be - mean * scale
        return scale, shift

    g1 = _pad2d(params['g1'], 1, Cp)
    be1 = _pad2d(params['be1'], 1, Cp)
    scale1, shift1 = bn_scale_shift(st1, g1, be1)

    # ---- kernel 2: bn1 + relu + direct 3x3 conv2 + partial bn2 stats -------
    w2 = jnp.pad(params['w2'],
                 ((0, 0), (0, 0), (0, Cp - Cout), (0, Cp - Cout)))
    w2 = w2.reshape(9, Cp, Cp).astype(jnp.bfloat16)
    b2 = _pad2d(params['b2'], 1, Cp)

    y1_img = y1[:M].reshape(N, HW, Cp)
    wo_idx = jnp.arange(HW) % Wo
    mask_l = (wo_idx >= 1).astype(jnp.float32).reshape(HW, 1)      # dj = -1
    mask_r = (wo_idx <= Wo - 2).astype(jnp.float32).reshape(HW, 1)  # dj = +1
    pad_rows = Wo + 1                          # flat-index halo for a 3x3 conv

    def conv2_kernel(y1_ref, sc1_ref, sh1_ref, w2_ref, b2_ref, ml_ref, mr_ref,
                     y2_ref, st2_ref, hbuf):
        # bn1 + relu in f32; image stays resident in VMEM (no HBM round trip).
        h = jnp.maximum(y1_ref[0] * sc1_ref[...] + sh1_ref[...], 0.0)
        zpad = jnp.zeros((pad_rows, Cp), jnp.float32)
        hbuf[0:pad_rows, :] = zpad
        hbuf[pad_rows + HW:2 * pad_rows + HW, :] = zpad
        hbuf[pad_rows:pad_rows + HW, :] = h

        # 3x3 conv as 9 shifted matmuls (bf16 operands, f32 accumulation).
        acc = jnp.zeros((HW, Cp), jnp.float32)
        for t in range(9):
            di, dj = t // 3 - 1, t % 3 - 1
            s = di * Wo + dj
            win = hbuf[pad_rows + s:pad_rows + s + HW, :]
            if dj == -1:                        # zero the W-boundary wraps
                win = win * ml_ref[...]
            elif dj == 1:
                win = win * mr_ref[...]
            acc = acc + jnp.dot(win.astype(jnp.bfloat16), w2_ref[t],
                                preferred_element_type=jnp.float32)
        y2 = acc + b2_ref[...]
        y2_ref[0] = y2
        st2_ref[0, 0:1, :] = jnp.sum(y2, axis=0, keepdims=True)
        st2_ref[0, 1:2, :] = jnp.sum(y2 * y2, axis=0, keepdims=True)

    img_spec = pl.BlockSpec((1, HW, Cp), lambda n: (n, 0, 0))
    cvec_spec = pl.BlockSpec((1, Cp), lambda n: (0, 0))
    mask_spec = pl.BlockSpec((HW, 1), lambda n: (0, 0))
    st2_spec = pl.BlockSpec((1, 2, Cp), lambda n: (n, 0, 0))

    flops2 = N * 9 * 2 * HW * Cp * Cp
    bytes2 = 2 * N * HW * Cp * 4 + 9 * Cp * Cp * 2 + N * 2 * Cp * 4
    y2, st2 = pl.pallas_call(
        conv2_kernel,
        grid=(N,),
        in_specs=[img_spec, cvec_spec, cvec_spec,
                  pl.BlockSpec((9, Cp, Cp), lambda n: (0, 0, 0)),
                  cvec_spec, mask_spec, mask_spec],
        out_specs=(img_spec, st2_spec),
        out_shape=(jax.ShapeDtypeStruct((N, HW, Cp), jnp.float32),
                   jax.ShapeDtypeStruct((N, 2, Cp), jnp.float32)),
        scratch_shapes=[pltpu.VMEM((HW + 2 * pad_rows, Cp), jnp.float32)],
        compiler_params=cparams,
        cost_estimate=pl.CostEstimate(flops=flops2, transcendentals=0,
                                      bytes_accessed=bytes2),
    )(y1_img, scale1, shift1, w2, b2, mask_l, mask_r)

    g2 = _pad2d(params['g2'], 1, Cp)
    be2 = _pad2d(params['be2'], 1, Cp)
    scale2, shift2 = bn_scale_shift(st2, g2, be2)

    # ---- kernel 3: bn2 + shortcut (bn_s or identity) + add + relu ----------
    def finalize_proj_kernel(y2_ref, sc2_ref, sh2_ref, ys_ref, scs_ref,
                             shs_ref, o_ref):
        y = y2_ref[0] * sc2_ref[...] + sh2_ref[...]
        s = ys_ref[0] * scs_ref[...] + shs_ref[...]
        o_ref[0] = jnp.maximum(y + s, 0.0)

    def finalize_id_kernel(y2_ref, sc2_ref, sh2_ref, x_ref, o_ref):
        y = y2_ref[0] * sc2_ref[...] + sh2_ref[...]
        o_ref[0] = jnp.maximum(y + x_ref[0], 0.0)

    flops3 = 4 * N * HW * Cp
    bytes3 = 3 * N * HW * Cp * 4
    if has_proj:
        gs = _pad2d(params['gs'], 1, Cp)
        bes = _pad2d(params['bes'], 1, Cp)
        scale_s, shift_s = bn_scale_shift(sts, gs, bes)
        ysc_img = ysc[:M].reshape(N, HW, Cp)
        out = pl.pallas_call(
            finalize_proj_kernel,
            grid=(N,),
            in_specs=[img_spec, cvec_spec, cvec_spec,
                      img_spec, cvec_spec, cvec_spec],
            out_specs=img_spec,
            out_shape=jax.ShapeDtypeStruct((N, HW, Cp), jnp.float32),
            compiler_params=cparams,
            cost_estimate=pl.CostEstimate(flops=flops3, transcendentals=0,
                                          bytes_accessed=bytes3),
        )(y2, scale2, shift2, ysc_img, scale_s, shift_s)
    else:
        x_id = jnp.pad(x.reshape(N, HW, Cin), ((0, 0), (0, 0), (0, Cp - Cin)))
        out = pl.pallas_call(
            finalize_id_kernel,
            grid=(N,),
            in_specs=[img_spec, cvec_spec, cvec_spec, img_spec],
            out_specs=img_spec,
            out_shape=jax.ShapeDtypeStruct((N, HW, Cp), jnp.float32),
            compiler_params=cparams,
            cost_estimate=pl.CostEstimate(flops=flops3, transcendentals=0,
                                          bytes_accessed=bytes3),
        )(y2, scale2, shift2, x_id)

    out = out.reshape(N, Ho, Wo, Cp)[..., :Cout]
    return jnp.transpose(out, (0, 3, 1, 2))                     # NHWC -> NCHW


# --------------------------- pure-JAX reference -----------------------------

def reference_forward(x_nchw, params, stride, mxu_dtype=jnp.float32):
    """Reference; mxu_dtype=bfloat16 mimics the kernel's bf16 MXU operands."""
    x = jnp.transpose(x_nchw, (0, 2, 3, 1)).astype(jnp.float32)
    dn = ('NHWC', 'HWIO', 'NHWC')

    def conv(inp, w, b, s, pad):
        y = lax.conv_general_dilated(
            inp.astype(mxu_dtype), w.astype(mxu_dtype), (s, s),
            [(pad, pad), (pad, pad)], dimension_numbers=dn,
            preferred_element_type=jnp.float32)
        return y + b.reshape(1, 1, 1, -1)

    def bn(y, g, be):
        mean = jnp.mean(y, axis=(0, 1, 2), keepdims=True)
        var = jnp.mean((y - mean) ** 2, axis=(0, 1, 2), keepdims=True)
        return (y - mean) * lax.rsqrt(var + EPS) * g.reshape(1, 1, 1, -1) \
            + be.reshape(1, 1, 1, -1)

    o = jax.nn.relu(bn(conv(x, params['w1'], params['b1'], stride, 1),
                       params['g1'], params['be1']))
    o = bn(conv(o, params['w2'], params['b2'], 1, 1),
           params['g2'], params['be2'])
    if 'ws' in params:
        sc = bn(conv(x, params['ws'], params['bs'], stride, 0),
                params['gs'], params['bes'])
    else:
        sc = x
    return jnp.transpose(jax.nn.relu(o + sc), (0, 3, 1, 2))


# ----------------------------------- main ------------------------------------

if __name__ == "__main__":
    key = jax.random.PRNGKey(0)

    # (in_channels, out_channels, stride, tm).  tm=48 forces multiple M-tiles
    # plus masked padding rows to exercise the tiled-BN statistics path;
    # the second case exercises the identity-shortcut kernels.
    cases = [(4, 8, 2, 48), (8, 8, 1, None)]

    for idx, (cin, cout, stride, tm) in enumerate(cases):
        key, kx, kp = jax.random.split(key, 3)
        x = jax.random.normal(kx, (2, cin, 16, 16), jnp.float32)     # NCHW
        params = init_params(kp, cin, cout, stride)

        out = jax.block_until_ready(
            basic_block_forward(x, params, stride=stride, tm=tm))

        ho = (16 + 2 - 3) // stride + 1
        assert out.shape == (2, cout, ho, ho), out.shape

        # Tight check against a reference that also feeds bf16 to the MXU.
        ref_bf16 = reference_forward(x, params, stride, jnp.bfloat16)
        err = float(jnp.max(jnp.abs(out - ref_bf16)))
        assert jnp.allclose(out, ref_bf16, rtol=2e-3, atol=2e-3), (idx, err)

        # Loose sanity check against the full-f32 reference (bf16 MXU noise).
        ref_f32 = reference_forward(x, params, stride, jnp.float32)
        err32 = float(jnp.max(jnp.abs(out - ref_f32)))
        assert jnp.allclose(out, ref_f32, rtol=1e-1, atol=1e-1), (idx, err32)

    # TODO(synk): BatchNorm running-stat buffer updates (training side effect)
    # are not modeled; forward outputs are unaffected.
    print("KERNEL_OK")
</pallas_src>

<mosaic_0001>
module attributes {stable_mosaic.version = 11 : i64} {
  func.func @conv1_proj_kernel(%arg0: i32, %arg1: memref<48x40xbf16, #tpu.memory_space<vmem>>, %arg2: memref<40x128xbf16, #tpu.memory_space<vmem>>, %arg3: memref<1x128xf32, #tpu.memory_space<vmem>>, %arg4: memref<48x8xbf16, #tpu.memory_space<vmem>>, %arg5: memref<8x128xbf16, #tpu.memory_space<vmem>>, %arg6: memref<1x128xf32, #tpu.memory_space<vmem>>, %arg7: memref<48x1xf32, #tpu.memory_space<vmem>>, %arg8: memref<48x128xf32, #tpu.memory_space<vmem>>, %arg9: memref<48x128xf32, #tpu.memory_space<vmem>>, %arg10: memref<1x2x128xf32, #tpu.memory_space<vmem>>, %arg11: memref<1x2x128xf32, #tpu.memory_space<vmem>>) attributes {dimension_semantics = [#tpu.dimension_semantics<parallel>], iteration_bounds = array<i64: 3>, scalar_prefetch = 0 : i64, scratch_operands = 0 : i64, tpu.core_type = #tpu.core_type<tc>, window_params = [{transform_indices = @transform_0, window_bounds = array<i64: 48, 40>}, {pipeline_mode = #tpu.pipeline_mode<synchronous>, transform_indices = @transform_1, window_bounds = array<i64: 40, 128>}, {pipeline_mode = #tpu.pipeline_mode<synchronous>, transform_indices = @transform_2, window_bounds = array<i64: 1, 128>}, {transform_indices = @transform_3, window_bounds = array<i64: 48, 8>}, {pipeline_mode = #tpu.pipeline_mode<synchronous>, transform_indices = @transform_4, window_bounds = array<i64: 8, 128>}, {pipeline_mode = #tpu.pipeline_mode<synchronous>, transform_indices = @transform_5, window_bounds = array<i64: 1, 128>}, {transform_indices = @transform_6, window_bounds = array<i64: 48, 1>}, {transform_indices = @transform_7, window_bounds = array<i64: 48, 128>}, {transform_indices = @transform_8, window_bounds = array<i64: 48, 128>}, {transform_indices = @transform_9, window_bounds = array<i64: 1, 2, 128>}, {transform_indices = @transform_10, window_bounds = array<i64: 1, 2, 128>}]} {
    %c0 = arith.constant 0 : index
    %c0_0 = arith.constant 0 : index
    %0 = vector.load %arg7[%c0, %c0_0] : memref<48x1xf32, #tpu.memory_space<vmem>>, vector<48x1xf32>
    %c0_1 = arith.constant 0 : index
    %c0_2 = arith.constant 0 : index
    %1 = vector.load %arg1[%c0_1, %c0_2] : memref<48x40xbf16, #tpu.memory_space<vmem>>, vector<48x40xbf16>
    %c0_3 = arith.constant 0 : index
    %c0_4 = arith.constant 0 : index
    %2 = vector.load %arg2[%c0_3, %c0_4] : memref<40x128xbf16, #tpu.memory_space<vmem>>, vector<40x128xbf16>
    %cst = arith.constant dense<0.000000e+00> : vector<48x128xf32>
    %3 = tpu.matmul %1, %2, %cst {dimension_numbers = #tpu.dot_dimension_numbers<[1], [0], [0], [1], [0, 0, 1, 1], [], []>} : vector<48x40xbf16>, vector<40x128xbf16>, vector<48x128xf32> -> vector<48x128xf32>
    %c0_5 = arith.constant 0 : index
    %c0_6 = arith.constant 0 : index
    %4 = vector.load %arg3[%c0_5, %c0_6] : memref<1x128xf32, #tpu.memory_space<vmem>>, vector<1x128xf32>
    %5 = vector.broadcast %4 : vector<1x128xf32> to vector<48x128xf32>
    %6 = arith.addf %3, %5 : vector<48x128xf32>
    %c0_7 = arith.constant 0 : index
    %c0_8 = arith.constant 0 : index
    %7 = vector.load %arg8[%c0_7, %c0_8] : memref<48x128xf32, #tpu.memory_space<vmem>>, vector<48x128xf32>
    tpu.vector_store %arg8[%c0_7, %c0_8], %6 {strides = array<i32>} : memref<48x128xf32, #tpu.memory_space<vmem>>, vector<48x128xf32>,
    %8 = vector.broadcast %0 : vector<48x1xf32> to vector<48x128xf32>
    %9 = arith.mulf %6, %8 : vector<48x128xf32>
    %cst_9 = arith.constant dense<0.000000e+00> : vector<128xf32>
    %10 = vector.multi_reduction <add>, %9, %cst_9 [0] : vector<48x128xf32> to vector<128xf32>
    %11 = vector.shape_cast %10 : vector<128xf32> to vector<1x128xf32>
    %c0_10 = arith.constant 0 : index
    %c0_11 = arith.constant 0 : index
    %c0_12 = arith.constant 0 : index
    %12 = vector.load %arg10[%c0_10, %c0_11, %c0_12] : memref<1x2x128xf32, #tpu.memory_space<vmem>>, vector<1x1x128xf32>
    %13 = vector.shape_cast %12 : vector<1x1x128xf32> to vector<1x128xf32>
    %14 = vector.shape_cast %11 : vector<1x128xf32> to vector<1x1x128xf32>
    tpu.vector_store %arg10[%c0_10, %c0_11, %c0_12], %14 {strides = array<i32>} : memref<1x2x128xf32, #tpu.memory_space<vmem>>, vector<1x1x128xf32>,
    %15 = arith.mulf %9, %6 : vector<48x128xf32>
    %cst_13 = arith.constant dense<0.000000e+00> : vector<128xf32>
    %16 = vector.multi_reduction <add>, %15, %cst_13 [0] : vector<48x128xf32> to vector<128xf32>
    %17 = vector.shape_cast %16 : vector<128xf32> to vector<1x128xf32>
    %c0_14 = arith.constant 0 : index
    %c1 = arith.constant 1 : index
    %c0_15 = arith.constant 0 : index
    %18 = vector.load %arg10[%c0_14, %c1, %c0_15] : memref<1x2x128xf32, #tpu.memory_space<vmem>>, vector<1x1x128xf32>
    %19 = vector.shape_cast %18 : vector<1x1x128xf32> to vector<1x128xf32>
    %20 = vector.shape_cast %17 : vector<1x128xf32> to vector<1x1x128xf32>
    tpu.vector_store %arg10[%c0_14, %c1, %c0_15], %20 {strides = array<i32>} : memref<1x2x128xf32, #tpu.memory_space<vmem>>, vector<1x1x128xf32>,
    %c0_16 = arith.constant 0 : index
    %c0_17 = arith.constant 0 : index
    %21 = vector.load %arg4[%c0_16, %c0_17] : memref<48x8xbf16, #tpu.memory_space<vmem>>, vector<48x8xbf16>
    %c0_18 = arith.constant 0 : index
    %c0_19 = arith.constant 0 : index
    %22 = vector.load %arg5[%c0_18, %c0_19] : memref<8x128xbf16, #tpu.memory_space<vmem>>, vector<8x128xbf16>
    %cst_20 = arith.constant dense<0.000000e+00> : vector<48x128xf32>
    %23 = tpu.matmul %21, %22, %cst_20 {dimension_numbers = #tpu.dot_dimension_numbers<[1], [0], [0], [1], [0, 0, 1, 1], [], []>} : vector<48x8xbf16>, vector<8x128xbf16>, vector<48x128xf32> -> vector<48x128xf32>
    %c0_21 = arith.constant 0 : index
    %c0_22 = arith.constant 0 : index
    %24 = vector.load %arg6[%c0_21, %c0_22] : memref<1x128xf32, #tpu.memory_space<vmem>>, vector<1x128xf32>
    %25 = vector.broadcast %24 : vector<1x128xf32> to vector<48x128xf32>
    %26 = arith.addf %23, %25 : vector<48x128xf32>
    %c0_23 = arith.constant 0 : index
    %c0_24 = arith.constant 0 : index
    %27 = vector.load %arg9[%c0_23, %c0_24] : memref<48x128xf32, #tpu.memory_space<vmem>>, vector<48x128xf32>
    tpu.vector_store %arg9[%c0_23, %c0_24], %26 {strides = array<i32>} : memref<48x128xf32, #tpu.memory_space<vmem>>, vector<48x128xf32>,
    %28 = vector.broadcast %0 : vector<48x1xf32> to vector<48x128xf32>
    %29 = arith.mulf %26, %28 : vector<48x128xf32>
    %cst_25 = arith.constant dense<0.000000e+00> : vector<128xf32>
    %30 = vector.multi_reduction <add>, %29, %cst_25 [0] : vector<48x128xf32> to vector<128xf32>
    %31 = vector.shape_cast %30 : vector<128xf32> to vector<1x128xf32>
    %c0_26 = arith.constant 0 : index
    %c0_27 = arith.constant 0 : index
    %c0_28 = arith.constant 0 : index
    %32 = vector.load %arg11[%c0_26, %c0_27, %c0_28] : memref<1x2x128xf32, #tpu.memory_space<vmem>>, vector<1x1x128xf32>
    %33 = vector.shape_cast %32 : vector<1x1x128xf32> to vector<1x128xf32>
    %34 = vector.shape_cast %31 : vector<1x128xf32> to vector<1x1x128xf32>
    tpu.vector_store %arg11[%c0_26, %c0_27, %c0_28], %34 {strides = array<i32>} : memref<1x2x128xf32, #tpu.memory_space<vmem>>, vector<1x1x128xf32>,
    %35 = arith.mulf %29, %26 : vector<48x128xf32>
    %cst_29 = arith.constant dense<0.000000e+00> : vector<128xf32>
    %36 = vector.multi_reduction <add>, %35, %cst_29 [0] : vector<48x128xf32> to vector<128xf32>
    %37 = vector.shape_cast %36 : vector<128xf32> to vector<1x128xf32>
    %c0_30 = arith.constant 0 : index
    %c1_31 = arith.constant 1 : index
    %c0_32 = arith.constant 0 : index
    %38 = vector.load %arg11[%c0_30, %c1_31, %c0_32] : memref<1x2x128xf32, #tpu.memory_space<vmem>>, vector<1x1x128xf32>
    %39 = vector.shape_cast %38 : vector<1x1x128xf32> to vector<1x128xf32>
    %40 = vector.shape_cast %37 : vector<1x128xf32> to vector<1x1x128xf32>
    tpu.vector_store %arg11[%c0_30, %c1_31, %c0_32], %40 {strides = array<i32>} : memref<1x2x128xf32, #tpu.memory_space<vmem>>, vector<1x1x128xf32>,
    return
  }
  func.func @transform_0(%arg0: i32) -> (i32, i32) {
    %c0_i32 = arith.constant 0 : i32
    %c0_i32_0 = arith.constant 0 : i32
    return %arg0, %c0_i32 : i32, i32
  }
  func.func @transform_1(%arg0: i32) -> (i32, i32) {
    %c0_i32 = arith.constant 0 : i32
    %c0_i32_0 = arith.constant 0 : i32
    %c0_i32_1 = arith.constant 0 : i32
    return %c0_i32, %c0_i32_0 : i32, i32
  }
  func.func @transform_2(%arg0: i32) -> (i32, i32) {
    %c0_i32 = arith.constant 0 : i32
    %c0_i32_0 = arith.constant 0 : i32
    %c0_i32_1 = arith.constant 0 : i32
    return %c0_i32, %c0_i32_0 : i32, i32
  }
  func.func @transform_3(%arg0: i32) -> (i32, i32) {
    %c0_i32 = arith.constant 0 : i32
    %c0_i32_0 = arith.constant 0 : i32
    return %arg0, %c0_i32 : i32, i32
  }
  func.func @transform_4(%arg0: i32) -> (i32, i32) {
    %c0_i32 = arith.constant 0 : i32
    %c0_i32_0 = arith.constant 0 : i32
    %c0_i32_1 = arith.constant 0 : i32
    return %c0_i32, %c0_i32_0 : i32, i32
  }
  func.func @transform_5(%arg0: i32) -> (i32, i32) {
    %c0_i32 = arith.constant 0 : i32
    %c0_i32_0 = arith.constant 0 : i32
    %c0_i32_1 = arith.constant 0 : i32
    return %c0_i32, %c0_i32_0 : i32, i32
  }
  func.func @transform_6(%arg0: i32) -> (i32, i32) {
    %c0_i32 = arith.constant 0 : i32
    %c0_i32_0 = arith.constant 0 : i32
    return %arg0, %c0_i32 : i32, i32
  }
  func.func @transform_7(%arg0: i32) -> (i32, i32) {
    %c0_i32 = arith.constant 0 : i32
    %c0_i32_0 = arith.constant 0 : i32
    return %arg0, %c0_i32 : i32, i32
  }
  func.func @transform_8(%arg0: i32) -> (i32, i32) {
    %c0_i32 = arith.constant 0 : i32
    %c0_i32_0 = arith.constant 0 : i32
    return %arg0, %c0_i32 : i32, i32
  }
  func.func @transform_9(%arg0: i32) -> (i32, i32, i32) {
    %c0_i32 = arith.constant 0 : i32
    %c0_i32_0 = arith.constant 0 : i32
    %c0_i32_1 = arith.constant 0 : i32
    return %arg0, %c0_i32, %c0_i32_0 : i32, i32, i32
  }
  func.func @transform_10(%arg0: i32) -> (i32, i32, i32) {
    %c0_i32 = arith.constant 0 : i32
    %c0_i32_0 = arith.constant 0 : i32
    %c0_i32_1 = arith.constant 0 : i32
    return %arg0, %c0_i32, %c0_i32_0 : i32, i32, i32
  }
}

module attributes {stable_mosaic.version = 11 : i64} {
  func.func @conv2_kernel(%arg0: i32, %arg1: memref<1x64x128xf32, #tpu.memory_space<vmem>>, %arg2: memref<1x128xf32, #tpu.memory_space<vmem>>, %arg3: memref<1x128xf32, #tpu.memory_space<vmem>>, %arg4: memref<9x128x128xbf16, #tpu.memory_space<vmem>>, %arg5: memref<1x128xf32, #tpu.memory_space<vmem>>, %arg6: memref<64x1xf32, #tpu.memory_space<vmem>>, %arg7: memref<64x1xf32, #tpu.memory_space<vmem>>, %arg8: memref<1x64x128xf32, #tpu.memory_space<vmem>>, %arg9: memref<1x2x128xf32, #tpu.memory_space<vmem>>, %arg10: memref<82x128xf32, #tpu.memory_space<vmem>>) attributes {dimension_semantics = [#tpu.dimension_semantics<parallel>], iteration_bounds = array<i64: 2>, scalar_prefetch = 0 : i64, scratch_operands = 1 : i64, tpu.core_type = #tpu.core_type<tc>, window_params = [{transform_indices = @transform_0, window_bounds = array<i64: 1, 64, 128>}, {pipeline_mode = #tpu.pipeline_mode<synchronous>, transform_indices = @transform_1, window_bounds = array<i64: 1, 128>}, {pipeline_mode = #tpu.pipeline_mode<synchronous>, transform_indices = @transform_2, window_bounds = array<i64: 1, 128>}, {pipeline_mode = #tpu.pipeline_mode<synchronous>, transform_indices = @transform_3, window_bounds = array<i64: 9, 128, 128>}, {pipeline_mode = #tpu.pipeline_mode<synchronous>, transform_indices = @transform_4, window_bounds = array<i64: 1, 128>}, {pipeline_mode = #tpu.pipeline_mode<synchronous>, transform_indices = @transform_5, window_bounds = array<i64: 64, 1>}, {pipeline_mode = #tpu.pipeline_mode<synchronous>, transform_indices = @transform_6, window_bounds = array<i64: 64, 1>}, {transform_indices = @transform_7, window_bounds = array<i64: 1, 64, 128>}, {transform_indices = @transform_8, window_bounds = array<i64: 1, 2, 128>}]} {
    %c0 = arith.constant 0 : index
    %c0_0 = arith.constant 0 : index
    %c0_1 = arith.constant 0 : index
    %0 = vector.load %arg1[%c0, %c0_0, %c0_1] : memref<1x64x128xf32, #tpu.memory_space<vmem>>, vector<1x64x128xf32>
    %1 = vector.shape_cast %0 : vector<1x64x128xf32> to vector<64x128xf32>
    %c0_2 = arith.constant 0 : index
    %c0_3 = arith.constant 0 : index
    %2 = vector.load %arg2[%c0_2, %c0_3] : memref<1x128xf32, #tpu.memory_space<vmem>>, vector<1x128xf32>
    %3 = vector.broadcast %2 : vector<1x128xf32> to vector<64x128xf32>
    %4 = arith.mulf %1, %3 : vector<64x128xf32>
    %c0_4 = arith.constant 0 : index
    %c0_5 = arith.constant 0 : index
    %5 = vector.load %arg3[%c0_4, %c0_5] : memref<1x128xf32, #tpu.memory_space<vmem>>, vector<1x128xf32>
    %6 = vector.broadcast %5 : vector<1x128xf32> to vector<64x128xf32>
    %7 = arith.addf %4, %6 : vector<64x128xf32>
    %cst = arith.constant 0.000000e+00 : f32
    %8 = vector.broadcast %cst : f32 to vector<64x128xf32>
    %9 = arith.maximumf %7, %8 : vector<64x128xf32>
    %cst_6 = arith.constant 0.000000e+00 : f32
    %10 = vector.broadcast %cst_6 : f32 to vector<9x128xf32>
    %c0_7 = arith.constant 0 : index
    %c0_8 = arith.constant 0 : index
    %11 = vector.load %arg10[%c0_7, %c0_8] : memref<82x128xf32, #tpu.memory_space<vmem>>, vector<9x128xf32>
    tpu.vector_store %arg10[%c0_7, %c0_8], %10 {strides = array<i32>} : memref<82x128xf32, #tpu.memory_space<vmem>>, vector<9x128xf32>,
    %c73 = arith.constant 73 : index
    %c0_9 = arith.constant 0 : index
    %12 = vector.load %arg10[%c73, %c0_9] : memref<82x128xf32, #tpu.memory_space<vmem>>, vector<9x128xf32>
    tpu.vector_store %arg10[%c73, %c0_9], %10 {strides = array<i32>} : memref<82x128xf32, #tpu.memory_space<vmem>>, vector<9x128xf32>,
    %c9 = arith.constant 9 : index
    %c0_10 = arith.constant 0 : index
    %13 = vector.load %arg10[%c9, %c0_10] : memref<82x128xf32, #tpu.memory_space<vmem>>, vector<64x128xf32>
    tpu.vector_store %arg10[%c9, %c0_10], %9 {strides = array<i32>} : memref<82x128xf32, #tpu.memory_space<vmem>>, vector<64x128xf32>,
    %cst_11 = arith.constant 0.000000e+00 : f32
    %14 = vector.broadcast %cst_11 : f32 to vector<64x128xf32>
    %c0_12 = arith.constant 0 : index
    %c0_13 = arith.constant 0 : index
    %15 = vector.load %arg10[%c0_12, %c0_13] : memref<82x128xf32, #tpu.memory_space<vmem>>, vector<64x128xf32>
    %c0_14 = arith.constant 0 : index
    %c0_15 = arith.constant 0 : index
    %16 = vector.load %arg6[%c0_14, %c0_15] : memref<64x1xf32, #tpu.memory_space<vmem>>, vector<64x1xf32>
    %17 = vector.broadcast %16 : vector<64x1xf32> to vector<64x128xf32>
    %18 = arith.mulf %15, %17 : vector<64x128xf32>
    %19 = arith.truncf %18 : vector<64x128xf32> to vector<64x128xbf16>
    %c0_16 = arith.constant 0 : index
    %c0_17 = arith.constant 0 : index
    %c0_18 = arith.constant 0 : index
    %20 = vector.load %arg4[%c0_16, %c0_17, %c0_18] : memref<9x128x128xbf16, #tpu.memory_space<vmem>>, vector<1x128x128xbf16>
    %21 = vector.shape_cast %20 : vector<1x128x128xbf16> to vector<128x128xbf16>
    %cst_19 = arith.constant dense<0.000000e+00> : vector<64x128xf32>
    %22 = tpu.matmul %19, %21, %cst_19 {dimension_numbers = #tpu.dot_dimension_numbers<[1], [0], [0], [1], [0, 0, 1, 1], [], []>} : vector<64x128xbf16>, vector<128x128xbf16>, vector<64x128xf32> -> vector<64x128xf32>
    %23 = arith.addf %14, %22 : vector<64x128xf32>
    %c1 = arith.constant 1 : index
    %c0_20 = arith.constant 0 : index
    %24 = vector.load %arg10[%c1, %c0_20] : memref<82x128xf32, #tpu.memory_space<vmem>>, vector<64x128xf32>
    %25 = arith.truncf %24 : vector<64x128xf32> to vector<64x128xbf16>
    %c1_21 = arith.constant 1 : index
    %c0_22 = arith.constant 0 : index
    %c0_23 = arith.constant 0 : index
    %26 = vector.load %arg4[%c1_21, %c0_22, %c0_23] : memref<9x128x128xbf16, #tpu.memory_space<vmem>>, vector<1x128x128xbf16>
    %27 = vector.shape_cast %26 : vector<1x128x128xbf16> to vector<128x128xbf16>
    %cst_24 = arith.constant dense<0.000000e+00> : vector<64x128xf32>
    %28 = tpu.matmul %25, %27, %cst_24 {dimension_numbers = #tpu.dot_dimension_numbers<[1], [0], [0], [1], [0, 0, 1, 1], [], []>} : vector<64x128xbf16>, vector<128x128xbf16>, vector<64x128xf32> -> vector<64x128xf32>
    %29 = arith.addf %23, %28 : vector<64x128xf32>
    %c2 = arith.constant 2 : index
    %c0_25 = arith.constant 0 : index
    %30 = vector.load %arg10[%c2, %c0_25] : memref<82x128xf32, #tpu.memory_space<vmem>>, vector<64x128xf32>
    %c0_26 = arith.constant 0 : index
    %c0_27 = arith.constant 0 : index
    %31 = vector.load %arg7[%c0_26, %c0_27] : memref<64x1xf32, #tpu.memory_space<vmem>>, vector<64x1xf32>
    %32 = vector.broadcast %31 : vector<64x1xf32> to vector<64x128xf32>
    %33 = arith.mulf %30, %32 : vector<64x128xf32>
    %34 = arith.truncf %33 : vector<64x128xf32> to vector<64x128xbf16>
    %c2_28 = arith.constant 2 : index
    %c0_29 = arith.constant 0 : index
    %c0_30 = arith.constant 0 : index
    %35 = vector.load %arg4[%c2_28, %c0_29, %c0_30] : memref<9x128x128xbf16, #tpu.memory_space<vmem>>, vector<1x128x128xbf16>
    %36 = vector.shape_cast %35 : vector<1x128x128xbf16> to vector<128x128xbf16>
    %cst_31 = arith.constant dense<0.000000e+00> : vector<64x128xf32>
    %37 = tpu.matmul %34, %36, %cst_31 {dimension_numbers = #tpu.dot_dimension_numbers<[1], [0], [0], [1], [0, 0, 1, 1], [], []>} : vector<64x128xbf16>, vector<128x128xbf16>, vector<64x128xf32> -> vector<64x128xf32>
    %38 = arith.addf %29, %37 : vector<64x128xf32>
    %c8 = arith.constant 8 : index
    %c0_32 = arith.constant 0 : index
    %39 = vector.load %arg10[%c8, %c0_32] : memref<82x128xf32, #tpu.memory_space<vmem>>, vector<64x128xf32>
    %c0_33 = arith.constant 0 : index
    %c0_34 = arith.constant 0 : index
    %40 = vector.load %arg6[%c0_33, %c0_34] : memref<64x1xf32, #tpu.memory_space<vmem>>, vector<64x1xf32>
    %41 = vector.broadcast %40 : vector<64x1xf32> to vector<64x128xf32>
    %42 = arith.mulf %39, %41 : vector<64x128xf32>
    %43 = arith.truncf %42 : vector<64x128xf32> to vector<64x128xbf16>
    %c3 = arith.constant 3 : index
    %c0_35 = arith.constant 0 : index
    %c0_36 = arith.constant 0 : index
    %44 = vector.load %arg4[%c3, %c0_35, %c0_36] : memref<9x128x128xbf16, #tpu.memory_space<vmem>>, vector<1x128x128xbf16>
    %45 = vector.shape_cast %44 : vector<1x128x128xbf16> to vector<128x128xbf16>
    %cst_37 = arith.constant dense<0.000000e+00> : vector<64x128xf32>
    %46 = tpu.matmul %43, %45, %cst_37 {dimension_numbers = #tpu.dot_dimension_numbers<[1], [0], [0], [1], [0, 0, 1, 1], [], []>} : vector<64x128xbf16>, vector<128x128xbf16>, vector<64x128xf32> -> vector<64x128xf32>
    %47 = arith.addf %38, %46 : vector<64x128xf32>
    %c9_38 = arith.constant 9 : index
    %c0_39 = arith.constant 0 : index
    %48 = vector.load %arg10[%c9_38, %c0_39] : memref<82x128xf32, #tpu.memory_space<vmem>>, vector<64x128xf32>
    %49 = arith.truncf %48 : vector<64x128xf32> to vector<64x128xbf16>
    %c4 = arith.constant 4 : index
    %c0_40 = arith.constant 0 : index
    %c0_41 = arith.constant 0 : index
    %50 = vector.load %arg4[%c4, %c0_40, %c0_41] : memref<9x128x128xbf16, #tpu.memory_space<vmem>>, vector<1x128x128xbf16>
    %51 = vector.shape_cast %50 : vector<1x128x128xbf16> to vector<128x128xbf16>
    %cst_42 = arith.constant dense<0.000000e+00> : vector<64x128xf32>
    %52 = tpu.matmul %49, %51, %cst_42 {dimension_numbers = #tpu.dot_dimension_numbers<[1], [0], [0], [1], [0, 0, 1, 1], [], []>} : vector<64x128xbf16>, vector<128x128xbf16>, vector<64x128xf32> -> vector<64x128xf32>
    %53 = arith.addf %47, %52 : vector<64x128xf32>
    %c10 = arith.constant 10 : index
    %c0_43 = arith.constant 0 : index
    %54 = vector.load %arg10[%c10, %c0_43] : memref<82x128xf32, #tpu.memory_space<vmem>>, vector<64x128xf32>
    %c0_44 = arith.constant 0 : index
    %c0_45 = arith.constant 0 : index
    %55 = vector.load %arg7[%c0_44, %c0_45] : memref<64x1xf32, #tpu.memory_space<vmem>>, vector<64x1xf32>
    %56 = vector.broadcast %55 : vector<64x1xf32> to vector<64x128xf32>
    %57 = arith.mulf %54, %56 : vector<64x128xf32>
    %58 = arith.truncf %57 : vector<64x128xf32> to vector<64x128xbf16>
    %c5 = arith.constant 5 : index
    %c0_46 = arith.constant 0 : index
    %c0_47 = arith.constant 0 : index
    %59 = vector.load %arg4[%c5, %c0_46, %c0_47] : memref<9x128x128xbf16, #tpu.memory_space<vmem>>, vector<1x128x128xbf16>
    %60 = vector.shape_cast %59 : vector<1x128x128xbf16> to vector<128x128xbf16>
    %cst_48 = arith.constant dense<0.000000e+00> : vector<64x128xf32>
    %61 = tpu.matmul %58, %60, %cst_48 {dimension_numbers = #tpu.dot_dimension_numbers<[1], [0], [0], [1], [0, 0, 1, 1], [], []>} : vector<64x128xbf16>, vector<128x128xbf16>, vector<64x128xf32> -> vector<64x128xf32>
    %62 = arith.addf %53, %61 : vector<64x128xf32>
    %c16 = arith.constant 16 : index
    %c0_49 = arith.constant 0 : index
    %63 = vector.load %arg10[%c16, %c0_49] : memref<82x128xf32, #tpu.memory_space<vmem>>, vector<64x128xf32>
    %c0_50 = arith.constant 0 : index
    %c0_51 = arith.constant 0 : index
    %64 = vector.load %arg6[%c0_50, %c0_51] : memref<64x1xf32, #tpu.memory_space<vmem>>, vector<64x1xf32>
    %65 = vector.broadcast %64 : vector<64x1xf32> to vector<64x128xf32>
    %66 = arith.mulf %63, %65 : vector<64x128xf32>
    %67 = arith.truncf %66 : vector<64x128xf32> to vector<64x128xbf16>
    %c6 = arith.constant 6 : index
    %c0_52 = arith.constant 0 : index
    %c0_53 = arith.constant 0 : index
    %68 = vector.load %arg4[%c6, %c0_52, %c0_53] : memref<9x128x128xbf16, #tpu.memory_space<vmem>>, vector<1x128x128xbf16>
    %69 = vector.shape_cast %68 : vector<1x128x128xbf16> to vector<128x128xbf16>
    %cst_54 = arith.constant dense<0.000000e+00> : vector<64x128xf32>
    %70 = tpu.matmul %67, %69, %cst_54 {dimension_numbers = #tpu.dot_dimension_numbers<[1], [0], [0], [1], [0, 0, 1, 1], [], []>} : vector<64x128xbf16>, vector<128x128xbf16>, vector<64x128xf32> -> vector<64x128xf32>
    %71 = arith.addf %62, %70 : vector<64x128xf32>
    %c17 = arith.constant 17 : index
    %c0_55 = arith.constant 0 : index
    %72 = vector.load %arg10[%c17, %c0_55] : memref<82x128xf32, #tpu.memory_space<vmem>>, vector<64x128xf32>
    %73 = arith.truncf %72 : vector<64x128xf32> to vector<64x128xbf16>
    %c7 = arith.constant 7 : index
    %c0_56 = arith.constant 0 : index
    %c0_57 = arith.constant 0 : index
    %74 = vector.load %arg4[%c7, %c0_56, %c0_57] : memref<9x128x128xbf16, #tpu.memory_space<vmem>>, vector<1x128x128xbf16>
    %75 = vector.shape_cast %74 : vector<1x128x128xbf16> to vector<128x128xbf16>
    %cst_58 = arith.constant dense<0.000000e+00> : vector<64x128xf32>
    %76 = tpu.matmul %73, %75, %cst_58 {dimension_numbers = #tpu.dot_dimension_numbers<[1], [0], [0], [1], [0, 0, 1, 1], [], []>} : vector<64x128xbf16>, vector<128x128xbf16>, vector<64x128xf32> -> vector<64x128xf32>
    %77 = arith.addf %71, %76 : vector<64x128xf32>
    %c18 = arith.constant 18 : index
    %c0_59 = arith.constant 0 : index
    %78 = vector.load %arg10[%c18, %c0_59] : memref<82x128xf32, #tpu.memory_space<vmem>>, vector<64x128xf32>
    %c0_60 = arith.constant 0 : index
    %c0_61 = arith.constant 0 : index
    %79 = vector.load %arg7[%c0_60, %c0_61] : memref<64x1xf32, #tpu.memory_space<vmem>>, vector<64x1xf32>
    %80 = vector.broadcast %79 : vector<64x1xf32> to vector<64x128xf32>
    %81 = arith.mulf %78, %80 : vector<64x128xf32>
    %82 = arith.truncf %81 : vector<64x128xf32> to vector<64x128xbf16>
    %c8_62 = arith.constant 8 : index
    %c0_63 = arith.constant 0 : index
    %c0_64 = arith.constant 0 : index
    %83 = vector.load %arg4[%c8_62, %c0_63, %c0_64] : memref<9x128x128xbf16, #tpu.memory_space<vmem>>, vector<1x128x128xbf16>
    %84 = vector.shape_cast %83 : vector<1x128x128xbf16> to vector<128x128xbf16>
    %cst_65 = arith.constant dense<0.000000e+00> : vector<64x128xf32>
    %85 = tpu.matmul %82, %84, %cst_65 {dimension_numbers = #tpu.dot_dimension_numbers<[1], [0], [0], [1], [0, 0, 1, 1], [], []>} : vector<64x128xbf16>, vector<128x128xbf16>, vector<64x128xf32> -> vector<64x128xf32>
    %86 = arith.addf %77, %85 : vector<64x128xf32>
    %c0_66 = arith.constant 0 : index
    %c0_67 = arith.constant 0 : index
    %87 = vector.load %arg5[%c0_66, %c0_67] : memref<1x128xf32, #tpu.memory_space<vmem>>, vector<1x128xf32>
    %88 = vector.broadcast %87 : vector<1x128xf32> to vector<64x128xf32>
    %89 = arith.addf %86, %88 : vector<64x128xf32>
    %c0_68 = arith.constant 0 : index
    %c0_69 = arith.constant 0 : index
    %c0_70 = arith.constant 0 : index
    %90 = vector.load %arg8[%c0_68, %c0_69, %c0_70] : memref<1x64x128xf32, #tpu.memory_space<vmem>>, vector<1x64x128xf32>
    %91 = vector.shape_cast %90 : vector<1x64x128xf32> to vector<64x128xf32>
    %92 = vector.shape_cast %89 : vector<64x128xf32> to vector<1x64x128xf32>
    tpu.vector_store %arg8[%c0_68, %c0_69, %c0_70], %92 {strides = array<i32>} : memref<1x64x128xf32, #tpu.memory_space<vmem>>, vector<1x64x128xf32>,
    %cst_71 = arith.constant dense<0.000000e+00> : vector<128xf32>
    %93 = vector.multi_reduction <add>, %89, %cst_71 [0] : vector<64x128xf32> to vector<128xf32>
    %94 = vector.shape_cast %93 : vector<128xf32> to vector<1x128xf32>
    %c0_72 = arith.constant 0 : index
    %c0_73 = arith.constant 0 : index
    %c0_74 = arith.constant 0 : index
    %95 = vector.load %arg9[%c0_72, %c0_73, %c0_74] : memref<1x2x128xf32, #tpu.memory_space<vmem>>, vector<1x1x128xf32>
    %96 = vector.shape_cast %95 : vector<1x1x128xf32> to vector<1x128xf32>
    %97 = vector.shape_cast %94 : vector<1x128xf32> to vector<1x1x128xf32>
    tpu.vector_store %arg9[%c0_72, %c0_73, %c0_74], %97 {strides = array<i32>} : memref<1x2x128xf32, #tpu.memory_space<vmem>>, vector<1x1x128xf32>,
    %98 = arith.mulf %89, %89 : vector<64x128xf32>
    %cst_75 = arith.constant dense<0.000000e+00> : vector<128xf32>
    %99 = vector.multi_reduction <add>, %98, %cst_75 [0] : vector<64x128xf32> to vector<128xf32>
    %100 = vector.shape_cast %99 : vector<128xf32> to vector<1x128xf32>
    %c0_76 = arith.constant 0 : index
    %c1_77 = arith.constant 1 : index
    %c0_78 = arith.constant 0 : index
    %101 = vector.load %arg9[%c0_76, %c1_77, %c0_78] : memref<1x2x128xf32, #tpu.memory_space<vmem>>, vector<1x1x128xf32>
    %102 = vector.shape_cast %101 : vector<1x1x128xf32> to vector<1x128xf32>
    %103 = vector.shape_cast %100 : vector<1x128xf32> to vector<1x1x128xf32>
    tpu.vector_store %arg9[%c0_76, %c1_77, %c0_78], %103 {strides = array<i32>} : memref<1x2x128xf32, #tpu.memory_space<vmem>>, vector<1x1x128xf32>,
    return
  }
  func.func @transform_0(%arg0: i32) -> (i32, i32, i32) {
    %c0_i32 = arith.constant 0 : i32
    %c0_i32_0 = arith.constant 0 : i32
    %c0_i32_1 = arith.constant 0 : i32
    return %arg0, %c0_i32, %c0_i32_0 : i32, i32, i32
  }
  func.func @transform_1(%arg0: i32) -> (i32, i32) {
    %c0_i32 = arith.constant 0 : i32
    %c0_i32_0 = arith.constant 0 : i32
    %c0_i32_1 = arith.constant 0 : i32
    return %c0_i32, %c0_i32_0 : i32, i32
  }
  func.func @transform_2(%arg0: i32) -> (i32, i32) {
    %c0_i32 = arith.constant 0 : i32
    %c0_i32_0 = arith.constant 0 : i32
    %c0_i32_1 = arith.constant 0 : i32
    return %c0_i32, %c0_i32_0 : i32, i32
  }
  func.func @transform_3(%arg0: i32) -> (i32, i32, i32) {
    %c0_i32 = arith.constant 0 : i32
    %c0_i32_0 = arith.constant 0 : i32
    %c0_i32_1 = arith.constant 0 : i32
    %c0_i32_2 = arith.constant 0 : i32
    return %c0_i32, %c0_i32_0, %c0_i32_1 : i32, i32, i32
  }
  func.func @transform_4(%arg0: i32) -> (i32, i32) {
    %c0_i32 = arith.constant 0 : i32
    %c0_i32_0 = arith.constant 0 : i32
    %c0_i32_1 = arith.constant 0 : i32
    return %c0_i32, %c0_i32_0 : i32, i32
  }
  func.func @transform_5(%arg0: i32) -> (i32, i32) {
    %c0_i32 = arith.constant 0 : i32
    %c0_i32_0 = arith.constant 0 : i32
    %c0_i32_1 = arith.constant 0 : i32
    return %c0_i32, %c0_i32_0 : i32, i32
  }
  func.func @transform_6(%arg0: i32) -> (i32, i32) {
    %c0_i32 = arith.constant 0 : i32
    %c0_i32_0 = arith.constant 0 : i32
    %c0_i32_1 = arith.constant 0 : i32
    return %c0_i32, %c0_i32_0 : i32, i32
  }
  func.func @transform_7(%arg0: i32) -> (i32, i32, i32) {
    %c0_i32 = arith.constant 0 : i32
    %c0_i32_0 = arith.constant 0 : i32
    %c0_i32_1 = arith.constant 0 : i32
    return %arg0, %c0_i32, %c0_i32_0 : i32, i32, i32
  }
  func.func @transform_8(%arg0: i32) -> (i32, i32, i32) {
    %c0_i32 = arith.constant 0 : i32
    %c0_i32_0 = arith.constant 0 : i32
    %c0_i32_1 = arith.constant 0 : i32
    return %arg0, %c0_i32, %c0_i32_0 : i32, i32, i32
  }
}

module attributes {stable_mosaic.version = 11 : i64} {
  func.func @finalize_proj_kernel(%arg0: i32, %arg1: memref<1x64x128xf32, #tpu.memory_space<vmem>>, %arg2: memref<1x128xf32, #tpu.memory_space<vmem>>, %arg3: memref<1x128xf32, #tpu.memory_space<vmem>>, %arg4: memref<1x64x128xf32, #tpu.memory_space<vmem>>, %arg5: memref<1x128xf32, #tpu.memory_space<vmem>>, %arg6: memref<1x128xf32, #tpu.memory_space<vmem>>, %arg7: memref<1x64x128xf32, #tpu.memory_space<vmem>>) attributes {dimension_semantics = [#tpu.dimension_semantics<parallel>], iteration_bounds = array<i64: 2>, scalar_prefetch = 0 : i64, scratch_operands = 0 : i64, tpu.core_type = #tpu.core_type<tc>, window_params = [{transform_indices = @transform_0, window_bounds = array<i64: 1, 64, 128>}, {pipeline_mode = #tpu.pipeline_mode<synchronous>, transform_indices = @transform_1, window_bounds = array<i64: 1, 128>}, {pipeline_mode = #tpu.pipeline_mode<synchronous>, transform_indices = @transform_2, window_bounds = array<i64: 1, 128>}, {transform_indices = @transform_3, window_bounds = array<i64: 1, 64, 128>}, {pipeline_mode = #tpu.pipeline_mode<synchronous>, transform_indices = @transform_4, window_bounds = array<i64: 1, 128>}, {pipeline_mode = #tpu.pipeline_mode<synchronous>, transform_indices = @transform_5, window_bounds = array<i64: 1, 128>}, {transform_indices = @transform_6, window_bounds = array<i64: 1, 64, 128>}]} {
    %c0 = arith.constant 0 : index
    %c0_0 = arith.constant 0 : index
    %c0_1 = arith.constant 0 : index
    %0 = vector.load %arg1[%c0, %c0_0, %c0_1] : memref<1x64x128xf32, #tpu.memory_space<vmem>>, vector<1x64x128xf32>
    %1 = vector.shape_cast %0 : vector<1x64x128xf32> to vector<64x128xf32>
    %c0_2 = arith.constant 0 : index
    %c0_3 = arith.constant 0 : index
    %2 = vector.load %arg2[%c0_2, %c0_3] : memref<1x128xf32, #tpu.memory_space<vmem>>, vector<1x128xf32>
    %3 = vector.broadcast %2 : vector<1x128xf32> to vector<64x128xf32>
    %4 = arith.mulf %1, %3 : vector<64x128xf32>
    %c0_4 = arith.constant 0 : index
    %c0_5 = arith.constant 0 : index
    %5 = vector.load %arg3[%c0_4, %c0_5] : memref<1x128xf32, #tpu.memory_space<vmem>>, vector<1x128xf32>
    %6 = vector.broadcast %5 : vector<1x128xf32> to vector<64x128xf32>
    %7 = arith.addf %4, %6 : vector<64x128xf32>
    %c0_6 = arith.constant 0 : index
    %c0_7 = arith.constant 0 : index
    %c0_8 = arith.constant 0 : index
    %8 = vector.load %arg4[%c0_6, %c0_7, %c0_8] : memref<1x64x128xf32, #tpu.memory_space<vmem>>, vector<1x64x128xf32>
    %9 = vector.shape_cast %8 : vector<1x64x128xf32> to vector<64x128xf32>
    %c0_9 = arith.constant 0 : index
    %c0_10 = arith.constant 0 : index
    %10 = vector.load %arg5[%c0_9, %c0_10] : memref<1x128xf32, #tpu.memory_space<vmem>>, vector<1x128xf32>
    %11 = vector.broadcast %10 : vector<1x128xf32> to vector<64x128xf32>
    %12 = arith.mulf %9, %11 : vector<64x128xf32>
    %c0_11 = arith.constant 0 : index
    %c0_12 = arith.constant 0 : index
    %13 = vector.load %arg6[%c0_11, %c0_12] : memref<1x128xf32, #tpu.memory_space<vmem>>, vector<1x128xf32>
    %14 = vector.broadcast %13 : vector<1x128xf32> to vector<64x128xf32>
    %15 = arith.addf %12, %14 : vector<64x128xf32>
    %16 = arith.addf %7, %15 : vector<64x128xf32>
    %cst = arith.constant 0.000000e+00 : f32
    %17 = vector.broadcast %cst : f32 to vector<64x128xf32>
    %18 = arith.maximumf %16, %17 : vector<64x128xf32>
    %c0_13 = arith.constant 0 : index
    %c0_14 = arith.constant 0 : index
    %c0_15 = arith.constant 0 : index
    %19 = vector.load %arg7[%c0_13, %c0_14, %c0_15] : memref<1x64x128xf32, #tpu.memory_space<vmem>>, vector<1x64x128xf32>
    %20 = vector.shape_cast %19 : vector<1x64x128xf32> to vector<64x128xf32>
    %21 = vector.shape_cast %18 : vector<64x128xf32> to vector<1x64x128xf32>
    tpu.vector_store %arg7[%c0_13, %c0_14, %c0_15], %21 {strides = array<i32>} : memref<1x64x128xf32, #tpu.memory_space<vmem>>, vector<1x64x128xf32>,
    return
  }
  func.func @transform_0(%arg0: i32) -> (i32, i32, i32) {
    %c0_i32 = arith.constant 0 : i32
    %c0_i32_0 = arith.constant 0 : i32
    %c0_i32_1 = arith.constant 0 : i32
    return %arg0, %c0_i32, %c0_i32_0 : i32, i32, i32
  }
  func.func @transform_1(%arg0: i32) -> (i32, i32) {
    %c0_i32 = arith.constant 0 : i32
    %c0_i32_0 = arith.constant 0 : i32
    %c0_i32_1 = arith.constant 0 : i32
    return %c0_i32, %c0_i32_0 : i32, i32
  }
  func.func @transform_2(%arg0: i32) -> (i32, i32) {
    %c0_i32 = arith.constant 0 : i32
    %c0_i32_0 = arith.constant 0 : i32
    %c0_i32_1 = arith.constant 0 : i32
    return %c0_i32, %c0_i32_0 : i32, i32
  }
  func.func @transform_3(%arg0: i32) -> (i32, i32, i32) {
    %c0_i32 = arith.constant 0 : i32
    %c0_i32_0 = arith.constant 0 : i32
    %c0_i32_1 = arith.constant 0 : i32
    return %arg0, %c0_i32, %c0_i32_0 : i32, i32, i32
  }
  func.func @transform_4(%arg0: i32) -> (i32, i32) {
    %c0_i32 = arith.constant 0 : i32
    %c0_i32_0 = arith.constant 0 : i32
    %c0_i32_1 = arith.constant 0 : i32
    return %c0_i32, %c0_i32_0 : i32, i32
  }
  func.func @transform_5(%arg0: i32) -> (i32, i32) {
    %c0_i32 = arith.constant 0 : i32
    %c0_i32_0 = arith.constant 0 : i32
    %c0_i32_1 = arith.constant 0 : i32
    return %c0_i32, %c0_i32_0 : i32, i32
  }
  func.func @transform_6(%arg0: i32) -> (i32, i32, i32) {
    %c0_i32 = arith.constant 0 : i32
    %c0_i32_0 = arith.constant 0 : i32
    %c0_i32_1 = arith.constant 0 : i32
    return %arg0, %c0_i32, %c0_i32_0 : i32, i32, i32
  }
}

</mosaic_0001>

<llo_original>
// kernel: basic_block_forward.3
$region0: #{basic_block_forward.3}
  #allocation0 [shape = 'u32[]', space=smem, size = 0x4, offset = 0x4, fixed_abs, tag = 'smem constant byte address 0x4 - core index']
  #allocation1 [shape = 'u32[144,128]{1,0:T(1,128)}', space=vmem, size = 0x12000, scoped, tag = 'internal scratch']
  %s0 = inlined_call_operand.hbm [shape: bf16[144,40], index: 0, kind: input, shape index: {}]
  %s1 = inlined_call_operand.hbm [shape: bf16[40,128], index: 1, kind: input, shape index: {}]
  %s2 = inlined_call_operand.hbm [shape: f32[1,128], index: 2, kind: input, shape index: {}]
  %s3 = inlined_call_operand.hbm [shape: bf16[144,8], index: 3, kind: input, shape index: {}]
  %s4 = inlined_call_operand.hbm [shape: bf16[8,128], index: 4, kind: input, shape index: {}]
  %s5 = inlined_call_operand.hbm [shape: f32[1,128], index: 5, kind: input, shape index: {}]
  %s6 = inlined_call_operand.hbm [shape: f32[144,1], index: 6, kind: input, shape index: {}]
  %s7 = inlined_call_operand.hbm [shape: f32[144,128], index: 7, kind: output, shape index: {0}]
  %s8 = inlined_call_operand.hbm [shape: f32[144,128], index: 8, kind: output, shape index: {1}]
  %s9 = inlined_call_operand.hbm [shape: f32[3,2,128], index: 9, kind: output, shape index: {2}]
  %s10 = inlined_call_operand.hbm [shape: f32[3,2,128], index: 10, kind: output, shape index: {3}]
  %11 = xla_tuple %s7, %s8, %s9, %s10
  %s12 = sld [smem:[#allocation0]]
  $region113: #{basic_block_forward.3} parent=0
    _
  %s14 = ssub.s32 1, %s12
  %s15 = scalar_select 0, %s14, %s12
  $region1: #{basic_block_forward.3} parent=0
    #allocation2 [shape = 'u8[24576]{0}', space=vmem, size = 0x6000, scoped, tag = 'input window, operand 0']
    #allocation3 [shape = 's32[2]{0}', space=sflag, size = 0x8, scoped, tag = 'scoped memory for basic_block_forward.3']
    #allocation4 [shape = 's32[2]{0}', space=sflag, size = 0x8, scoped, tag = 'scoped memory for basic_block_forward.3']
    #allocation5 [shape = 'u8[10240]{0}', space=vmem, size = 0x2800, scoped, tag = 'input window, operand 1, single buffered']
    #allocation6 [shape = 's32[1]{0}', space=sflag, size = 0x4, scoped, tag = 'scoped memory for basic_block_forward.3']
    #allocation7 [shape = 'u8[512]{0}', space=vmem, size = 0x400, scoped, tag = 'input window, operand 2, single buffered']
    #allocation8 [shape = 'u8[24576]{0}', space=vmem, size = 0x6000, scoped, tag = 'input window, operand 3']
    #allocation9 [shape = 's32[2]{0}', space=sflag, size = 0x8, scoped, tag = 'scoped memory for basic_block_forward.3']
    #allocation10 [shape = 'u8[2048]{0}', space=vmem, size = 0x800, scoped, tag = 'input window, operand 4, single buffered']
    #allocation11 [shape = 'u8[512]{0}', space=vmem, size = 0x400, scoped, tag = 'input window, operand 5, single buffered']
    #allocation12 [shape = 's32[1]{0}', space=sflag, size = 0x4, scoped, tag = 'scoped memory for basic_block_forward.3']
    #allocation13 [shape = 'u8[49152]{0}', space=vmem, size = 0xc000, scoped, tag = 'input window, operand 6']
    #allocation14 [shape = 'u8[49152]{0}', space=vmem, size = 0xc000, scoped, tag = 'output window, operand 0']
    #allocation15 [shape = 'u8[49152]{0}', space=vmem, size = 0xc000, scoped, tag = 'output window, operand 1']
    #allocation16 [shape = 's32[2]{0}', space=sflag, size = 0x8, scoped, tag = 'scoped memory for basic_block_forward.3']
    #allocation17 [shape = 'u8[2048]{0}', space=vmem, size = 0x800, scoped, tag = 'output window, operand 2']
    #allocation18 [shape = 'u8[2048]{0}', space=vmem, size = 0x800, scoped, tag = 'output window, operand 3']
    #allocation19 [shape = 's32[2]{0}', space=sflag, size = 0x8, scoped, tag = 'scoped memory for basic_block_forward.3']
    %16 = vsyncpa [#allocation3], 0
    %s17 = scalar_lea.sflag [#allocation3], 1
    %18 = vsyncpa %s17, 0
    %19 = vsyncpa [#allocation6], 0
    %20 = vsyncpa [#allocation9], 0
    %s21 = scalar_lea.sflag [#allocation9], 1
    %22 = vsyncpa %s21, 0
    %23 = vsyncpa [#allocation12], 0
    %24 = vsyncpa [#allocation4], 0
    %s25 = scalar_lea.sflag [#allocation4], 1
    %26 = vsyncpa %s25, 0
    %27 = vsyncpa [#allocation16], 0
    %s28 = scalar_lea.sflag [#allocation16], 1
    %29 = vsyncpa %s28, 0
    %30 = vsyncpa [#allocation19], 0
    %s31 = scalar_lea.sflag [#allocation19], 1
    %32 = vsyncpa %s31, 0
    loop: start=0, step=1, limit=5
    $region2: #{basic_block_forward.3} parent=1 // loop_pre_header
      _
    $region3: #{basic_block_forward.3} parent=1 // loop_header
      %s34 = sphi 0, %s38
      %p35 = scmp.ge.s32.totalorder %s34, 5
      %s44 = sphi 0, %s46
      %s47 = sphi 0, %s44
      %s48 = sphi 0, %s47
      %s64 = sphi 0, %s48
      %s68 = sphi 0, %s68
      %s70 = sphi 0, %s68
      %s71 = sphi 0, %s70
      %s85 = sphi 0, %s71
      %s89 = sphi 0, %s89
      %s91 = sphi 0, %s89
      %s92 = sphi 0, %s91
      %s106 = sphi 0, %s92
      %s112 = sphi 0, %s114
      %s115 = sphi 0, %s112
      %s116 = sphi 0, %s115
      %s132 = sphi 0, %s116
      %s136 = sphi 0, %s136
      %s138 = sphi 0, %s136
      %s139 = sphi 0, %s138
      %s153 = sphi 0, %s139
      %s157 = sphi 0, %s157
      %s159 = sphi 0, %s157
      %s160 = sphi 0, %s159
      %s174 = sphi 0, %s160
      %s180 = sphi 0, %s182
      %s183 = sphi 0, %s180
      %s184 = sphi 0, %s183
      %s200 = sphi 0, %s184
      %s206 = sphi 0, %s208
      %s209 = sphi 0, %s206
      %s210 = sphi 0, %s209
      %s226 = sphi 0, %s210
      %s232 = sphi 0, %s234
      %s235 = sphi 0, %s232
      %s236 = sphi 0, %s235
      %s252 = sphi 0, %s236
      %s258 = sphi 0, %s260
      %s261 = sphi 0, %s258
      %s262 = sphi 0, %s261
      %s278 = sphi 0, %s262
      %s284 = sphi 0, %s286
      %s287 = sphi 0, %s284
      %s288 = sphi 0, %s287
      %s304 = sphi 0, %s288
    $region4: #{basic_block_forward.3} parent=1 // loop_header_branch
      %37 = sbr.rel (%p35) target = $region8
    $region5: #{basic_block_forward.3} parent=1 // loop_body
      %s39 = ssub.s32 %s34, 1
      %s40 = ssub.s32 %s34, 2
      %s41 = sadd.s32 %s34, 1
      %s42 = ssub.s32 %s34, %s41
      %p43 = scmp.eq.s32.totalorder %s42, 0
      %s45 = sadd.s32 %s44, 1
      %s46 = scalar_select %p43, %s44, %s45
      %p49 = pneg %p43
      %p50 = scmp.eq.s32.totalorder %s34, 2
      %p51 = por %p49, %p50
      %p52 = scmp.ne.s32.totalorder %s44, %s47
      %p53 = scmp.eq.s32.totalorder %s34, 0
      %p54 = por %p52, %p53
      %p55 = scmp.ne.s32.totalorder %s44, %s47
      %p56 = scmp.eq.s32.totalorder %s39, 2
      %p57 = por %p55, %p56
      %p58 = scmp.ne.s32.totalorder %s47, %s48
      %p59 = scmp.eq.s32.totalorder %s39, 0
      %p60 = por %p58, %p59
      %p61 = scmp.ne.s32.totalorder %s47, %s48
      %p62 = scmp.eq.s32.totalorder %s40, 2
      %p63 = por %p61, %p62
      %p65 = scmp.ne.s32.totalorder %s48, %s64
      %p66 = scmp.eq.s32.totalorder %s40, 0
      %p67 = por %p65, %p66
      %s69 = sadd.s32 %s68, 1
      %p72 = scmp.eq.s32.totalorder %s34, 2
      %p73 = scmp.ne.s32.totalorder %s68, %s70
      %p74 = scmp.eq.s32.totalorder %s34, 0
      %p75 = por %p73, %p74
      %p76 = scmp.ne.s32.totalorder %s68, %s70
      %p77 = scmp.eq.s32.totalorder %s39, 2
      %p78 = por %p76, %p77
      %p79 = scmp.ne.s32.totalorder %s70, %s71
      %p80 = scmp.eq.s32.totalorder %s39, 0
      %p81 = por %p79, %p80
      %p82 = scmp.ne.s32.totalorder %s70, %s71
      %p83 = scmp.eq.s32.totalorder %s40, 2
      %p84 = por %p82, %p83
      %p86 = scmp.ne.s32.totalorder %s71, %s85
      %p87 = scmp.eq.s32.totalorder %s40, 0
      %p88 = por %p86, %p87
      %s90 = sadd.s32 %s89, 1
      %p93 = scmp.eq.s32.totalorder %s34, 2
      %p94 = scmp.ne.s32.totalorder %s89, %s91
      %p95 = scmp.eq.s32.totalorder %s34, 0
      %p96 = por %p94, %p95
      %p97 = scmp.ne.s32.totalorder %s89, %s91
      %p98 = scmp.eq.s32.totalorder %s39, 2
      %p99 = por %p97, %p98
      %p100 = scmp.ne.s32.totalorder %s91, %s92
      %p101 = scmp.eq.s32.totalorder %s39, 0
      %p102 = por %p100, %p101
      %p103 = scmp.ne.s32.totalorder %s91, %s92
      %p104 = scmp.eq.s32.totalorder %s40, 2
      %p105 = por %p103, %p104
      %p107 = scmp.ne.s32.totalorder %s92, %s106
      %p108 = scmp.eq.s32.totalorder %s40, 0
      %p109 = por %p107, %p108
      %s110 = ssub.s32 %s34, %s41
      %p111 = scmp.eq.s32.totalorder %s110, 0
      %s113 = sadd.s32 %s112, 1
      %s114 = scalar_select %p111, %s112, %s113
      %p117 = pneg %p111
      %p118 = scmp.eq.s32.totalorder %s34, 2
      %p119 = por %p117, %p118
      %p120 = scmp.ne.s32.totalorder %s112, %s115
      %p121 = scmp.eq.s32.totalorder %s34, 0
      %p122 = por %p120, %p121
      %p123 = scmp.ne.s32.totalorder %s112, %s115
      %p124 = scmp.eq.s32.totalorder %s39, 2
      %p125 = por %p123, %p124
      %p126 = scmp.ne.s32.totalorder %s115, %s116
      %p127 = scmp.eq.s32.totalorder %s39, 0
      %p128 = por %p126, %p127
      %p129 = scmp.ne.s32.totalorder %s115, %s116
      %p130 = scmp.eq.s32.totalorder %s40, 2
      %p131 = por %p129, %p130
      %p133 = scmp.ne.s32.totalorder %s116, %s132
      %p134 = scmp.eq.s32.totalorder %s40, 0
      %p135 = por %p133, %p134
      %s137 = sadd.s32 %s136, 1
      %p140 = scmp.eq.s32.totalorder %s34, 2
      %p141 = scmp.ne.s32.totalorder %s136, %s138
      %p142 = scmp.eq.s32.totalorder %s34, 0
      %p143 = por %p141, %p142
      %p144 = scmp.ne.s32.totalorder %s136, %s138
      %p145 = scmp.eq.s32.totalorder %s39, 2
      %p146 = por %p144, %p145
      %p147 = scmp.ne.s32.totalorder %s138, %s139
      %p148 = scmp.eq.s32.totalorder %s39, 0
      %p149 = por %p147, %p148
      %p150 = scmp.ne.s32.totalorder %s138, %s139
      %p151 = scmp.eq.s32.totalorder %s40, 2
      %p152 = por %p150, %p151
      %p154 = scmp.ne.s32.totalorder %s139, %s153
      %p155 = scmp.eq.s32.totalorder %s40, 0
      %p156 = por %p154, %p155
      %s158 = sadd.s32 %s157, 1
      %p161 = scmp.eq.s32.totalorder %s34, 2
      %p162 = scmp.ne.s32.totalorder %s157, %s159
      %p163 = scmp.eq.s32.totalorder %s34, 0
      %p164 = por %p162, %p163
      %p165 = scmp.ne.s32.totalorder %s157, %s159
      %p166 = scmp.eq.s32.totalorder %s39, 2
      %p167 = por %p165, %p166
      %p168 = scmp.ne.s32.totalorder %s159, %s160
      %p169 = scmp.eq.s32.totalorder %s39, 0
      %p170 = por %p168, %p169
      %p171 = scmp.ne.s32.totalorder %s159, %s160
      %p172 = scmp.eq.s32.totalorder %s40, 2
      %p173 = por %p171, %p172
      %p175 = scmp.ne.s32.totalorder %s160, %s174
      %p176 = scmp.eq.s32.totalorder %s40, 0
      %p177 = por %p175, %p176
      %s178 = ssub.s32 %s34, %s41
      %p179 = scmp.eq.s32.totalorder %s178, 0
      %s181 = sadd.s32 %s180, 1
      %s182 = scalar_select %p179, %s180, %s181
      %p185 = pneg %p179
      %p186 = scmp.eq.s32.totalorder %s34, 2
      %p187 = por %p185, %p186
      %p188 = scmp.ne.s32.totalorder %s180, %s183
      %p189 = scmp.eq.s32.totalorder %s34, 0
      %p190 = por %p188, %p189
      %p191 = scmp.ne.s32.totalorder %s180, %s183
      %p192 = scmp.eq.s32.totalorder %s39, 2
      %p193 = por %p191, %p192
      %p194 = scmp.ne.s32.totalorder %s183, %s184
      %p195 = scmp.eq.s32.totalorder %s39, 0
      %p196 = por %p194, %p195
      %p197 = scmp.ne.s32.totalorder %s183, %s184
      %p198 = scmp.eq.s32.totalorder %s40, 2
      %p199 = por %p197, %p198
      %p201 = scmp.ne.s32.totalorder %s184, %s200
      %p202 = scmp.eq.s32.totalorder %s40, 0
      %p203 = por %p201, %p202
      %s204 = ssub.s32 %s34, %s41
      %p205 = scmp.eq.s32.totalorder %s204, 0
      %s207 = sadd.s32 %s206, 1
      %s208 = scalar_select %p205, %s206, %s207
      %p211 = pneg %p205
      %p212 = scmp.eq.s32.totalorder %s34, 2
      %p213 = por %p211, %p212
      %p214 = scmp.ne.s32.totalorder %s206, %s209
      %p215 = scmp.eq.s32.totalorder %s34, 0
      %p216 = por %p214, %p215
      %p217 = scmp.ne.s32.totalorder %s206, %s209
      %p218 = scmp.eq.s32.totalorder %s39, 2
      %p219 = por %p217, %p218
      %p220 = scmp.ne.s32.totalorder %s209, %s210
      %p221 = scmp.eq.s32.totalorder %s39, 0
      %p222 = por %p220, %p221
      %p223 = scmp.ne.s32.totalorder %s209, %s210
      %p224 = scmp.eq.s32.totalorder %s40, 2
      %p225 = por %p223, %p224
      %p227 = scmp.ne.s32.totalorder %s210, %s226
      %p228 = scmp.eq.s32.totalorder %s40, 0
      %p229 = por %p227, %p228
      %s230 = ssub.s32 %s34, %s41
      %p231 = scmp.eq.s32.totalorder %s230, 0
      %s233 = sadd.s32 %s232, 1
      %s234 = scalar_select %p231, %s232, %s233
      %p237 = pneg %p231
      %p238 = scmp.eq.s32.totalorder %s34, 2
      %p239 = por %p237, %p238
      %p240 = scmp.ne.s32.totalorder %s232, %s235
      %p241 = scmp.eq.s32.totalorder %s34, 0
      %p242 = por %p240, %p241
      %p243 = scmp.ne.s32.totalorder %s232, %s235
      %p244 = scmp.eq.s32.totalorder %s39, 2
      %p245 = por %p243, %p244
      %p246 = scmp.ne.s32.totalorder %s235, %s236
      %p247 = scmp.eq.s32.totalorder %s39, 0
      %p248 = por %p246, %p247
      %p249 = scmp.ne.s32.totalorder %s235, %s236
      %p250 = scmp.eq.s32.totalorder %s40, 2
      %p251 = por %p249, %p250
      %p253 = scmp.ne.s32.totalorder %s236, %s252
      %p254 = scmp.eq.s32.totalorder %s40, 0
      %p255 = por %p253, %p254
      %s256 = ssub.s32 %s34, %s41
      %p257 = scmp.eq.s32.totalorder %s256, 0
      %s259 = sadd.s32 %s258, 1
      %s260 = scalar_select %p257, %s258, %s259
      %p263 = pneg %p257
      %p264 = scmp.eq.s32.totalorder %s34, 2
      %p265 = por %p263, %p264
      %p266 = scmp.ne.s32.totalorder %s258, %s261
      %p267 = scmp.eq.s32.totalorder %s34, 0
      %p268 = por %p266, %p267
      %p269 = scmp.ne.s32.totalorder %s258, %s261
      %p270 = scmp.eq.s32.totalorder %s39, 2
      %p271 = por %p269, %p270
      %p272 = scmp.ne.s32.totalorder %s261, %s262
      %p273 = scmp.eq.s32.totalorder %s39, 0
      %p274 = por %p272, %p273
      %p275 = scmp.ne.s32.totalorder %s261, %s262
      %p276 = scmp.eq.s32.totalorder %s40, 2
      %p277 = por %p275, %p276
      %p279 = scmp.ne.s32.totalorder %s262, %s278
      %p280 = scmp.eq.s32.totalorder %s40, 0
      %p281 = por %p279, %p280
      %s282 = ssub.s32 %s34, %s41
      %p283 = scmp.eq.s32.totalorder %s282, 0
      %s285 = sadd.s32 %s284, 1
      %s286 = scalar_select %p283, %s284, %s285
      %p289 = pneg %p283
      %p290 = scmp.eq.s32.totalorder %s34, 2
      %p291 = por %p289, %p290
      %p292 = scmp.ne.s32.totalorder %s284, %s287
      %p293 = scmp.eq.s32.totalorder %s34, 0
      %p294 = por %p292, %p293
      %p295 = scmp.ne.s32.totalorder %s284, %s287
      %p296 = scmp.eq.s32.totalorder %s39, 2
      %p297 = por %p295, %p296
      %p298 = scmp.ne.s32.totalorder %s287, %s288
      %p299 = scmp.eq.s32.totalorder %s39, 0
      %p300 = por %p298, %p299
      %p301 = scmp.ne.s32.totalorder %s287, %s288
      %p302 = scmp.eq.s32.totalorder %s40, 2
      %p303 = por %p301, %p302
      %p305 = scmp.ne.s32.totalorder %s288, %s304
      %p306 = scmp.eq.s32.totalorder %s40, 0
      %p307 = por %p305, %p306
      %p308 = scmp.le.s32.totalorder 1, %s34
      %p309 = scmp.lt.s32.totalorder %s34, 4
      %p310 = pnand %p308, %p309
      %p311 = pneg %p310
      // Predicated region
      $region9: #{basic_block_forward.3} parent=5 // pred_check
        _
      $region10: #{basic_block_forward.3} parent=5 // pred_check_branch
        %313 = sbr.rel (%p310) target = $region12
      $region11: #{basic_block_forward.3} parent=5 // pred_region
        %s314 = ssub.s32 %s34, 1
        // Predicated region
        $region13: #{basic_block_forward.3} parent=11 // pred_check
          %p315 = pneg %p81
        $region14: #{basic_block_forward.3} parent=11 // pred_check_branch
          %317 = sbr.rel (%p315) target = $region16
        $region15: #{basic_block_forward.3} parent=11 // pred_region
          %s319 = ssub.s32 320, 320
          %320 = vsyncadd [#allocation6], %s319
          %s321 = sshll.u32 [#allocation5], 4
          %s322 = int_to_ptr.vmem [resolvable:$true] %s321
          %327 = dma.hbm_to_vmem [thread:$0]  %s1, 320, %s322, [#allocation6], 64, 64, 4
        $region16: #{basic_block_forward.3} parent=11 // pred_fallthru
          _
        // Predicated region
        $region17: #{basic_block_forward.3} parent=11 // pred_check
          %p328 = pneg %p102
        $region18: #{basic_block_forward.3} parent=11 // pred_check_branch
          %330 = sbr.rel (%p328) target = $region20
        $region19: #{basic_block_forward.3} parent=11 // pred_region
          %s332 = ssub.s32 16, 16
          %333 = vsyncadd [#allocation6], %s332
          %s335 = sshll.u32 [#allocation7], 4
          %s336 = int_to_ptr.vmem [resolvable:$true] %s335
          %338 = dma.hbm_to_vmem [thread:$0]  %s2, 16, %s336, [#allocation6]
        $region20: #{basic_block_forward.3} parent=11 // pred_fallthru
          _
        // Predicated region
        $region21: #{basic_block_forward.3} parent=11 // pred_check
          %p339 = pneg %p149
        $region22: #{basic_block_forward.3} parent=11 // pred_check_branch
          %341 = sbr.rel (%p339) target = $region24
        $region23: #{basic_block_forward.3} parent=11 // pred_region
          %s343 = ssub.s32 64, 64
          %344 = vsyncadd [#allocation9], %s343
          %s346 = sshll.u32 [#allocation10], 4
          %s347 = int_to_ptr.vmem [resolvable:$true] %s346
          %349 = dma.hbm_to_vmem [thread:$0]  %s4, 64, %s347, [#allocation9]
        $region24: #{basic_block_forward.3} parent=11 // pred_fallthru
          _
        // Predicated region
        $region25: #{basic_block_forward.3} parent=11 // pred_check
          %p350 = pneg %p170
        $region26: #{basic_block_forward.3} parent=11 // pred_check_branch
          %352 = sbr.rel (%p350) target = $region28
        $region27: #{basic_block_forward.3} parent=11 // pred_region
          %s354 = ssub.s32 16, 16
          %355 = vsyncadd [#allocation12], %s354
          %s357 = sshll.u32 [#allocation11], 4
          %s358 = int_to_ptr.vmem [resolvable:$true] %s357
          %360 = dma.hbm_to_vmem [thread:$0]  %s5, 16, %s358, [#allocation12]
        $region28: #{basic_block_forward.3} parent=11 // pred_fallthru
          _
      $region12: #{basic_block_forward.3} parent=5 // pred_fallthru
        _
      %p361 = scmp.lt.s32.totalorder %s34, 3
      // Predicated region
      $region29: #{basic_block_forward.3} parent=5 // pred_check
        %p362 = pneg %p361
      $region30: #{basic_block_forward.3} parent=5 // pred_check_branch
        %364 = sbr.rel (%p362) target = $region32
      $region31: #{basic_block_forward.3} parent=5 // pred_region
        // Predicated region
        $region33: #{basic_block_forward.3} parent=31 // pred_check
          %p365 = pneg %p54
        $region34: #{basic_block_forward.3} parent=31 // pred_check_branch
          %367 = sbr.rel (%p365) target = $region36
        $region35: #{basic_block_forward.3} parent=31 // pred_region
          %s368 = sand.u32 %s34, 1
          %s369 = scalar_lea.sflag [#allocation3], %s368
          %s370 = sand.u32 %s44, 1
          %s371 = smul.addr %s370, 24
          %s372 = scalar_lea.vmem [#allocation2], %s371
          %s373 = smul.u32 6, %s34
          %s375 = ssub.s32 384, 384
          %376 = vsyncadd %s369, %s375
          %s377 = smul.addr %s373, 64
          %s378 = scalar_lea.hbm %s0, %s377
          %s379 = sshll.u32 %s372, 4
          %s380 = int_to_ptr.vmem [resolvable:$true] %s379
          %385 = dma.hbm_to_vmem [thread:$0]  %s378, 384, %s380, %s369, 64, 64, 4
        $region36: #{basic_block_forward.3} parent=31 // pred_fallthru
          _
        // Predicated region
        $region37: #{basic_block_forward.3} parent=31 // pred_check
          %p386 = pneg %p122
        $region38: #{basic_block_forward.3} parent=31 // pred_check_branch
          %388 = sbr.rel (%p386) target = $region40
        $region39: #{basic_block_forward.3} parent=31 // pred_region
          %s389 = sand.u32 %s34, 1
          %s390 = scalar_lea.sflag [#allocation9], %s389
          %s391 = sand.u32 %s112, 1
          %s392 = smul.addr %s391, 24
          %s393 = scalar_lea.vmem [#allocation8], %s392
          %s394 = smul.u32 6, %s34
          %s396 = ssub.s32 384, 384
          %397 = vsyncadd %s390, %s396
          %s398 = smul.addr %s394, 64
          %s399 = scalar_lea.hbm %s3, %s398
          %s400 = sshll.u32 %s393, 4
          %s401 = int_to_ptr.vmem [resolvable:$true] %s400
          %406 = dma.hbm_to_vmem [thread:$0]  %s399, 384, %s401, %s390, 64, 64, 4
        $region40: #{basic_block_forward.3} parent=31 // pred_fallthru
          _
        // Predicated region
        $region41: #{basic_block_forward.3} parent=31 // pred_check
          %p407 = pneg %p190
        $region42: #{basic_block_forward.3} parent=31 // pred_check_branch
          %409 = sbr.rel (%p407) target = $region44
        $region43: #{basic_block_forward.3} parent=31 // pred_region
          %s410 = sand.u32 %s34, 1
          %s411 = scalar_lea.sflag [#allocation3], %s410
          %s412 = sand.u32 %s180, 1
          %s413 = smul.addr %s412, 48
          %s414 = scalar_lea.vmem [#allocation13], %s413
          %s415 = smul.u32 6, %s34
          %s417 = ssub.s32 768, 768
          %418 = vsyncadd %s411, %s417
          %s419 = smul.addr %s415, 128
          %s420 = scalar_lea.hbm %s6, %s419
          %s421 = sshll.u32 %s414, 4
          %s422 = int_to_ptr.vmem [resolvable:$true] %s421
          %427 = dma.hbm_to_vmem [thread:$0]  %s420, 768, %s422, %s411, 128, 128, 8
        $region44: #{basic_block_forward.3} parent=31 // pred_fallthru
          _
      $region32: #{basic_block_forward.3} parent=5 // pred_fallthru
        _
      %p428 = scmp.le.s32.totalorder 1, %s34
      %p429 = scmp.lt.s32.totalorder %s34, 4
      %p430 = pnand %p428, %p429
      %p431 = pneg %p430
      // Predicated region
      $region45: #{basic_block_forward.3} parent=5 // pred_check
        _
      $region46: #{basic_block_forward.3} parent=5 // pred_check_branch
        %433 = sbr.rel (%p430) target = $region48
      $region47: #{basic_block_forward.3} parent=5 // pred_region
        %s434 = ssub.s32 %s34, 1
        %s435 = sand.u32 %s39, 1
        %s436 = scalar_lea.sflag [#allocation3], %s435
        %s437 = sand.u32 %s47, 1
        %s438 = smul.addr %s437, 24
        %s439 = scalar_lea.vmem [#allocation2], %s438
        // Predicated region
        $region49: #{basic_block_forward.3} parent=47 // pred_check
          %p440 = pneg %p60
        $region50: #{basic_block_forward.3} parent=47 // pred_check_branch
          %442 = sbr.rel (%p440) target = $region52
        $region51: #{basic_block_forward.3} parent=47 // pred_region
          %443 = dma.done %s436, 384
        $region52: #{basic_block_forward.3} parent=47 // pred_fallthru
          _
        // Predicated region
        $region53: #{basic_block_forward.3} parent=47 // pred_check
          %p444 = pneg %p81
        $region54: #{basic_block_forward.3} parent=47 // pred_check_branch
          %446 = sbr.rel (%p444) target = $region56
        $region55: #{basic_block_forward.3} parent=47 // pred_region
          %447 = dma.done [#allocation6], 320
        $region56: #{basic_block_forward.3} parent=47 // pred_fallthru
          _
        // Predicated region
        $region57: #{basic_block_forward.3} parent=47 // pred_check
          %p448 = pneg %p102
        $region58: #{basic_block_forward.3} parent=47 // pred_check_branch
          %450 = sbr.rel (%p448) target = $region60
        $region59: #{basic_block_forward.3} parent=47 // pred_region
          %451 = dma.done [#allocation6], 16
        $region60: #{basic_block_forward.3} parent=47 // pred_fallthru
          _
        %s452 = sand.u32 %s39, 1
        %s453 = scalar_lea.sflag [#allocation9], %s452
        %s454 = sand.u32 %s115, 1
        %s455 = smul.addr %s454, 24
        %s456 = scalar_lea.vmem [#allocation8], %s455
        // Predicated region
        $region61: #{basic_block_forward.3} parent=47 // pred_check
          %p457 = pneg %p128
        $region62: #{basic_block_forward.3} parent=47 // pred_check_branch
          %459 = sbr.rel (%p457) target = $region64
        $region63: #{basic_block_forward.3} parent=47 // pred_region
          %460 = dma.done %s453, 384
        $region64: #{basic_block_forward.3} parent=47 // pred_fallthru
          _
        // Predicated region
        $region65: #{basic_block_forward.3} parent=47 // pred_check
          %p461 = pneg %p149
        $region66: #{basic_block_forward.3} parent=47 // pred_check_branch
          %463 = sbr.rel (%p461) target = $region68
        $region67: #{basic_block_forward.3} parent=47 // pred_region
          %464 = dma.done [#allocation9], 64
        $region68: #{basic_block_forward.3} parent=47 // pred_fallthru
          _
        // Predicated region
        $region69: #{basic_block_forward.3} parent=47 // pred_check
          %p465 = pneg %p170
        $region70: #{basic_block_forward.3} parent=47 // pred_check_branch
          %467 = sbr.rel (%p465) target = $region72
        $region71: #{basic_block_forward.3} parent=47 // pred_region
          %468 = dma.done [#allocation12], 16
        $region72: #{basic_block_forward.3} parent=47 // pred_fallthru
          _
        %s469 = sand.u32 %s39, 1
        %s470 = scalar_lea.sflag [#allocation3], %s469
        %s471 = sand.u32 %s183, 1
        %s472 = smul.addr %s471, 48
        %s473 = scalar_lea.vmem [#allocation13], %s472
        // Predicated region
        $region73: #{basic_block_forward.3} parent=47 // pred_check
          %p474 = pneg %p196
        $region74: #{basic_block_forward.3} parent=47 // pred_check_branch
          %476 = sbr.rel (%p474) target = $region76
        $region75: #{basic_block_forward.3} parent=47 // pred_region
          %477 = dma.done %s470, 768
        $region76: #{basic_block_forward.3} parent=47 // pred_fallthru
          _
        %s478 = sand.u32 %s39, 1
        %s479 = scalar_lea.sflag [#allocation3], %s478
        %s480 = sand.u32 %s47, 1
        %s481 = smul.addr %s480, 24
        %s482 = scalar_lea.vmem [#allocation2], %s481
        %p483 = pneg %p60
        %p484 = pneg %p57
        %p485 = pneg %p81
        %p486 = pneg %p78
        %p487 = pneg %p102
        %p488 = pneg %p99
        %s489 = sand.u32 %s39, 1
        %s490 = scalar_lea.sflag [#allocation9], %s489
        %s491 = sand.u32 %s115, 1
        %s492 = smul.addr %s491, 24
        %s493 = scalar_lea.vmem [#allocation8], %s492
        %p494 = pneg %p128
        %p495 = pneg %p125
        %p496 = pneg %p149
        %p497 = pneg %p146
        %p498 = pneg %p170
        %p499 = pneg %p167
        %s500 = sand.u32 %s39, 1
        %s501 = scalar_lea.sflag [#allocation3], %s500
        %s502 = sand.u32 %s183, 1
        %s503 = smul.addr %s502, 48
        %s504 = scalar_lea.vmem [#allocation13], %s503
        %p505 = pneg %p196
        %p506 = pneg %p193
        %p507 = pneg %p222
        %p508 = pneg %p219
        %s509 = sand.u32 %s209, 1
        %s510 = scalar_lea.sflag [#allocation4], %s509
        %s511 = sand.u32 %s209, 1
        %s512 = smul.addr %s511, 48
        %s513 = scalar_lea.vmem [#allocation14], %s512
        %p514 = pneg %p248
        %p515 = pneg %p245
        %s516 = sand.u32 %s39, 1
        %s517 = scalar_lea.sflag [#allocation16], %s516
        %s518 = sand.u32 %s235, 1
        %s519 = smul.addr %s518, 48
        %s520 = scalar_lea.vmem [#allocation15], %s519
        %p521 = pneg %p274
        %p522 = pneg %p271
        %s523 = sand.u32 %s39, 1
        %s524 = scalar_lea.sflag [#allocation16], %s523
        %s525 = sand.u32 %s261, 1
        %s526 = smul.addr %s525, 2
        %s527 = scalar_lea.vmem [#allocation17], %s526
        %p528 = pneg %p300
        %p529 = pneg %p297
        %s530 = sand.u32 %s287, 1
        %s531 = scalar_lea.sflag [#allocation19], %s530
        %s532 = sand.u32 %s287, 1
        %s533 = smul.addr %s532, 2
        %s534 = scalar_lea.vmem [#allocation18], %s533
        %s535 = smul.u32 6, %s39
        %s536 = smul.u32 6, %s39
        %s537 = smul.u32 6, %s39
        %s538 = smul.u32 6, %s39
        %s539 = smul.u32 6, %s39
        %v541 = vld [vmem:[%s473] sm:$0xff]
        %v542 = vld [vmem:[%s473 + $0x8] sm:$0xff]
        %v543 = vld [vmem:[%s473 + $0x10] sm:$0xff]
        %v544 = vld [vmem:[%s473 + $0x18] sm:$0xff]
        %v545 = vld [vmem:[%s473 + $0x20] sm:$0xff]
        %v546 = vld [vmem:[%s473 + $0x28] sm:$0xff]
        %v547 = vld [vmem:[%s439] sm:$0xf]
        %v548 = vld [vmem:[%s439 + $0x4] sm:$0xf]
        %v549 = vld [vmem:[%s439 + $0x8] sm:$0xf]
        %v550 = vld [vmem:[%s439 + $0xc] sm:$0xf]
        %v551 = vld [vmem:[%s439 + $0x10] sm:$0xf]
        %v552 = vld [vmem:[%s439 + $0x14] sm:$0xf]
        %v553 = vld [vmem:[#allocation5] sm:$0xf]
        %v554 = vld [vmem:[#allocation5 + $0x4] sm:$0xf]
        %v555 = vld [vmem:[#allocation5 + $0x8] sm:$0xf]
        %v556 = vld [vmem:[#allocation5 + $0xc] sm:$0xf]
        %v557 = vld [vmem:[#allocation5 + $0x10] sm:$0xf]
        %v558 = vld [vmem:[#allocation7] sm:$0x1]
        %v560 = vlaneseq
        %v561 = vshrl.u32 %v560, 7
        %v562 = vsub.s32 0, %v561
        %v563 = vrot.slane %v558, %v562
        %v571 = vunpack.c.l.b16 %v547
        %v572 = vunpack.c.l.b16 %v548
        %v573 = vunpack.c.l.b16 %v549
        %v574 = vunpack.c.l.b16 %v550
        %v575 = vunpack.c.l.b16 %v551
        %v576 = vunpack.c.l.b16 %v552
        %v577 = vpack.c.b16 %v572, %v571
        %v578 = vpack.c.b16 %v574, %v573
        %v579 = vpack.c.b16 %v576, %v575
        %v585 = vunpack.c.l.b16 %v553
        %v586 = vunpack.c.l.b16 %v554
        %v587 = vunpack.c.l.b16 %v555
        %v588 = vunpack.c.l.b16 %v556
        %v589 = vunpack.c.l.b16 %v557
        %v590 = vpack.c.b16 %v586, %v585
        %v591 = vpack.c.b16 %v588, %v587
        %v592 = vpack.c.b16 %v589, %v589
        %vm595 = vcmask 326656
        %v597 = vsel %vm595, %v577, 0
        %v600 = vsel %vm595, %v578, 0
        %v603 = vsel %vm595, %v579, 0
        %vm605 = vcmask 1043456
        %v607 = vsel %vm605, %v592, 0
        %609 = vmatprep.subr.bf16.mxu0 0
        %610 = vmatpush1.bf16.msra.mxu0 %v590
        %611 = vmatprep.subr.bf16.mxu0 0
        %612 = vmatpush1.bf16.msra.mxu0 %v591
        %613 = vmatprep.subr.bf16.mxu0 0
        %614 = vmatpush1.bf16.msra.mxu0 %v607
        %615 = vmatprep.subr.bf16.mxu0 0
        %616 = vmatpush1.bf16.msra.mxu0 0
        %617 = vmatprep.subr.bf16.mxu0 0
        %618 = vmatpush1.bf16.msra.mxu0 0
        %619 = vmatprep.subr.bf16.mxu0 0
        %620 = vmatpush1.bf16.msra.mxu0 0
        %621 = vmatprep.subr.bf16.mxu0 0
        %622 = vmatpush1.bf16.msra.mxu0 0
        %623 = vmatprep.subr.bf16.mxu0 0
        %624 = vmatpush1.bf16.msra.mxu0 0
        %625 = vmatprep.subr.bf16.mxu0 0
        %626 = vmatpush1.bf16.msra.mxu0 0
        %627 = vmatprep.subr.bf16.mxu0 0
        %628 = vmatpush1.bf16.msra.mxu0 0
        %629 = vmatprep.subr.bf16.mxu0 0
        %630 = vmatpush1.bf16.msra.mxu0 0
        %631 = vmatprep.subr.bf16.mxu0 0
        %632 = vmatpush1.bf16.msra.mxu0 0
        %633 = vmatprep.subr.bf16.mxu0 0
        %634 = vmatpush1.bf16.msra.mxu0 0
        %635 = vmatprep.subr.bf16.mxu0 0
        %636 = vmatpush1.bf16.msra.mxu0 0
        %637 = vmatprep.subr.bf16.mxu0 0
        %638 = vmatpush1.bf16.msra.mxu0 0
        %639 = vmatprep.subr.bf16.mxu0 0
        %640 = vmatpush1.bf16.msra.mxu0 0
        %641 = vmatprep.mubr.bf16.mxu0 0
        %642 = vmatmul.mubr.bf16.gmra.mrb[0].mxu0 %v597
        %v643 = vpop.f32.mrb[0].mxu0
        %v644 = vadd.f32 %v563, %v643
        %v645 = vpop.f32.mrb[0].mxu0
        %v646 = vpop.f32.mrb[0].mxu0
        %v647 = vadd.f32 %v563, %v646
        %v648 = vpop.f32.mrb[0].mxu0
        %649 = vmatprep.mubr.bf16.mxu0 0
        %650 = vmatmul.mubr.bf16.gmra.mrb[0].mxu0 %v600
        %v651 = vpop.f32.mrb[0].mxu0
        %v652 = vadd.f32 %v563, %v651
        %v653 = vpop.f32.mrb[0].mxu0
        %v654 = vpop.f32.mrb[0].mxu0
        %v655 = vadd.f32 %v563, %v654
        %v656 = vpop.f32.mrb[0].mxu0
        %657 = vmatprep.mubr.bf16.mxu0 0
        %658 = vmatmul.mubr.bf16.gmra.mrb[0].mxu0 %v603
        %v659 = vpop.f32.mrb[0].mxu0
        %v660 = vadd.f32 %v563, %v659
        %v661 = vpop.f32.mrb[0].mxu0
        %v662 = vpop.f32.mrb[0].mxu0
        %v663 = vadd.f32 %v563, %v662
        %v664 = vpop.f32.mrb[0].mxu0
        %665 = vdwg.mxu0
        %666 = vst [vmem:[%s513] sm:$0xff] %v644
        %667 = vst [vmem:[%s513 + $0x8] sm:$0xff] %v647
        %668 = vst [vmem:[%s513 + $0x10] sm:$0xff] %v652
        %669 = vst [vmem:[%s513 + $0x18] sm:$0xff] %v655
        %670 = vst [vmem:[%s513 + $0x20] sm:$0xff] %v660
        %671 = vst [vmem:[%s513 + $0x28] sm:$0xff] %v663
        %673 = vset.pattern.permute.xlu0 0
        %674 = vperm.xlu0 %673, %v541
        %v675 = vpop.permute.xlu0 %674
        %678 = vset.pattern.permute.xlu0 0
        %679 = vperm.xlu0 %678, %v542
        %v680 = vpop.permute.xlu0 %679
        %683 = vset.pattern.permute.xlu0 0
        %684 = vperm.xlu0 %683, %v543
        %v685 = vpop.permute.xlu0 %684
        %688 = vset.pattern.permute.xlu0 0
        %689 = vperm.xlu0 %688, %v544
        %v690 = vpop.permute.xlu0 %689
        %693 = vset.pattern.permute.xlu0 0
        %694 = vperm.xlu0 %693, %v545
        %v695 = vpop.permute.xlu0 %694
        %698 = vset.pattern.permute.xlu0 0
        %699 = vperm.xlu0 %698, %v546
        %v700 = vpop.permute.xlu0 %699
        %v702 = vmul.f32 %v644, %v675
        %v703 = vmul.f32 %v647, %v680
        %v704 = vmul.f32 %v652, %v685
        %v705 = vmul.f32 %v655, %v690
        %v706 = vmul.f32 %v660, %v695
        %v707 = vmul.f32 %v663, %v700
        %v708 = vadd.f32 %v702, %v703
        %v709 = vadd.f32 %v708, %v704
        %v710 = vadd.f32 %v709, %v705
        %v711 = vadd.f32 %v710, %v706
        %v712 = vadd.f32 %v711, %v707
        %v713 = vrot.slane %v712, 4
        %v714 = vadd.f32 %v712, %v713
        %v715 = vrot.slane %v714, 2
        %v716 = vadd.f32 %v714, %v715
        %v717 = vrot.slane %v716, 1
        %v718 = vadd.f32 %v716, %v717
        %719 = vst [vmem:[%s527] sm:$0x1] %v718
        %v720 = vmul.f32 %v702, %v644
        %v721 = vmul.f32 %v703, %v647
        %v722 = vmul.f32 %v704, %v652
        %v723 = vmul.f32 %v705, %v655
        %v724 = vmul.f32 %v706, %v660
        %v725 = vmul.f32 %v707, %v663
        %v726 = vadd.f32 %v720, %v721
        %v727 = vadd.f32 %v726, %v722
        %v728 = vadd.f32 %v727, %v723
        %v729 = vadd.f32 %v728, %v724
        %v730 = vadd.f32 %v729, %v725
        %v731 = vrot.slane %v730, 4
        %v732 = vadd.f32 %v730, %v731
        %v733 = vrot.slane %v732, 2
        %v734 = vadd.f32 %v732, %v733
        %v735 = vrot.slane %v734, 1
        %v736 = vadd.f32 %v734, %v735
        %737 = vst [vmem:[%s527 + $0x1] sm:$0x1] %v736
        %v738 = vld [vmem:[%s456] sm:$0xf]
        %v739 = vld [vmem:[%s456 + $0x4] sm:$0xf]
        %v740 = vld [vmem:[%s456 + $0x8] sm:$0xf]
        %v741 = vld [vmem:[%s456 + $0xc] sm:$0xf]
        %v742 = vld [vmem:[%s456 + $0x10] sm:$0xf]
        %v743 = vld [vmem:[%s456 + $0x14] sm:$0xf]
        %v744 = vld [vmem:[#allocation10] sm:$0xf]
        %v745 = vld [vmem:[#allocation11] sm:$0x1]
        %v747 = vlaneseq
        %v748 = vshrl.u32 %v747, 7
        %v749 = vsub.s32 0, %v748
        %v750 = vrot.slane %v745, %v749
        %v758 = vunpack.c.l.b16 %v738
        %v759 = vunpack.c.l.b16 %v739
        %v760 = vunpack.c.l.b16 %v740
        %v761 = vunpack.c.l.b16 %v741
        %v762 = vunpack.c.l.b16 %v742
        %v763 = vunpack.c.l.b16 %v743
        %v764 = vpack.c.b16 %v759, %v758
        %v765 = vpack.c.b16 %v761, %v760
        %v766 = vpack.c.b16 %v763, %v762
        %vm767 = vcmask 64512
        %v769 = vsel %vm767, %v764, 0
        %v772 = vsel %vm767, %v765, 0
        %v775 = vsel %vm767, %v766, 0
        %v778 = vsel %vm605, %v744, 0
        %780 = vmatprep.subr.bf16.mxu0 0
        %781 = vmatpush1.bf16.msra.mxu0 %v778
        %782 = vmatprep.subr.bf16.mxu0 0
        %783 = vmatpush1.bf16.msra.mxu0 0
        %784 = vmatprep.subr.bf16.mxu0 0
        %785 = vmatpush1.bf16.msra.mxu0 0
        %786 = vmatprep.subr.bf16.mxu0 0
        %787 = vmatpush1.bf16.msra.mxu0 0
        %788 = vmatprep.subr.bf16.mxu0 0
        %789 = vmatpush1.bf16.msra.mxu0 0
        %790 = vmatprep.subr.bf16.mxu0 0
        %791 = vmatpush1.bf16.msra.mxu0 0
        %792 = vmatprep.subr.bf16.mxu0 0
        %793 = vmatpush1.bf16.msra.mxu0 0
        %794 = vmatprep.subr.bf16.mxu0 0
        %795 = vmatpush1.bf16.msra.mxu0 0
        %796 = vmatprep.subr.bf16.mxu0 0
        %797 = vmatpush1.bf16.msra.mxu0 0
        %798 = vmatprep.subr.bf16.mxu0 0
        %799 = vmatpush1.bf16.msra.mxu0 0
        %800 = vmatprep.subr.bf16.mxu0 0
        %801 = vmatpush1.bf16.msra.mxu0 0
        %802 = vmatprep.subr.bf16.mxu0 0
        %803 = vmatpush1.bf16.msra.mxu0 0
        %804 = vmatprep.subr.bf16.mxu0 0
        %805 = vmatpush1.bf16.msra.mxu0 0
        %806 = vmatprep.subr.bf16.mxu0 0
        %807 = vmatpush1.bf16.msra.mxu0 0
        %808 = vmatprep.subr.bf16.mxu0 0
        %809 = vmatpush1.bf16.msra.mxu0 0
        %810 = vmatprep.subr.bf16.mxu0 0
        %811 = vmatpush1.bf16.msra.mxu0 0
        %812 = vmatprep.mubr.bf16.mxu0 0
        %813 = vmatmul.mubr.bf16.gmra.mrb[0].mxu0 %v769
        %v814 = vpop.f32.mrb[0].mxu0
        %v815 = vadd.f32 %v750, %v814
        %v816 = vpop.f32.mrb[0].mxu0
        %v817 = vpop.f32.mrb[0].mxu0
        %v818 = vadd.f32 %v750, %v817
        %v819 = vpop.f32.mrb[0].mxu0
        %820 = vmatprep.mubr.bf16.mxu0 0
        %821 = vmatmul.mubr.bf16.gmra.mrb[0].mxu0 %v772
        %v822 = vpop.f32.mrb[0].mxu0
        %v823 = vadd.f32 %v750, %v822
        %v824 = vpop.f32.mrb[0].mxu0
        %v825 = vpop.f32.mrb[0].mxu0
        %v826 = vadd.f32 %v750, %v825
        %v827 = vpop.f32.mrb[0].mxu0
        %828 = vmatprep.mubr.bf16.mxu0 0
        %829 = vmatmul.mubr.bf16.gmra.mrb[0].mxu0 %v775
        %v830 = vpop.f32.mrb[0].mxu0
        %v831 = vadd.f32 %v750, %v830
        %v832 = vpop.f32.mrb[0].mxu0
        %v833 = vpop.f32.mrb[0].mxu0
        %v834 = vadd.f32 %v750, %v833
        %v835 = vpop.f32.mrb[0].mxu0
        %836 = vdwg.mxu0
        %837 = vst [vmem:[%s520] sm:$0xff] %v815
        %838 = vst [vmem:[%s520 + $0x8] sm:$0xff] %v818
        %839 = vst [vmem:[%s520 + $0x10] sm:$0xff] %v823
        %840 = vst [vmem:[%s520 + $0x18] sm:$0xff] %v826
        %841 = vst [vmem:[%s520 + $0x20] sm:$0xff] %v831
        %842 = vst [vmem:[%s520 + $0x28] sm:$0xff] %v834
        %v843 = vmul.f32 %v815, %v675
        %v844 = vmul.f32 %v818, %v680
        %v845 = vmul.f32 %v823, %v685
        %v846 = vmul.f32 %v826, %v690
        %v847 = vmul.f32 %v831, %v695
        %v848 = vmul.f32 %v834, %v700
        %v849 = vadd.f32 %v843, %v844
        %v850 = vadd.f32 %v849, %v845
        %v851 = vadd.f32 %v850, %v846
        %v852 = vadd.f32 %v851, %v847
        %v853 = vadd.f32 %v852, %v848
        %v854 = vrot.slane %v853, 4
        %v855 = vadd.f32 %v853, %v854
        %v856 = vrot.slane %v855, 2
        %v857 = vadd.f32 %v855, %v856
        %v858 = vrot.slane %v857, 1
        %v859 = vadd.f32 %v857, %v858
        %860 = vst [vmem:[%s534] sm:$0x1] %v859
        %v861 = vmul.f32 %v843, %v815
        %v862 = vmul.f32 %v844, %v818
        %v863 = vmul.f32 %v845, %v823
        %v864 = vmul.f32 %v846, %v826
        %v865 = vmul.f32 %v847, %v831
        %v866 = vmul.f32 %v848, %v834
        %v867 = vadd.f32 %v861, %v862
        %v868 = vadd.f32 %v867, %v863
        %v869 = vadd.f32 %v868, %v864
        %v870 = vadd.f32 %v869, %v865
        %v871 = vadd.f32 %v870, %v866
        %v872 = vrot.slane %v871, 4
        %v873 = vadd.f32 %v871, %v872
        %v874 = vrot.slane %v873, 2
        %v875 = vadd.f32 %v873, %v874
        %v876 = vrot.slane %v875, 1
        %v877 = vadd.f32 %v875, %v876
        %878 = vst [vmem:[%s534 + $0x1] sm:$0x1] %v877
        %s879 = sand.u32 %s209, 1
        %s880 = scalar_lea.sflag [#allocation4], %s879
        %s881 = sand.u32 %s209, 1
        %s882 = smul.addr %s881, 48
        %s883 = scalar_lea.vmem [#allocation14], %s882
        %s884 = sand.u32 %s39, 1
        %s885 = scalar_lea.sflag [#allocation16], %s884
        %s886 = sand.u32 %s235, 1
        %s887 = smul.addr %s886, 48
        %s888 = scalar_lea.vmem [#allocation15], %s887
        %s889 = sand.u32 %s39, 1
        %s890 = scalar_lea.sflag [#allocation16], %s889
        %s891 = sand.u32 %s261, 1
        %s892 = smul.addr %s891, 2
        %s893 = scalar_lea.vmem [#allocation17], %s892
        %s894 = sand.u32 %s287, 1
        %s895 = scalar_lea.sflag [#allocation19], %s894
        %s896 = sand.u32 %s287, 1
        %s897 = smul.addr %s896, 2
        %s898 = scalar_lea.vmem [#allocation18], %s897
        // Predicated region
        $region77: #{basic_block_forward.3} parent=47 // pred_check
          %p899 = pneg %p219
        $region78: #{basic_block_forward.3} parent=47 // pred_check_branch
          %901 = sbr.rel (%p899) target = $region80
        $region79: #{basic_block_forward.3} parent=47 // pred_region
          %s902 = smul.u32 6, %s39
          %s904 = ssub.s32 768, 768
          %905 = vsyncadd %s880, %s904
          %s906 = smul.addr %s902, 128
          %s907 = scalar_lea.hbm %s7, %s906
          %s908 = sshll.u32 %s883, 4
          %s909 = int_to_ptr.vmem [resolvable:$true] %s908
          %914 = dma.vmem_to_hbm [thread:$0]  %s909, 768, %s907, %s880, 128, 128, 8
        $region80: #{basic_block_forward.3} parent=47 // pred_fallthru
          _
        // Predicated region
        $region81: #{basic_block_forward.3} parent=47 // pred_check
          %p915 = pneg %p245
        $region82: #{basic_block_forward.3} parent=47 // pred_check_branch
          %917 = sbr.rel (%p915) target = $region84
        $region83: #{basic_block_forward.3} parent=47 // pred_region
          %s918 = smul.u32 6, %s39
          %s920 = ssub.s32 768, 768
          %921 = vsyncadd %s885, %s920
          %s922 = smul.addr %s918, 128
          %s923 = scalar_lea.hbm %s8, %s922
          %s924 = sshll.u32 %s888, 4
          %s925 = int_to_ptr.vmem [resolvable:$true] %s924
          %930 = dma.vmem_to_hbm [thread:$0]  %s925, 768, %s923, %s885, 128, 128, 8
        $region84: #{basic_block_forward.3} parent=47 // pred_fallthru
          _
        // Predicated region
        $region85: #{basic_block_forward.3} parent=47 // pred_check
          %p931 = pneg %p271
        $region86: #{basic_block_forward.3} parent=47 // pred_check_branch
          %933 = sbr.rel (%p931) target = $region88
        $region87: #{basic_block_forward.3} parent=47 // pred_region
          %s935 = ssub.s32 32, 32
          %936 = vsyncadd %s890, %s935
          %s937 = smul.addr %s39, 32
          %s938 = scalar_lea.hbm %s9, %s937
          %s940 = sshll.u32 %s893, 4
          %s941 = int_to_ptr.vmem [resolvable:$true] %s940
          %943 = dma.vmem_to_hbm [thread:$0]  %s941, 32, %s938, %s890
        $region88: #{basic_block_forward.3} parent=47 // pred_fallthru
          _
        // Predicated region
        $region89: #{basic_block_forward.3} parent=47 // pred_check
          %p944 = pneg %p297
        $region90: #{basic_block_forward.3} parent=47 // pred_check_branch
          %946 = sbr.rel (%p944) target = $region92
        $region91: #{basic_block_forward.3} parent=47 // pred_region
          %s948 = ssub.s32 32, 32
          %949 = vsyncadd %s895, %s948
          %s950 = smul.addr %s39, 32
          %s951 = scalar_lea.hbm %s10, %s950
          %s953 = sshll.u32 %s898, 4
          %s954 = int_to_ptr.vmem [resolvable:$true] %s953
          %956 = dma.vmem_to_hbm [thread:$0]  %s954, 32, %s951, %s895
        $region92: #{basic_block_forward.3} parent=47 // pred_fallthru
          _
      $region48: #{basic_block_forward.3} parent=5 // pred_fallthru
        _
      %p957 = scmp.le.s32.totalorder 2, %s34
      // Predicated region
      $region93: #{basic_block_forward.3} parent=5 // pred_check
        %p958 = pneg %p957
      $region94: #{basic_block_forward.3} parent=5 // pred_check_branch
        %960 = sbr.rel (%p958) target = $region96
      $region95: #{basic_block_forward.3} parent=5 // pred_region
        %s961 = ssub.s32 %s34, 2
        // Predicated region
        $region97: #{basic_block_forward.3} parent=95 // pred_check
          %p962 = pneg %p225
        $region98: #{basic_block_forward.3} parent=95 // pred_check_branch
          %964 = sbr.rel (%p962) target = $region100
        $region99: #{basic_block_forward.3} parent=95 // pred_region
          %s965 = sand.u32 %s210, 1
          %s966 = scalar_lea.sflag [#allocation4], %s965
          %s967 = sand.u32 %s210, 1
          %s968 = smul.addr %s967, 48
          %s969 = scalar_lea.vmem [#allocation14], %s968
          %970 = dma.done %s966, 768
        $region100: #{basic_block_forward.3} parent=95 // pred_fallthru
          _
        // Predicated region
        $region101: #{basic_block_forward.3} parent=95 // pred_check
          %p971 = pneg %p251
        $region102: #{basic_block_forward.3} parent=95 // pred_check_branch
          %973 = sbr.rel (%p971) target = $region104
        $region103: #{basic_block_forward.3} parent=95 // pred_region
          %s974 = sand.u32 %s40, 1
          %s975 = scalar_lea.sflag [#allocation16], %s974
          %s976 = sand.u32 %s236, 1
          %s977 = smul.addr %s976, 48
          %s978 = scalar_lea.vmem [#allocation15], %s977
          %979 = dma.done %s975, 768
        $region104: #{basic_block_forward.3} parent=95 // pred_fallthru
          _
        // Predicated region
        $region105: #{basic_block_forward.3} parent=95 // pred_check
          %p980 = pneg %p277
        $region106: #{basic_block_forward.3} parent=95 // pred_check_branch
          %982 = sbr.rel (%p980) target = $region108
        $region107: #{basic_block_forward.3} parent=95 // pred_region
          %s983 = sand.u32 %s40, 1
          %s984 = scalar_lea.sflag [#allocation16], %s983
          %s985 = sand.u32 %s262, 1
          %s986 = smul.addr %s985, 2
          %s987 = scalar_lea.vmem [#allocation17], %s986
          %988 = dma.done %s984, 32
        $region108: #{basic_block_forward.3} parent=95 // pred_fallthru
          _
        // Predicated region
        $region109: #{basic_block_forward.3} parent=95 // pred_check
          %p989 = pneg %p303
        $region110: #{basic_block_forward.3} parent=95 // pred_check_branch
          %991 = sbr.rel (%p989) target = $region112
        $region111: #{basic_block_forward.3} parent=95 // pred_region
          %s992 = sand.u32 %s288, 1
          %s993 = scalar_lea.sflag [#allocation19], %s992
          %s994 = sand.u32 %s288, 1
          %s995 = smul.addr %s994, 2
          %s996 = scalar_lea.vmem [#allocation18], %s995
          %997 = dma.done %s993, 32
        $region112: #{basic_block_forward.3} parent=95 // pred_fallthru
          _
      $region96: #{basic_block_forward.3} parent=5 // pred_fallthru
        _
    $region6: #{basic_block_forward.3} parent=1 // loop_footer
      %s38 = sadd.s32 1, %s34
    $region7: #{basic_block_forward.3} parent=1 // loop_footer_branch
      %33 = sbr.rel target = $region3
    $region8: #{basic_block_forward.3} parent=1 // loop_exit
      _
    %998 = vsyncpa [#allocation3], 1
    %s999 = scalar_lea.sflag [#allocation3], 1
    %1000 = vsyncpa %s999, 1
    %1001 = vsyncpa [#allocation6], 1
    %1002 = vsyncpa [#allocation9], 1
    %s1003 = scalar_lea.sflag [#allocation9], 1
    %1004 = vsyncpa %s1003, 1
    %1005 = vsyncpa [#allocation12], 1
    %1006 = vsyncpa [#allocation4], 1
    %s1007 = scalar_lea.sflag [#allocation4], 1
    %1008 = vsyncpa %s1007, 1
    %1009 = vsyncpa [#allocation16], 1
    %s1010 = scalar_lea.sflag [#allocation16], 1
    %1011 = vsyncpa %s1010, 1
    %1012 = vsyncpa [#allocation19], 1
    %s1013 = scalar_lea.sflag [#allocation19], 1
    %1014 = vsyncpa %s1013, 1

// kernel: basic_block_forward.5
$region0: #{basic_block_forward.5}
  #allocation0 [shape = 'u32[]', space=smem, size = 0x4, offset = 0x4, fixed_abs, tag = 'smem constant byte address 0x4 - core index']
  #allocation1 [shape = 'u32[144,128]{1,0:T(1,128)}', space=vmem, size = 0x12000, scoped, tag = 'internal scratch']
  %s0 = inlined_call_operand.hbm [shape: f32[2,64,128], index: 0, kind: input, shape index: {}]
  %s1 = inlined_call_operand.hbm [shape: f32[1,128], index: 1, kind: input, shape index: {}]
  %s2 = inlined_call_operand.hbm [shape: f32[1,128], index: 2, kind: input, shape index: {}]
  %s3 = inlined_call_operand.hbm [shape: f32[2,64,128], index: 3, kind: input, shape index: {}]
  %s4 = inlined_call_operand.hbm [shape: f32[1,128], index: 4, kind: input, shape index: {}]
  %s5 = inlined_call_operand.hbm [shape: f32[1,128], index: 5, kind: input, shape index: {}]
  %s6 = inlined_call_operand.hbm [shape: f32[2,64,128], index: 6, kind: output, shape index: {}]
  %s7 = sld [smem:[#allocation0]]
  $region81: #{basic_block_forward.5} parent=0
    _
  %s9 = ssub.s32 1, %s7
  %s10 = scalar_select 0, %s9, %s7
  $region1: #{basic_block_forward.5} parent=0
    #allocation2 [shape = 'u8[65536]{0}', space=vmem, size = 0x10000, scoped, tag = 'input window, operand 0']
    #allocation3 [shape = 's32[2]{0}', space=sflag, size = 0x8, scoped, tag = 'scoped memory for basic_block_forward.5']
    #allocation4 [shape = 's32[2]{0}', space=sflag, size = 0x8, scoped, tag = 'scoped memory for basic_block_forward.5']
    #allocation5 [shape = 'u8[512]{0}', space=vmem, size = 0x400, scoped, tag = 'input window, operand 1, single buffered']
    #allocation6 [shape = 's32[1]{0}', space=sflag, size = 0x4, scoped, tag = 'scoped memory for basic_block_forward.5']
    #allocation7 [shape = 'u8[512]{0}', space=vmem, size = 0x400, scoped, tag = 'input window, operand 2, single buffered']
    #allocation8 [shape = 'u8[65536]{0}', space=vmem, size = 0x10000, scoped, tag = 'input window, operand 3']
    #allocation9 [shape = 's32[2]{0}', space=sflag, size = 0x8, scoped, tag = 'scoped memory for basic_block_forward.5']
    #allocation10 [shape = 'u8[512]{0}', space=vmem, size = 0x400, scoped, tag = 'input window, operand 4, single buffered']
    #allocation11 [shape = 'u8[512]{0}', space=vmem, size = 0x400, scoped, tag = 'input window, operand 5, single buffered']
    #allocation12 [shape = 's32[1]{0}', space=sflag, size = 0x4, scoped, tag = 'scoped memory for basic_block_forward.5']
    #allocation13 [shape = 'u8[65536]{0}', space=vmem, size = 0x10000, scoped, tag = 'output window, operand 0']
    %11 = vsyncpa [#allocation3], 0
    %s12 = scalar_lea.sflag [#allocation3], 1
    %13 = vsyncpa %s12, 0
    %14 = vsyncpa [#allocation6], 0
    %15 = vsyncpa [#allocation9], 0
    %s16 = scalar_lea.sflag [#allocation9], 1
    %17 = vsyncpa %s16, 0
    %18 = vsyncpa [#allocation12], 0
    %19 = vsyncpa [#allocation4], 0
    %s20 = scalar_lea.sflag [#allocation4], 1
    %21 = vsyncpa %s20, 0
    loop: start=0, step=1, limit=4
    $region2: #{basic_block_forward.5} parent=1 // loop_pre_header
      _
    $region3: #{basic_block_forward.5} parent=1 // loop_header
      %s23 = sphi 0, %s27
      %p24 = scmp.ge.s32.totalorder %s23, 4
      %s33 = sphi 0, %s35
      %s36 = sphi 0, %s33
      %s37 = sphi 0, %s36
      %s53 = sphi 0, %s37
      %s57 = sphi 0, %s57
      %s59 = sphi 0, %s57
      %s60 = sphi 0, %s59
      %s74 = sphi 0, %s60
      %s78 = sphi 0, %s78
      %s80 = sphi 0, %s78
      %s81 = sphi 0, %s80
      %s95 = sphi 0, %s81
      %s101 = sphi 0, %s103
      %s104 = sphi 0, %s101
      %s105 = sphi 0, %s104
      %s121 = sphi 0, %s105
      %s125 = sphi 0, %s125
      %s127 = sphi 0, %s125
      %s128 = sphi 0, %s127
      %s142 = sphi 0, %s128
      %s146 = sphi 0, %s146
      %s148 = sphi 0, %s146
      %s149 = sphi 0, %s148
      %s163 = sphi 0, %s149
      %s169 = sphi 0, %s171
      %s172 = sphi 0, %s169
      %s173 = sphi 0, %s172
      %s189 = sphi 0, %s173
    $region4: #{basic_block_forward.5} parent=1 // loop_header_branch
      %26 = sbr.rel (%p24) target = $region8
    $region5: #{basic_block_forward.5} parent=1 // loop_body
      %s28 = ssub.s32 %s23, 1
      %s29 = ssub.s32 %s23, 2
      %s30 = sadd.s32 %s23, 1
      %s31 = ssub.s32 %s23, %s30
      %p32 = scmp.eq.s32.totalorder %s31, 0
      %s34 = sadd.s32 %s33, 1
      %s35 = scalar_select %p32, %s33, %s34
      %p38 = pneg %p32
      %p39 = scmp.eq.s32.totalorder %s23, 1
      %p40 = por %p38, %p39
      %p41 = scmp.ne.s32.totalorder %s33, %s36
      %p42 = scmp.eq.s32.totalorder %s23, 0
      %p43 = por %p41, %p42
      %p44 = scmp.ne.s32.totalorder %s33, %s36
      %p45 = scmp.eq.s32.totalorder %s28, 1
      %p46 = por %p44, %p45
      %p47 = scmp.ne.s32.totalorder %s36, %s37
      %p48 = scmp.eq.s32.totalorder %s28, 0
      %p49 = por %p47, %p48
      %p50 = scmp.ne.s32.totalorder %s36, %s37
      %p51 = scmp.eq.s32.totalorder %s29, 1
      %p52 = por %p50, %p51
      %p54 = scmp.ne.s32.totalorder %s37, %s53
      %p55 = scmp.eq.s32.totalorder %s29, 0
      %p56 = por %p54, %p55
      %s58 = sadd.s32 %s57, 1
      %p61 = scmp.eq.s32.totalorder %s23, 1
      %p62 = scmp.ne.s32.totalorder %s57, %s59
      %p63 = scmp.eq.s32.totalorder %s23, 0
      %p64 = por %p62, %p63
      %p65 = scmp.ne.s32.totalorder %s57, %s59
      %p66 = scmp.eq.s32.totalorder %s28, 1
      %p67 = por %p65, %p66
      %p68 = scmp.ne.s32.totalorder %s59, %s60
      %p69 = scmp.eq.s32.totalorder %s28, 0
      %p70 = por %p68, %p69
      %p71 = scmp.ne.s32.totalorder %s59, %s60
      %p72 = scmp.eq.s32.totalorder %s29, 1
      %p73 = por %p71, %p72
      %p75 = scmp.ne.s32.totalorder %s60, %s74
      %p76 = scmp.eq.s32.totalorder %s29, 0
      %p77 = por %p75, %p76
      %s79 = sadd.s32 %s78, 1
      %p82 = scmp.eq.s32.totalorder %s23, 1
      %p83 = scmp.ne.s32.totalorder %s78, %s80
      %p84 = scmp.eq.s32.totalorder %s23, 0
      %p85 = por %p83, %p84
      %p86 = scmp.ne.s32.totalorder %s78, %s80
      %p87 = scmp.eq.s32.totalorder %s28, 1
      %p88 = por %p86, %p87
      %p89 = scmp.ne.s32.totalorder %s80, %s81
      %p90 = scmp.eq.s32.totalorder %s28, 0
      %p91 = por %p89, %p90
      %p92 = scmp.ne.s32.totalorder %s80, %s81
      %p93 = scmp.eq.s32.totalorder %s29, 1
      %p94 = por %p92, %p93
      %p96 = scmp.ne.s32.totalorder %s81, %s95
      %p97 = scmp.eq.s32.totalorder %s29, 0
      %p98 = por %p96, %p97
      %s99 = ssub.s32 %s23, %s30
      %p100 = scmp.eq.s32.totalorder %s99, 0
      %s102 = sadd.s32 %s101, 1
      %s103 = scalar_select %p100, %s101, %s102
      %p106 = pneg %p100
      %p107 = scmp.eq.s32.totalorder %s23, 1
      %p108 = por %p106, %p107
      %p109 = scmp.ne.s32.totalorder %s101, %s104
      %p110 = scmp.eq.s32.totalorder %s23, 0
      %p111 = por %p109, %p110
      %p112 = scmp.ne.s32.totalorder %s101, %s104
      %p113 = scmp.eq.s32.totalorder %s28, 1
      %p114 = por %p112, %p113
      %p115 = scmp.ne.s32.totalorder %s104, %s105
      %p116 = scmp.eq.s32.totalorder %s28, 0
      %p117 = por %p115, %p116
      %p118 = scmp.ne.s32.totalorder %s104, %s105
      %p119 = scmp.eq.s32.totalorder %s29, 1
      %p120 = por %p118, %p119
      %p122 = scmp.ne.s32.totalorder %s105, %s121
      %p123 = scmp.eq.s32.totalorder %s29, 0
      %p124 = por %p122, %p123
      %s126 = sadd.s32 %s125, 1
      %p129 = scmp.eq.s32.totalorder %s23, 1
      %p130 = scmp.ne.s32.totalorder %s125, %s127
      %p131 = scmp.eq.s32.totalorder %s23, 0
      %p132 = por %p130, %p131
      %p133 = scmp.ne.s32.totalorder %s125, %s127
      %p134 = scmp.eq.s32.totalorder %s28, 1
      %p135 = por %p133, %p134
      %p136 = scmp.ne.s32.totalorder %s127, %s128
      %p137 = scmp.eq.s32.totalorder %s28, 0
      %p138 = por %p136, %p137
      %p139 = scmp.ne.s32.totalorder %s127, %s128
      %p140 = scmp.eq.s32.totalorder %s29, 1
      %p141 = por %p139, %p140
      %p143 = scmp.ne.s32.totalorder %s128, %s142
      %p144 = scmp.eq.s32.totalorder %s29, 0
      %p145 = por %p143, %p144
      %s147 = sadd.s32 %s146, 1
      %p150 = scmp.eq.s32.totalorder %s23, 1
      %p151 = scmp.ne.s32.totalorder %s146, %s148
      %p152 = scmp.eq.s32.totalorder %s23, 0
      %p153 = por %p151, %p152
      %p154 = scmp.ne.s32.totalorder %s146, %s148
      %p155 = scmp.eq.s32.totalorder %s28, 1
      %p156 = por %p154, %p155
      %p157 = scmp.ne.s32.totalorder %s148, %s149
      %p158 = scmp.eq.s32.totalorder %s28, 0
      %p159 = por %p157, %p158
      %p160 = scmp.ne.s32.totalorder %s148, %s149
      %p161 = scmp.eq.s32.totalorder %s29, 1
      %p162 = por %p160, %p161
      %p164 = scmp.ne.s32.totalorder %s149, %s163
      %p165 = scmp.eq.s32.totalorder %s29, 0
      %p166 = por %p164, %p165
      %s167 = ssub.s32 %s23, %s30
      %p168 = scmp.eq.s32.totalorder %s167, 0
      %s170 = sadd.s32 %s169, 1
      %s171 = scalar_select %p168, %s169, %s170
      %p174 = pneg %p168
      %p175 = scmp.eq.s32.totalorder %s23, 1
      %p176 = por %p174, %p175
      %p177 = scmp.ne.s32.totalorder %s169, %s172
      %p178 = scmp.eq.s32.totalorder %s23, 0
      %p179 = por %p177, %p178
      %p180 = scmp.ne.s32.totalorder %s169, %s172
      %p181 = scmp.eq.s32.totalorder %s28, 1
      %p182 = por %p180, %p181
      %p183 = scmp.ne.s32.totalorder %s172, %s173
      %p184 = scmp.eq.s32.totalorder %s28, 0
      %p185 = por %p183, %p184
      %p186 = scmp.ne.s32.totalorder %s172, %s173
      %p187 = scmp.eq.s32.totalorder %s29, 1
      %p188 = por %p186, %p187
      %p190 = scmp.ne.s32.totalorder %s173, %s189
      %p191 = scmp.eq.s32.totalorder %s29, 0
      %p192 = por %p190, %p191
      %p193 = scmp.le.s32.totalorder 1, %s23
      %p194 = scmp.lt.s32.totalorder %s23, 3
      %p195 = pnand %p193, %p194
      %p196 = pneg %p195
      // Predicated region
      $region9: #{basic_block_forward.5} parent=5 // pred_check
        _
      $region10: #{basic_block_forward.5} parent=5 // pred_check_branch
        %198 = sbr.rel (%p195) target = $region12
      $region11: #{basic_block_forward.5} parent=5 // pred_region
        %s199 = ssub.s32 %s23, 1
        // Predicated region
        $region13: #{basic_block_forward.5} parent=11 // pred_check
          %p200 = pneg %p70
        $region14: #{basic_block_forward.5} parent=11 // pred_check_branch
          %202 = sbr.rel (%p200) target = $region16
        $region15: #{basic_block_forward.5} parent=11 // pred_region
          %s204 = ssub.s32 16, 16
          %205 = vsyncadd [#allocation6], %s204
          %s207 = sshll.u32 [#allocation5], 4
          %s208 = int_to_ptr.vmem [resolvable:$true] %s207
          %210 = dma.hbm_to_vmem [thread:$0]  %s1, 16, %s208, [#allocation6]
        $region16: #{basic_block_forward.5} parent=11 // pred_fallthru
          _
        // Predicated region
        $region17: #{basic_block_forward.5} parent=11 // pred_check
          %p211 = pneg %p91
        $region18: #{basic_block_forward.5} parent=11 // pred_check_branch
          %213 = sbr.rel (%p211) target = $region20
        $region19: #{basic_block_forward.5} parent=11 // pred_region
          %s215 = ssub.s32 16, 16
          %216 = vsyncadd [#allocation6], %s215
          %s218 = sshll.u32 [#allocation7], 4
          %s219 = int_to_ptr.vmem [resolvable:$true] %s218
          %221 = dma.hbm_to_vmem [thread:$0]  %s2, 16, %s219, [#allocation6]
        $region20: #{basic_block_forward.5} parent=11 // pred_fallthru
          _
        // Predicated region
        $region21: #{basic_block_forward.5} parent=11 // pred_check
          %p222 = pneg %p138
        $region22: #{basic_block_forward.5} parent=11 // pred_check_branch
          %224 = sbr.rel (%p222) target = $region24
        $region23: #{basic_block_forward.5} parent=11 // pred_region
          %s226 = ssub.s32 16, 16
          %227 = vsyncadd [#allocation9], %s226
          %s229 = sshll.u32 [#allocation10], 4
          %s230 = int_to_ptr.vmem [resolvable:$true] %s229
          %232 = dma.hbm_to_vmem [thread:$0]  %s4, 16, %s230, [#allocation9]
        $region24: #{basic_block_forward.5} parent=11 // pred_fallthru
          _
        // Predicated region
        $region25: #{basic_block_forward.5} parent=11 // pred_check
          %p233 = pneg %p159
        $region26: #{basic_block_forward.5} parent=11 // pred_check_branch
          %235 = sbr.rel (%p233) target = $region28
        $region27: #{basic_block_forward.5} parent=11 // pred_region
          %s237 = ssub.s32 16, 16
          %238 = vsyncadd [#allocation12], %s237
          %s240 = sshll.u32 [#allocation11], 4
          %s241 = int_to_ptr.vmem [resolvable:$true] %s240
          %243 = dma.hbm_to_vmem [thread:$0]  %s5, 16, %s241, [#allocation12]
        $region28: #{basic_block_forward.5} parent=11 // pred_fallthru
          _
      $region12: #{basic_block_forward.5} parent=5 // pred_fallthru
        _
      %p244 = scmp.lt.s32.totalorder %s23, 2
      // Predicated region
      $region29: #{basic_block_forward.5} parent=5 // pred_check
        %p245 = pneg %p244
      $region30: #{basic_block_forward.5} parent=5 // pred_check_branch
        %247 = sbr.rel (%p245) target = $region32
      $region31: #{basic_block_forward.5} parent=5 // pred_region
        // Predicated region
        $region33: #{basic_block_forward.5} parent=31 // pred_check
          %p248 = pneg %p43
        $region34: #{basic_block_forward.5} parent=31 // pred_check_branch
          %250 = sbr.rel (%p248) target = $region36
        $region35: #{basic_block_forward.5} parent=31 // pred_region
          %s251 = sand.u32 %s33, 1
          %s252 = scalar_lea.sflag [#allocation3], %s251
          %s253 = sand.u32 %s33, 1
          %s254 = smul.addr %s253, 64
          %s255 = scalar_lea.vmem [#allocation2], %s254
          %s257 = ssub.s32 1024, 1024
          %258 = vsyncadd %s252, %s257
          %s259 = smul.addr %s23, 8
          %s260 = smul.addr %s259, 128
          %s261 = scalar_lea.hbm %s0, %s260
          %s262 = sshll.u32 %s255, 4
          %s263 = int_to_ptr.vmem [resolvable:$true] %s262
          %268 = dma.hbm_to_vmem [thread:$0]  %s261, 1024, %s263, %s252, 128, 128, 8
        $region36: #{basic_block_forward.5} parent=31 // pred_fallthru
          _
        // Predicated region
        $region37: #{basic_block_forward.5} parent=31 // pred_check
          %p269 = pneg %p111
        $region38: #{basic_block_forward.5} parent=31 // pred_check_branch
          %271 = sbr.rel (%p269) target = $region40
        $region39: #{basic_block_forward.5} parent=31 // pred_region
          %s272 = sand.u32 %s23, 1
          %s273 = scalar_lea.sflag [#allocation9], %s272
          %s274 = sand.u32 %s101, 1
          %s275 = smul.addr %s274, 64
          %s276 = scalar_lea.vmem [#allocation8], %s275
          %s278 = ssub.s32 1024, 1024
          %279 = vsyncadd %s273, %s278
          %s280 = smul.addr %s23, 8
          %s281 = smul.addr %s280, 128
          %s282 = scalar_lea.hbm %s3, %s281
          %s283 = sshll.u32 %s276, 4
          %s284 = int_to_ptr.vmem [resolvable:$true] %s283
          %289 = dma.hbm_to_vmem [thread:$0]  %s282, 1024, %s284, %s273, 128, 128, 8
        $region40: #{basic_block_forward.5} parent=31 // pred_fallthru
          _
      $region32: #{basic_block_forward.5} parent=5 // pred_fallthru
        _
      %p290 = scmp.le.s32.totalorder 1, %s23
      %p291 = scmp.lt.s32.totalorder %s23, 3
      %p292 = pnand %p290, %p291
      %p293 = pneg %p292
      // Predicated region
      $region41: #{basic_block_forward.5} parent=5 // pred_check
        _
      $region42: #{basic_block_forward.5} parent=5 // pred_check_branch
        %295 = sbr.rel (%p292) target = $region44
      $region43: #{basic_block_forward.5} parent=5 // pred_region
        %s296 = ssub.s32 %s23, 1
        %s297 = sand.u32 %s36, 1
        %s298 = scalar_lea.sflag [#allocation3], %s297
        %s299 = sand.u32 %s36, 1
        %s300 = smul.addr %s299, 64
        %s301 = scalar_lea.vmem [#allocation2], %s300
        // Predicated region
        $region45: #{basic_block_forward.5} parent=43 // pred_check
          %p302 = pneg %p49
        $region46: #{basic_block_forward.5} parent=43 // pred_check_branch
          %304 = sbr.rel (%p302) target = $region48
        $region47: #{basic_block_forward.5} parent=43 // pred_region
          %305 = dma.done %s298, 1024
        $region48: #{basic_block_forward.5} parent=43 // pred_fallthru
          _
        // Predicated region
        $region49: #{basic_block_forward.5} parent=43 // pred_check
          %p306 = pneg %p70
        $region50: #{basic_block_forward.5} parent=43 // pred_check_branch
          %308 = sbr.rel (%p306) target = $region52
        $region51: #{basic_block_forward.5} parent=43 // pred_region
          %309 = dma.done [#allocation6], 16
        $region52: #{basic_block_forward.5} parent=43 // pred_fallthru
          _
        // Predicated region
        $region53: #{basic_block_forward.5} parent=43 // pred_check
          %p310 = pneg %p91
        $region54: #{basic_block_forward.5} parent=43 // pred_check_branch
          %312 = sbr.rel (%p310) target = $region56
        $region55: #{basic_block_forward.5} parent=43 // pred_region
          %313 = dma.done [#allocation6], 16
        $region56: #{basic_block_forward.5} parent=43 // pred_fallthru
          _
        %s314 = sand.u32 %s28, 1
        %s315 = scalar_lea.sflag [#allocation9], %s314
        %s316 = sand.u32 %s104, 1
        %s317 = smul.addr %s316, 64
        %s318 = scalar_lea.vmem [#allocation8], %s317
        // Predicated region
        $region57: #{basic_block_forward.5} parent=43 // pred_check
          %p319 = pneg %p117
        $region58: #{basic_block_forward.5} parent=43 // pred_check_branch
          %321 = sbr.rel (%p319) target = $region60
        $region59: #{basic_block_forward.5} parent=43 // pred_region
          %322 = dma.done %s315, 1024
        $region60: #{basic_block_forward.5} parent=43 // pred_fallthru
          _
        // Predicated region
        $region61: #{basic_block_forward.5} parent=43 // pred_check
          %p323 = pneg %p138
        $region62: #{basic_block_forward.5} parent=43 // pred_check_branch
          %325 = sbr.rel (%p323) target = $region64
        $region63: #{basic_block_forward.5} parent=43 // pred_region
          %326 = dma.done [#allocation9], 16
        $region64: #{basic_block_forward.5} parent=43 // pred_fallthru
          _
        // Predicated region
        $region65: #{basic_block_forward.5} parent=43 // pred_check
          %p327 = pneg %p159
        $region66: #{basic_block_forward.5} parent=43 // pred_check_branch
          %329 = sbr.rel (%p327) target = $region68
        $region67: #{basic_block_forward.5} parent=43 // pred_region
          %330 = dma.done [#allocation12], 16
        $region68: #{basic_block_forward.5} parent=43 // pred_fallthru
          _
        %s331 = sand.u32 %s36, 1
        %s332 = scalar_lea.sflag [#allocation3], %s331
        %s333 = sand.u32 %s36, 1
        %s334 = smul.addr %s333, 64
        %s335 = scalar_lea.vmem [#allocation2], %s334
        %p336 = pneg %p49
        %p337 = pneg %p46
        %p338 = pneg %p70
        %p339 = pneg %p67
        %p340 = pneg %p91
        %p341 = pneg %p88
        %s342 = sand.u32 %s28, 1
        %s343 = scalar_lea.sflag [#allocation9], %s342
        %s344 = sand.u32 %s104, 1
        %s345 = smul.addr %s344, 64
        %s346 = scalar_lea.vmem [#allocation8], %s345
        %p347 = pneg %p117
        %p348 = pneg %p114
        %p349 = pneg %p138
        %p350 = pneg %p135
        %p351 = pneg %p159
        %p352 = pneg %p156
        %p353 = pneg %p185
        %p354 = pneg %p182
        %s355 = sand.u32 %s172, 1
        %s356 = scalar_lea.sflag [#allocation4], %s355
        %s357 = sand.u32 %s172, 1
        %s358 = smul.addr %s357, 64
        %s359 = scalar_lea.vmem [#allocation13], %s358
        %v360 = vld [vmem:[%s301] sm:$0xff]
        %v361 = vld [vmem:[%s301 + $0x8] sm:$0xff]
        %v362 = vld [vmem:[%s301 + $0x10] sm:$0xff]
        %v363 = vld [vmem:[%s301 + $0x18] sm:$0xff]
        %v364 = vld [vmem:[%s301 + $0x20] sm:$0xff]
        %v365 = vld [vmem:[%s301 + $0x28] sm:$0xff]
        %v366 = vld [vmem:[%s301 + $0x30] sm:$0xff]
        %v367 = vld [vmem:[%s301 + $0x38] sm:$0xff]
        %v368 = vld [vmem:[#allocation5] sm:$0x1]
        %v370 = vlaneseq
        %v371 = vshrl.u32 %v370, 7
        %v372 = vsub.s32 0, %v371
        %v373 = vrot.slane %v368, %v372
        %v375 = vmul.f32 %v360, %v373
        %v376 = vmul.f32 %v361, %v373
        %v377 = vmul.f32 %v362, %v373
        %v378 = vmul.f32 %v363, %v373
        %v379 = vmul.f32 %v364, %v373
        %v380 = vmul.f32 %v365, %v373
        %v381 = vmul.f32 %v366, %v373
        %v382 = vmul.f32 %v367, %v373
        %v383 = vld [vmem:[#allocation7] sm:$0x1]
        %v385 = vlaneseq
        %v386 = vshrl.u32 %v385, 7
        %v387 = vsub.s32 0, %v386
        %v388 = vrot.slane %v383, %v387
        %v390 = vadd.f32 %v375, %v388
        %v391 = vadd.f32 %v376, %v388
        %v392 = vadd.f32 %v377, %v388
        %v393 = vadd.f32 %v378, %v388
        %v394 = vadd.f32 %v379, %v388
        %v395 = vadd.f32 %v380, %v388
        %v396 = vadd.f32 %v381, %v388
        %v397 = vadd.f32 %v382, %v388
        %v398 = vld [vmem:[%s318] sm:$0xff]
        %v399 = vld [vmem:[%s318 + $0x8] sm:$0xff]
        %v400 = vld [vmem:[%s318 + $0x10] sm:$0xff]
        %v401 = vld [vmem:[%s318 + $0x18] sm:$0xff]
        %v402 = vld [vmem:[%s318 + $0x20] sm:$0xff]
        %v403 = vld [vmem:[%s318 + $0x28] sm:$0xff]
        %v404 = vld [vmem:[%s318 + $0x30] sm:$0xff]
        %v405 = vld [vmem:[%s318 + $0x38] sm:$0xff]
        %v406 = vld [vmem:[#allocation10] sm:$0x1]
        %v408 = vlaneseq
        %v409 = vshrl.u32 %v408, 7
        %v410 = vsub.s32 0, %v409
        %v411 = vrot.slane %v406, %v410
        %v413 = vmul.f32 %v398, %v411
        %v414 = vmul.f32 %v399, %v411
        %v415 = vmul.f32 %v400, %v411
        %v416 = vmul.f32 %v401, %v411
        %v417 = vmul.f32 %v402, %v411
        %v418 = vmul.f32 %v403, %v411
        %v419 = vmul.f32 %v404, %v411
        %v420 = vmul.f32 %v405, %v411
        %v421 = vld [vmem:[#allocation11] sm:$0x1]
        %v423 = vlaneseq
        %v424 = vshrl.u32 %v423, 7
        %v425 = vsub.s32 0, %v424
        %v426 = vrot.slane %v421, %v425
        %v428 = vadd.f32 %v413, %v426
        %v429 = vadd.f32 %v414, %v426
        %v430 = vadd.f32 %v415, %v426
        %v431 = vadd.f32 %v416, %v426
        %v432 = vadd.f32 %v417, %v426
        %v433 = vadd.f32 %v418, %v426
        %v434 = vadd.f32 %v419, %v426
        %v435 = vadd.f32 %v420, %v426
        %v436 = vadd.f32 %v390, %v428
        %v437 = vadd.f32 %v391, %v429
        %v438 = vadd.f32 %v392, %v430
        %v439 = vadd.f32 %v393, %v431
        %v440 = vadd.f32 %v394, %v432
        %v441 = vadd.f32 %v395, %v433
        %v442 = vadd.f32 %v396, %v434
        %v443 = vadd.f32 %v397, %v435
        %v444 = vmax.f32 %v436, 0.0
        %v445 = vmax.f32 %v437, 0.0
        %v446 = vmax.f32 %v438, 0.0
        %v447 = vmax.f32 %v439, 0.0
        %v448 = vmax.f32 %v440, 0.0
        %v449 = vmax.f32 %v441, 0.0
        %v450 = vmax.f32 %v442, 0.0
        %v451 = vmax.f32 %v443, 0.0
        %452 = vst [vmem:[%s359] sm:$0xff] %v444
        %453 = vst [vmem:[%s359 + $0x8] sm:$0xff] %v445
        %454 = vst [vmem:[%s359 + $0x10] sm:$0xff] %v446
        %455 = vst [vmem:[%s359 + $0x18] sm:$0xff] %v447
        %456 = vst [vmem:[%s359 + $0x20] sm:$0xff] %v448
        %457 = vst [vmem:[%s359 + $0x28] sm:$0xff] %v449
        %458 = vst [vmem:[%s359 + $0x30] sm:$0xff] %v450
        %459 = vst [vmem:[%s359 + $0x38] sm:$0xff] %v451
        %s460 = sand.u32 %s172, 1
        %s461 = scalar_lea.sflag [#allocation4], %s460
        %s462 = sand.u32 %s172, 1
        %s463 = smul.addr %s462, 64
        %s464 = scalar_lea.vmem [#allocation13], %s463
        // Predicated region
        $region69: #{basic_block_forward.5} parent=43 // pred_check
          %p465 = pneg %p182
        $region70: #{basic_block_forward.5} parent=43 // pred_check_branch
          %467 = sbr.rel (%p465) target = $region72
        $region71: #{basic_block_forward.5} parent=43 // pred_region
          %s469 = ssub.s32 1024, 1024
          %470 = vsyncadd %s461, %s469
          %s471 = smul.addr %s28, 8
          %s472 = smul.addr %s471, 128
          %s473 = scalar_lea.hbm %s6, %s472
          %s474 = sshll.u32 %s464, 4
          %s475 = int_to_ptr.vmem [resolvable:$true] %s474
          %480 = dma.vmem_to_hbm [thread:$0]  %s475, 1024, %s473, %s461, 128, 128, 8
        $region72: #{basic_block_forward.5} parent=43 // pred_fallthru
          _
      $region44: #{basic_block_forward.5} parent=5 // pred_fallthru
        _
      %p481 = scmp.le.s32.totalorder 2, %s23
      // Predicated region
      $region73: #{basic_block_forward.5} parent=5 // pred_check
        %p482 = pneg %p481
      $region74: #{basic_block_forward.5} parent=5 // pred_check_branch
        %484 = sbr.rel (%p482) target = $region76
      $region75: #{basic_block_forward.5} parent=5 // pred_region
        %s485 = ssub.s32 %s23, 2
        // Predicated region
        $region77: #{basic_block_forward.5} parent=75 // pred_check
          %p486 = pneg %p188
        $region78: #{basic_block_forward.5} parent=75 // pred_check_branch
          %488 = sbr.rel (%p486) target = $region80
        $region79: #{basic_block_forward.5} parent=75 // pred_region
          %s489 = sand.u32 %s173, 1
          %s490 = scalar_lea.sflag [#allocation4], %s489
          %s491 = sand.u32 %s173, 1
          %s492 = smul.addr %s491, 64
          %s493 = scalar_lea.vmem [#allocation13], %s492
          %494 = dma.done %s490, 1024
        $region80: #{basic_block_forward.5} parent=75 // pred_fallthru
          _
      $region76: #{basic_block_forward.5} parent=5 // pred_fallthru
        _
    $region6: #{basic_block_forward.5} parent=1 // loop_footer
      %s27 = sadd.s32 1, %s23
    $region7: #{basic_block_forward.5} parent=1 // loop_footer_branch
      %22 = sbr.rel target = $region3
    $region8: #{basic_block_forward.5} parent=1 // loop_exit
      _
    %495 = vsyncpa [#allocation3], 1
    %s496 = scalar_lea.sflag [#allocation3], 1
    %497 = vsyncpa %s496, 1
    %498 = vsyncpa [#allocation6], 1
    %499 = vsyncpa [#allocation9], 1
    %s500 = scalar_lea.sflag [#allocation9], 1
    %501 = vsyncpa %s500, 1
    %502 = vsyncpa [#allocation12], 1
    %503 = vsyncpa [#allocation4], 1
    %s504 = scalar_lea.sflag [#allocation4], 1
    %505 = vsyncpa %s504, 1

// kernel: basic_block_forward.4
$region0: #{basic_block_forward.4}
  #allocation0 [shape = 'u32[]', space=smem, size = 0x4, offset = 0x4, fixed_abs, tag = 'smem constant byte address 0x4 - core index']
  #allocation1 [shape = 'u32[144,128]{1,0:T(1,128)}', space=vmem, size = 0x12000, scoped, tag = 'internal scratch']
  #allocation2 [shape = 'f32[82,128]{1,0:T(8,128)}', space=vmem, size = 0xb000, scoped, tag = 'scratch operand']
  %s0 = inlined_call_operand.hbm [shape: f32[2,64,128], index: 0, kind: input, shape index: {}]
  %s1 = inlined_call_operand.hbm [shape: f32[1,128], index: 1, kind: input, shape index: {}]
  %s2 = inlined_call_operand.hbm [shape: f32[1,128], index: 2, kind: input, shape index: {}]
  %s3 = inlined_call_operand.hbm [shape: bf16[9,128,128], index: 3, kind: input, shape index: {}]
  %s4 = inlined_call_operand.hbm [shape: f32[1,128], index: 4, kind: input, shape index: {}]
  %s5 = inlined_call_operand.hbm [shape: f32[64,1], index: 5, kind: input, shape index: {}]
  %s6 = inlined_call_operand.hbm [shape: f32[64,1], index: 6, kind: input, shape index: {}]
  %s7 = inlined_call_operand.hbm [shape: f32[2,64,128], index: 7, kind: output, shape index: {0}]
  %s8 = inlined_call_operand.hbm [shape: f32[2,2,128], index: 8, kind: output, shape index: {1}]
  %9 = xla_tuple %s7, %s8
  %s10 = sld [smem:[#allocation0]]
  $region97: #{basic_block_forward.4} parent=0
    _
  %s12 = ssub.s32 1, %s10
  %s13 = scalar_select 0, %s12, %s10
  $region1: #{basic_block_forward.4} parent=0
    #allocation3 [shape = 'u8[65536]{0}', space=vmem, size = 0x10000, scoped, tag = 'input window, operand 0']
    #allocation4 [shape = 's32[2]{0}', space=sflag, size = 0x8, scoped, tag = 'scoped memory for basic_block_forward.4']
    #allocation5 [shape = 's32[2]{0}', space=sflag, size = 0x8, scoped, tag = 'scoped memory for basic_block_forward.4']
    #allocation6 [shape = 'u8[512]{0}', space=vmem, size = 0x400, scoped, tag = 'input window, operand 1, single buffered']
    #allocation7 [shape = 's32[1]{0}', space=sflag, size = 0x4, scoped, tag = 'scoped memory for basic_block_forward.4']
    #allocation8 [shape = 'u8[512]{0}', space=vmem, size = 0x400, scoped, tag = 'input window, operand 2, single buffered']
    #allocation9 [shape = 'u8[294912]{0}', space=vmem, size = 0x48000, scoped, tag = 'input window, operand 3, single buffered']
    #allocation10 [shape = 's32[1]{0}', space=sflag, size = 0x4, scoped, tag = 'scoped memory for basic_block_forward.4']
    #allocation11 [shape = 'u8[512]{0}', space=vmem, size = 0x400, scoped, tag = 'input window, operand 4, single buffered']
    #allocation12 [shape = 'u8[32768]{0}', space=vmem, size = 0x8000, scoped, tag = 'input window, operand 5, single buffered']
    #allocation13 [shape = 's32[1]{0}', space=sflag, size = 0x4, scoped, tag = 'scoped memory for basic_block_forward.4']
    #allocation14 [shape = 'u8[32768]{0}', space=vmem, size = 0x8000, scoped, tag = 'input window, operand 6, single buffered']
    #allocation15 [shape = 'u8[65536]{0}', space=vmem, size = 0x10000, scoped, tag = 'output window, operand 0']
    #allocation16 [shape = 'u8[2048]{0}', space=vmem, size = 0x800, scoped, tag = 'output window, operand 1']
    #allocation17 [shape = 's32[2]{0}', space=sflag, size = 0x8, scoped, tag = 'scoped memory for basic_block_forward.4']
    %14 = vsyncpa [#allocation4], 0
    %s15 = scalar_lea.sflag [#allocation4], 1
    %16 = vsyncpa %s15, 0
    %17 = vsyncpa [#allocation7], 0
    %18 = vsyncpa [#allocation10], 0
    %19 = vsyncpa [#allocation13], 0
    %20 = vsyncpa [#allocation5], 0
    %s21 = scalar_lea.sflag [#allocation5], 1
    %22 = vsyncpa %s21, 0
    %23 = vsyncpa [#allocation17], 0
    %s24 = scalar_lea.sflag [#allocation17], 1
    %25 = vsyncpa %s24, 0
    loop: start=0, step=1, limit=4
    $region2: #{basic_block_forward.4} parent=1 // loop_pre_header
      _
    $region3: #{basic_block_forward.4} parent=1 // loop_header
      %s27 = sphi 0, %s31
      %p28 = scmp.ge.s32.totalorder %s27, 4
      %s37 = sphi 0, %s39
      %s40 = sphi 0, %s37
      %s41 = sphi 0, %s40
      %s57 = sphi 0, %s41
      %s61 = sphi 0, %s61
      %s63 = sphi 0, %s61
      %s64 = sphi 0, %s63
      %s78 = sphi 0, %s64
      %s82 = sphi 0, %s82
      %s84 = sphi 0, %s82
      %s85 = sphi 0, %s84
      %s99 = sphi 0, %s85
      %s103 = sphi 0, %s103
      %s105 = sphi 0, %s103
      %s106 = sphi 0, %s105
      %s120 = sphi 0, %s106
      %s124 = sphi 0, %s124
      %s126 = sphi 0, %s124
      %s127 = sphi 0, %s126
      %s141 = sphi 0, %s127
      %s145 = sphi 0, %s145
      %s147 = sphi 0, %s145
      %s148 = sphi 0, %s147
      %s162 = sphi 0, %s148
      %s166 = sphi 0, %s166
      %s168 = sphi 0, %s166
      %s169 = sphi 0, %s168
      %s183 = sphi 0, %s169
      %s189 = sphi 0, %s191
      %s192 = sphi 0, %s189
      %s193 = sphi 0, %s192
      %s209 = sphi 0, %s193
      %s215 = sphi 0, %s217
      %s218 = sphi 0, %s215
      %s219 = sphi 0, %s218
      %s235 = sphi 0, %s219
    $region4: #{basic_block_forward.4} parent=1 // loop_header_branch
      %30 = sbr.rel (%p28) target = $region8
    $region5: #{basic_block_forward.4} parent=1 // loop_body
      %s32 = ssub.s32 %s27, 1
      %s33 = ssub.s32 %s27, 2
      %s34 = sadd.s32 %s27, 1
      %s35 = ssub.s32 %s27, %s34
      %p36 = scmp.eq.s32.totalorder %s35, 0
      %s38 = sadd.s32 %s37, 1
      %s39 = scalar_select %p36, %s37, %s38
      %p42 = pneg %p36
      %p43 = scmp.eq.s32.totalorder %s27, 1
      %p44 = por %p42, %p43
      %p45 = scmp.ne.s32.totalorder %s37, %s40
      %p46 = scmp.eq.s32.totalorder %s27, 0
      %p47 = por %p45, %p46
      %p48 = scmp.ne.s32.totalorder %s37, %s40
      %p49 = scmp.eq.s32.totalorder %s32, 1
      %p50 = por %p48, %p49
      %p51 = scmp.ne.s32.totalorder %s40, %s41
      %p52 = scmp.eq.s32.totalorder %s32, 0
      %p53 = por %p51, %p52
      %p54 = scmp.ne.s32.totalorder %s40, %s41
      %p55 = scmp.eq.s32.totalorder %s33, 1
      %p56 = por %p54, %p55
      %p58 = scmp.ne.s32.totalorder %s41, %s57
      %p59 = scmp.eq.s32.totalorder %s33, 0
      %p60 = por %p58, %p59
      %s62 = sadd.s32 %s61, 1
      %p65 = scmp.eq.s32.totalorder %s27, 1
      %p66 = scmp.ne.s32.totalorder %s61, %s63
      %p67 = scmp.eq.s32.totalorder %s27, 0
      %p68 = por %p66, %p67
      %p69 = scmp.ne.s32.totalorder %s61, %s63
      %p70 = scmp.eq.s32.totalorder %s32, 1
      %p71 = por %p69, %p70
      %p72 = scmp.ne.s32.totalorder %s63, %s64
      %p73 = scmp.eq.s32.totalorder %s32, 0
      %p74 = por %p72, %p73
      %p75 = scmp.ne.s32.totalorder %s63, %s64
      %p76 = scmp.eq.s32.totalorder %s33, 1
      %p77 = por %p75, %p76
      %p79 = scmp.ne.s32.totalorder %s64, %s78
      %p80 = scmp.eq.s32.totalorder %s33, 0
      %p81 = por %p79, %p80
      %s83 = sadd.s32 %s82, 1
      %p86 = scmp.eq.s32.totalorder %s27, 1
      %p87 = scmp.ne.s32.totalorder %s82, %s84
      %p88 = scmp.eq.s32.totalorder %s27, 0
      %p89 = por %p87, %p88
      %p90 = scmp.ne.s32.totalorder %s82, %s84
      %p91 = scmp.eq.s32.totalorder %s32, 1
      %p92 = por %p90, %p91
      %p93 = scmp.ne.s32.totalorder %s84, %s85
      %p94 = scmp.eq.s32.totalorder %s32, 0
      %p95 = por %p93, %p94
      %p96 = scmp.ne.s32.totalorder %s84, %s85
      %p97 = scmp.eq.s32.totalorder %s33, 1
      %p98 = por %p96, %p97
      %p100 = scmp.ne.s32.totalorder %s85, %s99
      %p101 = scmp.eq.s32.totalorder %s33, 0
      %p102 = por %p100, %p101
      %s104 = sadd.s32 %s103, 1
      %p107 = scmp.eq.s32.totalorder %s27, 1
      %p108 = scmp.ne.s32.totalorder %s103, %s105
      %p109 = scmp.eq.s32.totalorder %s27, 0
      %p110 = por %p108, %p109
      %p111 = scmp.ne.s32.totalorder %s103, %s105
      %p112 = scmp.eq.s32.totalorder %s32, 1
      %p113 = por %p111, %p112
      %p114 = scmp.ne.s32.totalorder %s105, %s106
      %p115 = scmp.eq.s32.totalorder %s32, 0
      %p116 = por %p114, %p115
      %p117 = scmp.ne.s32.totalorder %s105, %s106
      %p118 = scmp.eq.s32.totalorder %s33, 1
      %p119 = por %p117, %p118
      %p121 = scmp.ne.s32.totalorder %s106, %s120
      %p122 = scmp.eq.s32.totalorder %s33, 0
      %p123 = por %p121, %p122
      %s125 = sadd.s32 %s124, 1
      %p128 = scmp.eq.s32.totalorder %s27, 1
      %p129 = scmp.ne.s32.totalorder %s124, %s126
      %p130 = scmp.eq.s32.totalorder %s27, 0
      %p131 = por %p129, %p130
      %p132 = scmp.ne.s32.totalorder %s124, %s126
      %p133 = scmp.eq.s32.totalorder %s32, 1
      %p134 = por %p132, %p133
      %p135 = scmp.ne.s32.totalorder %s126, %s127
      %p136 = scmp.eq.s32.totalorder %s32, 0
      %p137 = por %p135, %p136
      %p138 = scmp.ne.s32.totalorder %s126, %s127
      %p139 = scmp.eq.s32.totalorder %s33, 1
      %p140 = por %p138, %p139
      %p142 = scmp.ne.s32.totalorder %s127, %s141
      %p143 = scmp.eq.s32.totalorder %s33, 0
      %p144 = por %p142, %p143
      %s146 = sadd.s32 %s145, 1
      %p149 = scmp.eq.s32.totalorder %s27, 1
      %p150 = scmp.ne.s32.totalorder %s145, %s147
      %p151 = scmp.eq.s32.totalorder %s27, 0
      %p152 = por %p150, %p151
      %p153 = scmp.ne.s32.totalorder %s145, %s147
      %p154 = scmp.eq.s32.totalorder %s32, 1
      %p155 = por %p153, %p154
      %p156 = scmp.ne.s32.totalorder %s147, %s148
      %p157 = scmp.eq.s32.totalorder %s32, 0
      %p158 = por %p156, %p157
      %p159 = scmp.ne.s32.totalorder %s147, %s148
      %p160 = scmp.eq.s32.totalorder %s33, 1
      %p161 = por %p159, %p160
      %p163 = scmp.ne.s32.totalorder %s148, %s162
      %p164 = scmp.eq.s32.totalorder %s33, 0
      %p165 = por %p163, %p164
      %s167 = sadd.s32 %s166, 1
      %p170 = scmp.eq.s32.totalorder %s27, 1
      %p171 = scmp.ne.s32.totalorder %s166, %s168
      %p172 = scmp.eq.s32.totalorder %s27, 0
      %p173 = por %p171, %p172
      %p174 = scmp.ne.s32.totalorder %s166, %s168
      %p175 = scmp.eq.s32.totalorder %s32, 1
      %p176 = por %p174, %p175
      %p177 = scmp.ne.s32.totalorder %s168, %s169
      %p178 = scmp.eq.s32.totalorder %s32, 0
      %p179 = por %p177, %p178
      %p180 = scmp.ne.s32.totalorder %s168, %s169
      %p181 = scmp.eq.s32.totalorder %s33, 1
      %p182 = por %p180, %p181
      %p184 = scmp.ne.s32.totalorder %s169, %s183
      %p185 = scmp.eq.s32.totalorder %s33, 0
      %p186 = por %p184, %p185
      %s187 = ssub.s32 %s27, %s34
      %p188 = scmp.eq.s32.totalorder %s187, 0
      %s190 = sadd.s32 %s189, 1
      %s191 = scalar_select %p188, %s189, %s190
      %p194 = pneg %p188
      %p195 = scmp.eq.s32.totalorder %s27, 1
      %p196 = por %p194, %p195
      %p197 = scmp.ne.s32.totalorder %s189, %s192
      %p198 = scmp.eq.s32.totalorder %s27, 0
      %p199 = por %p197, %p198
      %p200 = scmp.ne.s32.totalorder %s189, %s192
      %p201 = scmp.eq.s32.totalorder %s32, 1
      %p202 = por %p200, %p201
      %p203 = scmp.ne.s32.totalorder %s192, %s193
      %p204 = scmp.eq.s32.totalorder %s32, 0
      %p205 = por %p203, %p204
      %p206 = scmp.ne.s32.totalorder %s192, %s193
      %p207 = scmp.eq.s32.totalorder %s33, 1
      %p208 = por %p206, %p207
      %p210 = scmp.ne.s32.totalorder %s193, %s209
      %p211 = scmp.eq.s32.totalorder %s33, 0
      %p212 = por %p210, %p211
      %s213 = ssub.s32 %s27, %s34
      %p214 = scmp.eq.s32.totalorder %s213, 0
      %s216 = sadd.s32 %s215, 1
      %s217 = scalar_select %p214, %s215, %s216
      %p220 = pneg %p214
      %p221 = scmp.eq.s32.totalorder %s27, 1
      %p222 = por %p220, %p221
      %p223 = scmp.ne.s32.totalorder %s215, %s218
      %p224 = scmp.eq.s32.totalorder %s27, 0
      %p225 = por %p223, %p224
      %p226 = scmp.ne.s32.totalorder %s215, %s218
      %p227 = scmp.eq.s32.totalorder %s32, 1
      %p228 = por %p226, %p227
      %p229 = scmp.ne.s32.totalorder %s218, %s219
      %p230 = scmp.eq.s32.totalorder %s32, 0
      %p231 = por %p229, %p230
      %p232 = scmp.ne.s32.totalorder %s218, %s219
      %p233 = scmp.eq.s32.totalorder %s33, 1
      %p234 = por %p232, %p233
      %p236 = scmp.ne.s32.totalorder %s219, %s235
      %p237 = scmp.eq.s32.totalorder %s33, 0
      %p238 = por %p236, %p237
      %p239 = scmp.le.s32.totalorder 1, %s27
      %p240 = scmp.lt.s32.totalorder %s27, 3
      %p241 = pnand %p239, %p240
      %p242 = pneg %p241
      // Predicated region
      $region9: #{basic_block_forward.4} parent=5 // pred_check
        _
      $region10: #{basic_block_forward.4} parent=5 // pred_check_branch
        %244 = sbr.rel (%p241) target = $region12
      $region11: #{basic_block_forward.4} parent=5 // pred_region
        %s245 = ssub.s32 %s27, 1
        // Predicated region
        $region13: #{basic_block_forward.4} parent=11 // pred_check
          %p246 = pneg %p74
        $region14: #{basic_block_forward.4} parent=11 // pred_check_branch
          %248 = sbr.rel (%p246) target = $region16
        $region15: #{basic_block_forward.4} parent=11 // pred_region
          %s250 = ssub.s32 16, 16
          %251 = vsyncadd [#allocation7], %s250
          %s253 = sshll.u32 [#allocation6], 4
          %s254 = int_to_ptr.vmem [resolvable:$true] %s253
          %256 = dma.hbm_to_vmem [thread:$0]  %s1, 16, %s254, [#allocation7]
        $region16: #{basic_block_forward.4} parent=11 // pred_fallthru
          _
        // Predicated region
        $region17: #{basic_block_forward.4} parent=11 // pred_check
          %p257 = pneg %p95
        $region18: #{basic_block_forward.4} parent=11 // pred_check_branch
          %259 = sbr.rel (%p257) target = $region20
        $region19: #{basic_block_forward.4} parent=11 // pred_region
          %s261 = ssub.s32 16, 16
          %262 = vsyncadd [#allocation7], %s261
          %s264 = sshll.u32 [#allocation8], 4
          %s265 = int_to_ptr.vmem [resolvable:$true] %s264
          %267 = dma.hbm_to_vmem [thread:$0]  %s2, 16, %s265, [#allocation7]
        $region20: #{basic_block_forward.4} parent=11 // pred_fallthru
          _
        // Predicated region
        $region21: #{basic_block_forward.4} parent=11 // pred_check
          %p268 = pneg %p116
        $region22: #{basic_block_forward.4} parent=11 // pred_check_branch
          %270 = sbr.rel (%p268) target = $region24
        $region23: #{basic_block_forward.4} parent=11 // pred_region
          %s272 = ssub.s32 9216, 9216
          %273 = vsyncadd [#allocation10], %s272
          %s274 = sshll.u32 [#allocation9], 4
          %s275 = int_to_ptr.vmem [resolvable:$true] %s274
          %280 = dma.hbm_to_vmem [thread:$0]  %s3, 9216, %s275, [#allocation10], 64, 64, 4
        $region24: #{basic_block_forward.4} parent=11 // pred_fallthru
          _
        // Predicated region
        $region25: #{basic_block_forward.4} parent=11 // pred_check
          %p281 = pneg %p137
        $region26: #{basic_block_forward.4} parent=11 // pred_check_branch
          %283 = sbr.rel (%p281) target = $region28
        $region27: #{basic_block_forward.4} parent=11 // pred_region
          %s285 = ssub.s32 16, 16
          %286 = vsyncadd [#allocation10], %s285
          %s288 = sshll.u32 [#allocation11], 4
          %s289 = int_to_ptr.vmem [resolvable:$true] %s288
          %291 = dma.hbm_to_vmem [thread:$0]  %s4, 16, %s289, [#allocation10]
        $region28: #{basic_block_forward.4} parent=11 // pred_fallthru
          _
        // Predicated region
        $region29: #{basic_block_forward.4} parent=11 // pred_check
          %p292 = pneg %p158
        $region30: #{basic_block_forward.4} parent=11 // pred_check_branch
          %294 = sbr.rel (%p292) target = $region32
        $region31: #{basic_block_forward.4} parent=11 // pred_region
          %s296 = ssub.s32 1024, 1024
          %297 = vsyncadd [#allocation13], %s296
          %s298 = sshll.u32 [#allocation12], 4
          %s299 = int_to_ptr.vmem [resolvable:$true] %s298
          %304 = dma.hbm_to_vmem [thread:$0]  %s5, 1024, %s299, [#allocation13], 128, 128, 8
        $region32: #{basic_block_forward.4} parent=11 // pred_fallthru
          _
        // Predicated region
        $region33: #{basic_block_forward.4} parent=11 // pred_check
          %p305 = pneg %p179
        $region34: #{basic_block_forward.4} parent=11 // pred_check_branch
          %307 = sbr.rel (%p305) target = $region36
        $region35: #{basic_block_forward.4} parent=11 // pred_region
          %s309 = ssub.s32 1024, 1024
          %310 = vsyncadd [#allocation13], %s309
          %s311 = sshll.u32 [#allocation14], 4
          %s312 = int_to_ptr.vmem [resolvable:$true] %s311
          %317 = dma.hbm_to_vmem [thread:$0]  %s6, 1024, %s312, [#allocation13], 128, 128, 8
        $region36: #{basic_block_forward.4} parent=11 // pred_fallthru
          _
      $region12: #{basic_block_forward.4} parent=5 // pred_fallthru
        _
      %p318 = scmp.lt.s32.totalorder %s27, 2
      // Predicated region
      $region37: #{basic_block_forward.4} parent=5 // pred_check
        %p319 = pneg %p318
      $region38: #{basic_block_forward.4} parent=5 // pred_check_branch
        %321 = sbr.rel (%p319) target = $region40
      $region39: #{basic_block_forward.4} parent=5 // pred_region
        // Predicated region
        $region41: #{basic_block_forward.4} parent=39 // pred_check
          %p322 = pneg %p47
        $region42: #{basic_block_forward.4} parent=39 // pred_check_branch
          %324 = sbr.rel (%p322) target = $region44
        $region43: #{basic_block_forward.4} parent=39 // pred_region
          %s325 = sand.u32 %s37, 1
          %s326 = scalar_lea.sflag [#allocation4], %s325
          %s327 = sand.u32 %s37, 1
          %s328 = smul.addr %s327, 64
          %s329 = scalar_lea.vmem [#allocation3], %s328
          %s331 = ssub.s32 1024, 1024
          %332 = vsyncadd %s326, %s331
          %s333 = smul.addr %s27, 8
          %s334 = smul.addr %s333, 128
          %s335 = scalar_lea.hbm %s0, %s334
          %s336 = sshll.u32 %s329, 4
          %s337 = int_to_ptr.vmem [resolvable:$true] %s336
          %342 = dma.hbm_to_vmem [thread:$0]  %s335, 1024, %s337, %s326, 128, 128, 8
        $region44: #{basic_block_forward.4} parent=39 // pred_fallthru
          _
      $region40: #{basic_block_forward.4} parent=5 // pred_fallthru
        _
      %p343 = scmp.le.s32.totalorder 1, %s27
      %p344 = scmp.lt.s32.totalorder %s27, 3
      %p345 = pnand %p343, %p344
      %p346 = pneg %p345
      // Predicated region
      $region45: #{basic_block_forward.4} parent=5 // pred_check
        _
      $region46: #{basic_block_forward.4} parent=5 // pred_check_branch
        %348 = sbr.rel (%p345) target = $region48
      $region47: #{basic_block_forward.4} parent=5 // pred_region
        %s349 = ssub.s32 %s27, 1
        %s350 = sand.u32 %s40, 1
        %s351 = scalar_lea.sflag [#allocation4], %s350
        %s352 = sand.u32 %s40, 1
        %s353 = smul.addr %s352, 64
        %s354 = scalar_lea.vmem [#allocation3], %s353
        // Predicated region
        $region49: #{basic_block_forward.4} parent=47 // pred_check
          %p355 = pneg %p53
        $region50: #{basic_block_forward.4} parent=47 // pred_check_branch
          %357 = sbr.rel (%p355) target = $region52
        $region51: #{basic_block_forward.4} parent=47 // pred_region
          %358 = dma.done %s351, 1024
        $region52: #{basic_block_forward.4} parent=47 // pred_fallthru
          _
        // Predicated region
        $region53: #{basic_block_forward.4} parent=47 // pred_check
          %p359 = pneg %p74
        $region54: #{basic_block_forward.4} parent=47 // pred_check_branch
          %361 = sbr.rel (%p359) target = $region56
        $region55: #{basic_block_forward.4} parent=47 // pred_region
          %362 = dma.done [#allocation7], 16
        $region56: #{basic_block_forward.4} parent=47 // pred_fallthru
          _
        // Predicated region
        $region57: #{basic_block_forward.4} parent=47 // pred_check
          %p363 = pneg %p95
        $region58: #{basic_block_forward.4} parent=47 // pred_check_branch
          %365 = sbr.rel (%p363) target = $region60
        $region59: #{basic_block_forward.4} parent=47 // pred_region
          %366 = dma.done [#allocation7], 16
        $region60: #{basic_block_forward.4} parent=47 // pred_fallthru
          _
        // Predicated region
        $region61: #{basic_block_forward.4} parent=47 // pred_check
          %p367 = pneg %p116
        $region62: #{basic_block_forward.4} parent=47 // pred_check_branch
          %369 = sbr.rel (%p367) target = $region64
        $region63: #{basic_block_forward.4} parent=47 // pred_region
          %370 = dma.done [#allocation10], 9216
        $region64: #{basic_block_forward.4} parent=47 // pred_fallthru
          _
        // Predicated region
        $region65: #{basic_block_forward.4} parent=47 // pred_check
          %p371 = pneg %p137
        $region66: #{basic_block_forward.4} parent=47 // pred_check_branch
          %373 = sbr.rel (%p371) target = $region68
        $region67: #{basic_block_forward.4} parent=47 // pred_region
          %374 = dma.done [#allocation10], 16
        $region68: #{basic_block_forward.4} parent=47 // pred_fallthru
          _
        // Predicated region
        $region69: #{basic_block_forward.4} parent=47 // pred_check
          %p375 = pneg %p158
        $region70: #{basic_block_forward.4} parent=47 // pred_check_branch
          %377 = sbr.rel (%p375) target = $region72
        $region71: #{basic_block_forward.4} parent=47 // pred_region
          %378 = dma.done [#allocation13], 1024
        $region72: #{basic_block_forward.4} parent=47 // pred_fallthru
          _
        // Predicated region
        $region73: #{basic_block_forward.4} parent=47 // pred_check
          %p379 = pneg %p179
        $region74: #{basic_block_forward.4} parent=47 // pred_check_branch
          %381 = sbr.rel (%p379) target = $region76
        $region75: #{basic_block_forward.4} parent=47 // pred_region
          %382 = dma.done [#allocation13], 1024
        $region76: #{basic_block_forward.4} parent=47 // pred_fallthru
          _
        %s383 = sand.u32 %s40, 1
        %s384 = scalar_lea.sflag [#allocation4], %s383
        %s385 = sand.u32 %s40, 1
        %s386 = smul.addr %s385, 64
        %s387 = scalar_lea.vmem [#allocation3], %s386
        %p388 = pneg %p53
        %p389 = pneg %p50
        %p390 = pneg %p74
        %p391 = pneg %p71
        %p392 = pneg %p95
        %p393 = pneg %p92
        %p394 = pneg %p116
        %p395 = pneg %p113
        %p396 = pneg %p137
        %p397 = pneg %p134
        %p398 = pneg %p158
        %p399 = pneg %p155
        %p400 = pneg %p179
        %p401 = pneg %p176
        %p402 = pneg %p205
        %p403 = pneg %p202
        %s404 = sand.u32 %s192, 1
        %s405 = scalar_lea.sflag [#allocation5], %s404
        %s406 = sand.u32 %s192, 1
        %s407 = smul.addr %s406, 64
        %s408 = scalar_lea.vmem [#allocation15], %s407
        %p409 = pneg %p231
        %p410 = pneg %p228
        %s411 = sand.u32 %s218, 1
        %s412 = scalar_lea.sflag [#allocation17], %s411
        %s413 = sand.u32 %s218, 1
        %s414 = smul.addr %s413, 2
        %s415 = scalar_lea.vmem [#allocation16], %s414
        %v417 = vld [vmem:[%s354] sm:$0xff]
        %v418 = vld [vmem:[%s354 + $0x8] sm:$0xff]
        %v419 = vld [vmem:[%s354 + $0x10] sm:$0xff]
        %v420 = vld [vmem:[%s354 + $0x18] sm:$0xff]
        %v421 = vld [vmem:[%s354 + $0x20] sm:$0xff]
        %v422 = vld [vmem:[%s354 + $0x28] sm:$0xff]
        %v423 = vld [vmem:[%s354 + $0x30] sm:$0xff]
        %v424 = vld [vmem:[%s354 + $0x38] sm:$0xff]
        %v425 = vld [vmem:[#allocation6] sm:$0x1]
        %v427 = vlaneseq
        %v428 = vshrl.u32 %v427, 7
        %v429 = vsub.s32 0, %v428
        %v430 = vrot.slane %v425, %v429
        %v432 = vmul.f32 %v417, %v430
        %v433 = vmul.f32 %v418, %v430
        %v434 = vmul.f32 %v419, %v430
        %v435 = vmul.f32 %v420, %v430
        %v436 = vmul.f32 %v421, %v430
        %v437 = vmul.f32 %v422, %v430
        %v438 = vmul.f32 %v423, %v430
        %v439 = vmul.f32 %v424, %v430
        %v440 = vld [vmem:[#allocation8] sm:$0x1]
        %v442 = vlaneseq
        %v443 = vshrl.u32 %v442, 7
        %v444 = vsub.s32 0, %v443
        %v445 = vrot.slane %v440, %v444
        %v447 = vadd.f32 %v432, %v445
        %v448 = vadd.f32 %v433, %v445
        %v449 = vadd.f32 %v434, %v445
        %v450 = vadd.f32 %v435, %v445
        %v451 = vadd.f32 %v436, %v445
        %v452 = vadd.f32 %v437, %v445
        %v453 = vadd.f32 %v438, %v445
        %v454 = vadd.f32 %v439, %v445
        %v455 = vmax.f32 %v447, 0.0
        %v456 = vmax.f32 %v448, 0.0
        %v457 = vmax.f32 %v449, 0.0
        %v458 = vmax.f32 %v450, 0.0
        %v459 = vmax.f32 %v451, 0.0
        %v460 = vmax.f32 %v452, 0.0
        %v461 = vmax.f32 %v453, 0.0
        %v462 = vmax.f32 %v454, 0.0
        %463 = vst [vmem:[#allocation2] sm:$0xff] 0.0
        %464 = vst [vmem:[#allocation2 + $0x8] sm:$0x1] 0.0
        %465 = vst [vmem:[#allocation2 + $0x49] sm:$0xff] 0.0
        %466 = vst [vmem:[#allocation2 + $0x51] sm:$0x1] 0.0
        %467 = vst [vmem:[#allocation2 + $0x9] sm:$0xff] %v455
        %468 = vst [vmem:[#allocation2 + $0x11] sm:$0xff] %v456
        %469 = vst [vmem:[#allocation2 + $0x19] sm:$0xff] %v457
        %470 = vst [vmem:[#allocation2 + $0x21] sm:$0xff] %v458
        %471 = vst [vmem:[#allocation2 + $0x29] sm:$0xff] %v459
        %472 = vst [vmem:[#allocation2 + $0x31] sm:$0xff] %v460
        %473 = vst [vmem:[#allocation2 + $0x39] sm:$0xff] %v461
        %474 = vst [vmem:[#allocation2 + $0x41] sm:$0xff] %v462
        %v475 = vld [vmem:[#allocation2] sm:$0xff]
        %v476 = vld [vmem:[#allocation2 + $0x8] sm:$0xff]
        %v477 = vld [vmem:[#allocation2 + $0x10] sm:$0xff]
        %v478 = vld [vmem:[#allocation2 + $0x18] sm:$0xff]
        %v479 = vld [vmem:[#allocation2 + $0x20] sm:$0xff]
        %v480 = vld [vmem:[#allocation2 + $0x28] sm:$0xff]
        %v481 = vld [vmem:[#allocation2 + $0x30] sm:$0xff]
        %v482 = vld [vmem:[#allocation2 + $0x38] sm:$0xff]
        %v483 = vld [vmem:[#allocation12] sm:$0xff]
        %v484 = vld [vmem:[#allocation12 + $0x8] sm:$0xff]
        %v485 = vld [vmem:[#allocation12 + $0x10] sm:$0xff]
        %v486 = vld [vmem:[#allocation12 + $0x18] sm:$0xff]
        %v487 = vld [vmem:[#allocation12 + $0x20] sm:$0xff]
        %v488 = vld [vmem:[#allocation12 + $0x28] sm:$0xff]
        %v489 = vld [vmem:[#allocation12 + $0x30] sm:$0xff]
        %v490 = vld [vmem:[#allocation12 + $0x38] sm:$0xff]
        %492 = vset.pattern.permute.xlu0 0
        %493 = vperm.xlu0 %492, %v483
        %v494 = vpop.permute.xlu0 %493
        %497 = vset.pattern.permute.xlu0 0
        %498 = vperm.xlu0 %497, %v484
        %v499 = vpop.permute.xlu0 %498
        %502 = vset.pattern.permute.xlu0 0
        %503 = vperm.xlu0 %502, %v485
        %v504 = vpop.permute.xlu0 %503
        %507 = vset.pattern.permute.xlu0 0
        %508 = vperm.xlu0 %507, %v486
        %v509 = vpop.permute.xlu0 %508
        %512 = vset.pattern.permute.xlu0 0
        %513 = vperm.xlu0 %512, %v487
        %v514 = vpop.permute.xlu0 %513
        %517 = vset.pattern.permute.xlu0 0
        %518 = vperm.xlu0 %517, %v488
        %v519 = vpop.permute.xlu0 %518
        %522 = vset.pattern.permute.xlu0 0
        %523 = vperm.xlu0 %522, %v489
        %v524 = vpop.permute.xlu0 %523
        %527 = vset.pattern.permute.xlu0 0
        %528 = vperm.xlu0 %527, %v490
        %v529 = vpop.permute.xlu0 %528
        %v531 = vmul.f32 %v475, %v494
        %v532 = vmul.f32 %v476, %v499
        %v533 = vmul.f32 %v477, %v504
        %v534 = vmul.f32 %v478, %v509
        %v535 = vmul.f32 %v479, %v514
        %v536 = vmul.f32 %v480, %v519
        %v537 = vmul.f32 %v481, %v524
        %v538 = vmul.f32 %v482, %v529
        %v539 = vpack.c.bf16 %v532, %v531
        %v540 = vpack.c.bf16 %v534, %v533
        %v541 = vpack.c.bf16 %v536, %v535
        %v542 = vpack.c.bf16 %v538, %v537
        %v543 = vld [vmem:[#allocation9] sm:$0xf]
        %v544 = vld [vmem:[#allocation9 + $0x4] sm:$0xf]
        %v545 = vld [vmem:[#allocation9 + $0x8] sm:$0xf]
        %v546 = vld [vmem:[#allocation9 + $0xc] sm:$0xf]
        %v547 = vld [vmem:[#allocation9 + $0x10] sm:$0xf]
        %v548 = vld [vmem:[#allocation9 + $0x14] sm:$0xf]
        %v549 = vld [vmem:[#allocation9 + $0x18] sm:$0xf]
        %v550 = vld [vmem:[#allocation9 + $0x1c] sm:$0xf]
        %v551 = vld [vmem:[#allocation9 + $0x20] sm:$0xf]
        %v552 = vld [vmem:[#allocation9 + $0x24] sm:$0xf]
        %v553 = vld [vmem:[#allocation9 + $0x28] sm:$0xf]
        %v554 = vld [vmem:[#allocation9 + $0x2c] sm:$0xf]
        %v555 = vld [vmem:[#allocation9 + $0x30] sm:$0xf]
        %v556 = vld [vmem:[#allocation9 + $0x34] sm:$0xf]
        %v557 = vld [vmem:[#allocation9 + $0x38] sm:$0xf]
        %v558 = vld [vmem:[#allocation9 + $0x3c] sm:$0xf]
        %v559 = vld [vmem:[#allocation2 + $0x1] sm:$0xff]
        %v560 = vld [vmem:[#allocation2 + $0x9] sm:$0xff]
        %v561 = vld [vmem:[#allocation2 + $0x11] sm:$0xff]
        %v562 = vld [vmem:[#allocation2 + $0x19] sm:$0xff]
        %v563 = vld [vmem:[#allocation2 + $0x21] sm:$0xff]
        %v564 = vld [vmem:[#allocation2 + $0x29] sm:$0xff]
        %v565 = vld [vmem:[#allocation2 + $0x31] sm:$0xff]
        %v566 = vld [vmem:[#allocation2 + $0x39] sm:$0xff]
        %v567 = vpack.c.bf16 %v560, %v559
        %v568 = vpack.c.bf16 %v562, %v561
        %v569 = vpack.c.bf16 %v564, %v563
        %v570 = vpack.c.bf16 %v566, %v565
        %s571 = scalar_lea.vmem [#allocation9], 64
        %v572 = vld [vmem:[%s571] sm:$0xf]
        %v573 = vld [vmem:[%s571 + $0x4] sm:$0xf]
        %v574 = vld [vmem:[%s571 + $0x8] sm:$0xf]
        %v575 = vld [vmem:[%s571 + $0xc] sm:$0xf]
        %v576 = vld [vmem:[%s571 + $0x10] sm:$0xf]
        %v577 = vld [vmem:[%s571 + $0x14] sm:$0xf]
        %v578 = vld [vmem:[%s571 + $0x18] sm:$0xf]
        %v579 = vld [vmem:[%s571 + $0x1c] sm:$0xf]
        %v580 = vld [vmem:[%s571 + $0x20] sm:$0xf]
        %v581 = vld [vmem:[%s571 + $0x24] sm:$0xf]
        %v582 = vld [vmem:[%s571 + $0x28] sm:$0xf]
        %v583 = vld [vmem:[%s571 + $0x2c] sm:$0xf]
        %v584 = vld [vmem:[%s571 + $0x30] sm:$0xf]
        %v585 = vld [vmem:[%s571 + $0x34] sm:$0xf]
        %v586 = vld [vmem:[%s571 + $0x38] sm:$0xf]
        %v587 = vld [vmem:[%s571 + $0x3c] sm:$0xf]
        %v604 = vunpack.c.l.b16 %v572
        %v605 = vunpack.c.l.b16 %v573
        %v606 = vunpack.c.l.b16 %v574
        %v607 = vunpack.c.l.b16 %v575
        %v608 = vunpack.c.l.b16 %v576
        %v609 = vunpack.c.l.b16 %v577
        %v610 = vunpack.c.l.b16 %v578
        %v611 = vunpack.c.l.b16 %v579
        %v612 = vunpack.c.l.b16 %v580
        %v613 = vunpack.c.l.b16 %v581
        %v614 = vunpack.c.l.b16 %v582
        %v615 = vunpack.c.l.b16 %v583
        %v616 = vunpack.c.l.b16 %v584
        %v617 = vunpack.c.l.b16 %v585
        %v618 = vunpack.c.l.b16 %v586
        %v619 = vunpack.c.l.b16 %v587
        %v620 = vpack.c.b16 %v605, %v604
        %v621 = vpack.c.b16 %v607, %v606
        %v622 = vpack.c.b16 %v609, %v608
        %v623 = vpack.c.b16 %v611, %v610
        %v624 = vpack.c.b16 %v613, %v612
        %v625 = vpack.c.b16 %v615, %v614
        %v626 = vpack.c.b16 %v617, %v616
        %v627 = vpack.c.b16 %v619, %v618
        %636 = vmatprep.subr.bf16.mxu0 0
        %637 = vmatpush1.bf16.msra.mxu0 %v620
        %638 = vmatprep.subr.bf16.mxu0 0
        %639 = vmatpush1.bf16.msra.mxu0 %v621
        %640 = vmatprep.subr.bf16.mxu0 0
        %641 = vmatpush1.bf16.msra.mxu0 %v622
        %642 = vmatprep.subr.bf16.mxu0 0
        %643 = vmatpush1.bf16.msra.mxu0 %v623
        %644 = vmatprep.subr.bf16.mxu0 0
        %645 = vmatpush1.bf16.msra.mxu0 %v624
        %646 = vmatprep.subr.bf16.mxu0 0
        %647 = vmatpush1.bf16.msra.mxu0 %v625
        %648 = vmatprep.subr.bf16.mxu0 0
        %649 = vmatpush1.bf16.msra.mxu0 %v626
        %650 = vmatprep.subr.bf16.mxu0 0
        %651 = vmatpush1.bf16.msra.mxu0 %v627
        %652 = vmatprep.subr.bf16.mxu0 0
        %653 = vmatpush1.bf16.msra.mxu0 0
        %654 = vmatprep.subr.bf16.mxu0 0
        %655 = vmatpush1.bf16.msra.mxu0 0
        %656 = vmatprep.subr.bf16.mxu0 0
        %657 = vmatpush1.bf16.msra.mxu0 0
        %658 = vmatprep.subr.bf16.mxu0 0
        %659 = vmatpush1.bf16.msra.mxu0 0
        %660 = vmatprep.subr.bf16.mxu0 0
        %661 = vmatpush1.bf16.msra.mxu0 0
        %662 = vmatprep.subr.bf16.mxu0 0
        %663 = vmatpush1.bf16.msra.mxu0 0
        %664 = vmatprep.subr.bf16.mxu0 0
        %665 = vmatpush1.bf16.msra.mxu0 0
        %666 = vmatprep.subr.bf16.mxu0 0
        %667 = vmatpush1.bf16.msra.mxu0 0
        %668 = vmatprep.mubr.bf16.mxu0 0
        %669 = vmatmul.mubr.bf16.gmra.mrb[0].mxu0 %v567
        %v670 = vpop.f32.mrb[0].mxu0
        %v671 = vadd.f32 0.0, %v670
        %v672 = vpop.f32.mrb[0].mxu0
        %v673 = vpop.f32.mrb[0].mxu0
        %v674 = vadd.f32 0.0, %v673
        %v675 = vpop.f32.mrb[0].mxu0
        %676 = vmatprep.mubr.bf16.mxu0 0
        %677 = vmatmul.mubr.bf16.gmra.mrb[0].mxu0 %v568
        %v678 = vpop.f32.mrb[0].mxu0
        %v679 = vadd.f32 0.0, %v678
        %v680 = vpop.f32.mrb[0].mxu0
        %v681 = vpop.f32.mrb[0].mxu0
        %v682 = vadd.f32 0.0, %v681
        %v683 = vpop.f32.mrb[0].mxu0
        %684 = vmatprep.mubr.bf16.mxu0 0
        %685 = vmatmul.mubr.bf16.gmra.mrb[0].mxu0 %v569
        %v686 = vpop.f32.mrb[0].mxu0
        %v687 = vadd.f32 0.0, %v686
        %v688 = vpop.f32.mrb[0].mxu0
        %v689 = vpop.f32.mrb[0].mxu0
        %v690 = vadd.f32 0.0, %v689
        %v691 = vpop.f32.mrb[0].mxu0
        %692 = vmatprep.mubr.bf16.mxu0 0
        %693 = vmatmul.mubr.bf16.gmra.mrb[0].mxu0 %v570
        %v694 = vpop.f32.mrb[0].mxu0
        %v695 = vadd.f32 0.0, %v694
        %v696 = vpop.f32.mrb[0].mxu0
        %v697 = vpop.f32.mrb[0].mxu0
        %v698 = vadd.f32 0.0, %v697
        %v699 = vpop.f32.mrb[0].mxu0
        %700 = vdwg.mxu0
        %v717 = vunpack.c.l.b16 %v543
        %v718 = vunpack.c.l.b16 %v544
        %v719 = vunpack.c.l.b16 %v545
        %v720 = vunpack.c.l.b16 %v546
        %v721 = vunpack.c.l.b16 %v547
        %v722 = vunpack.c.l.b16 %v548
        %v723 = vunpack.c.l.b16 %v549
        %v724 = vunpack.c.l.b16 %v550
        %v725 = vunpack.c.l.b16 %v551
        %v726 = vunpack.c.l.b16 %v552
        %v727 = vunpack.c.l.b16 %v553
        %v728 = vunpack.c.l.b16 %v554
        %v729 = vunpack.c.l.b16 %v555
        %v730 = vunpack.c.l.b16 %v556
        %v731 = vunpack.c.l.b16 %v557
        %v732 = vunpack.c.l.b16 %v558
        %v733 = vpack.c.b16 %v718, %v717
        %v734 = vpack.c.b16 %v720, %v719
        %v735 = vpack.c.b16 %v722, %v721
        %v736 = vpack.c.b16 %v724, %v723
        %v737 = vpack.c.b16 %v726, %v725
        %v738 = vpack.c.b16 %v728, %v727
        %v739 = vpack.c.b16 %v730, %v729
        %v740 = vpack.c.b16 %v732, %v731
        %749 = vmatprep.subr.bf16.mxu0 0
        %750 = vmatpush1.bf16.msra.mxu0 %v733
        %751 = vmatprep.subr.bf16.mxu0 0
        %752 = vmatpush1.bf16.msra.mxu0 %v734
        %753 = vmatprep.subr.bf16.mxu0 0
        %754 = vmatpush1.bf16.msra.mxu0 %v735
        %755 = vmatprep.subr.bf16.mxu0 0
        %756 = vmatpush1.bf16.msra.mxu0 %v736
        %757 = vmatprep.subr.bf16.mxu0 0
        %758 = vmatpush1.bf16.msra.mxu0 %v737
        %759 = vmatprep.subr.bf16.mxu0 0
        %760 = vmatpush1.bf16.msra.mxu0 %v738
        %761 = vmatprep.subr.bf16.mxu0 0
        %762 = vmatpush1.bf16.msra.mxu0 %v739
        %763 = vmatprep.subr.bf16.mxu0 0
        %764 = vmatpush1.bf16.msra.mxu0 %v740
        %765 = vmatprep.subr.bf16.mxu0 0
        %766 = vmatpush1.bf16.msra.mxu0 0
        %767 = vmatprep.subr.bf16.mxu0 0
        %768 = vmatpush1.bf16.msra.mxu0 0
        %769 = vmatprep.subr.bf16.mxu0 0
        %770 = vmatpush1.bf16.msra.mxu0 0
        %771 = vmatprep.subr.bf16.mxu0 0
        %772 = vmatpush1.bf16.msra.mxu0 0
        %773 = vmatprep.subr.bf16.mxu0 0
        %774 = vmatpush1.bf16.msra.mxu0 0
        %775 = vmatprep.subr.bf16.mxu0 0
        %776 = vmatpush1.bf16.msra.mxu0 0
        %777 = vmatprep.subr.bf16.mxu0 0
        %778 = vmatpush1.bf16.msra.mxu0 0
        %779 = vmatprep.subr.bf16.mxu0 0
        %780 = vmatpush1.bf16.msra.mxu0 0
        %781 = vmatprep.mubr.bf16.mxu0 0
        %782 = vmatmul.mubr.bf16.gmra.mrb[0].mxu0 %v539
        %v783 = vpop.f32.mrb[0].mxu0
        %v784 = vadd.f32 %v671, %v783
        %v785 = vpop.f32.mrb[0].mxu0
        %v786 = vpop.f32.mrb[0].mxu0
        %v787 = vadd.f32 %v674, %v786
        %v788 = vpop.f32.mrb[0].mxu0
        %789 = vmatprep.mubr.bf16.mxu0 0
        %790 = vmatmul.mubr.bf16.gmra.mrb[0].mxu0 %v540
        %v791 = vpop.f32.mrb[0].mxu0
        %v792 = vadd.f32 %v679, %v791
        %v793 = vpop.f32.mrb[0].mxu0
        %v794 = vpop.f32.mrb[0].mxu0
        %v795 = vadd.f32 %v682, %v794
        %v796 = vpop.f32.mrb[0].mxu0
        %797 = vmatprep.mubr.bf16.mxu0 0
        %798 = vmatmul.mubr.bf16.gmra.mrb[0].mxu0 %v541
        %v799 = vpop.f32.mrb[0].mxu0
        %v800 = vadd.f32 %v687, %v799
        %v801 = vpop.f32.mrb[0].mxu0
        %v802 = vpop.f32.mrb[0].mxu0
        %v803 = vadd.f32 %v690, %v802
        %v804 = vpop.f32.mrb[0].mxu0
        %805 = vmatprep.mubr.bf16.mxu0 0
        %806 = vmatmul.mubr.bf16.gmra.mrb[0].mxu0 %v542
        %v807 = vpop.f32.mrb[0].mxu0
        %v808 = vadd.f32 %v695, %v807
        %v809 = vpop.f32.mrb[0].mxu0
        %v810 = vpop.f32.mrb[0].mxu0
        %v811 = vadd.f32 %v698, %v810
        %v812 = vpop.f32.mrb[0].mxu0
        %813 = vdwg.mxu0
        %v814 = vld [vmem:[#allocation2 + $0x2] sm:$0xff]
        %v815 = vld [vmem:[#allocation2 + $0xa] sm:$0xff]
        %v816 = vld [vmem:[#allocation2 + $0x12] sm:$0xff]
        %v817 = vld [vmem:[#allocation2 + $0x1a] sm:$0xff]
        %v818 = vld [vmem:[#allocation2 + $0x22] sm:$0xff]
        %v819 = vld [vmem:[#allocation2 + $0x2a] sm:$0xff]
        %v820 = vld [vmem:[#allocation2 + $0x32] sm:$0xff]
        %v821 = vld [vmem:[#allocation2 + $0x3a] sm:$0xff]
        %v822 = vld [vmem:[#allocation14] sm:$0xff]
        %v823 = vld [vmem:[#allocation14 + $0x8] sm:$0xff]
        %v824 = vld [vmem:[#allocation14 + $0x10] sm:$0xff]
        %v825 = vld [vmem:[#allocation14 + $0x18] sm:$0xff]
        %v826 = vld [vmem:[#allocation14 + $0x20] sm:$0xff]
        %v827 = vld [vmem:[#allocation14 + $0x28] sm:$0xff]
        %v828 = vld [vmem:[#allocation14 + $0x30] sm:$0xff]
        %v829 = vld [vmem:[#allocation14 + $0x38] sm:$0xff]
        %831 = vset.pattern.permute.xlu0 0
        %832 = vperm.xlu0 %831, %v822
        %v833 = vpop.permute.xlu0 %832
        %836 = vset.pattern.permute.xlu0 0
        %837 = vperm.xlu0 %836, %v823
        %v838 = vpop.permute.xlu0 %837
        %841 = vset.pattern.permute.xlu0 0
        %842 = vperm.xlu0 %841, %v824
        %v843 = vpop.permute.xlu0 %842
        %846 = vset.pattern.permute.xlu0 0
        %847 = vperm.xlu0 %846, %v825
        %v848 = vpop.permute.xlu0 %847
        %851 = vset.pattern.permute.xlu0 0
        %852 = vperm.xlu0 %851, %v826
        %v853 = vpop.permute.xlu0 %852
        %856 = vset.pattern.permute.xlu0 0
        %857 = vperm.xlu0 %856, %v827
        %v858 = vpop.permute.xlu0 %857
        %861 = vset.pattern.permute.xlu0 0
        %862 = vperm.xlu0 %861, %v828
        %v863 = vpop.permute.xlu0 %862
        %866 = vset.pattern.permute.xlu0 0
        %867 = vperm.xlu0 %866, %v829
        %v868 = vpop.permute.xlu0 %867
        %v870 = vmul.f32 %v814, %v833
        %v871 = vmul.f32 %v815, %v838
        %v872 = vmul.f32 %v816, %v843
        %v873 = vmul.f32 %v817, %v848
        %v874 = vmul.f32 %v818, %v853
        %v875 = vmul.f32 %v819, %v858
        %v876 = vmul.f32 %v820, %v863
        %v877 = vmul.f32 %v821, %v868
        %v878 = vpack.c.bf16 %v871, %v870
        %v879 = vpack.c.bf16 %v873, %v872
        %v880 = vpack.c.bf16 %v875, %v874
        %v881 = vpack.c.bf16 %v877, %v876
        %s882 = scalar_lea.vmem [#allocation9], 128
        %v883 = vld [vmem:[%s882] sm:$0xf]
        %v884 = vld [vmem:[%s882 + $0x4] sm:$0xf]
        %v885 = vld [vmem:[%s882 + $0x8] sm:$0xf]
        %v886 = vld [vmem:[%s882 + $0xc] sm:$0xf]
        %v887 = vld [vmem:[%s882 + $0x10] sm:$0xf]
        %v888 = vld [vmem:[%s882 + $0x14] sm:$0xf]
        %v889 = vld [vmem:[%s882 + $0x18] sm:$0xf]
        %v890 = vld [vmem:[%s882 + $0x1c] sm:$0xf]
        %v891 = vld [vmem:[%s882 + $0x20] sm:$0xf]
        %v892 = vld [vmem:[%s882 + $0x24] sm:$0xf]
        %v893 = vld [vmem:[%s882 + $0x28] sm:$0xf]
        %v894 = vld [vmem:[%s882 + $0x2c] sm:$0xf]
        %v895 = vld [vmem:[%s882 + $0x30] sm:$0xf]
        %v896 = vld [vmem:[%s882 + $0x34] sm:$0xf]
        %v897 = vld [vmem:[%s882 + $0x38] sm:$0xf]
        %v898 = vld [vmem:[%s882 + $0x3c] sm:$0xf]
        %v915 = vunpack.c.l.b16 %v883
        %v916 = vunpack.c.l.b16 %v884
        %v917 = vunpack.c.l.b16 %v885
        %v918 = vunpack.c.l.b16 %v886
        %v919 = vunpack.c.l.b16 %v887
        %v920 = vunpack.c.l.b16 %v888
        %v921 = vunpack.c.l.b16 %v889
        %v922 = vunpack.c.l.b16 %v890
        %v923 = vunpack.c.l.b16 %v891
        %v924 = vunpack.c.l.b16 %v892
        %v925 = vunpack.c.l.b16 %v893
        %v926 = vunpack.c.l.b16 %v894
        %v927 = vunpack.c.l.b16 %v895
        %v928 = vunpack.c.l.b16 %v896
        %v929 = vunpack.c.l.b16 %v897
        %v930 = vunpack.c.l.b16 %v898
        %v931 = vpack.c.b16 %v916, %v915
        %v932 = vpack.c.b16 %v918, %v917
        %v933 = vpack.c.b16 %v920, %v919
        %v934 = vpack.c.b16 %v922, %v921
        %v935 = vpack.c.b16 %v924, %v923
        %v936 = vpack.c.b16 %v926, %v925
        %v937 = vpack.c.b16 %v928, %v927
        %v938 = vpack.c.b16 %v930, %v929
        %947 = vmatprep.subr.bf16.mxu0 0
        %948 = vmatpush1.bf16.msra.mxu0 %v931
        %949 = vmatprep.subr.bf16.mxu0 0
        %950 = vmatpush1.bf16.msra.mxu0 %v932
        %951 = vmatprep.subr.bf16.mxu0 0
        %952 = vmatpush1.bf16.msra.mxu0 %v933
        %953 = vmatprep.subr.bf16.mxu0 0
        %954 = vmatpush1.bf16.msra.mxu0 %v934
        %955 = vmatprep.subr.bf16.mxu0 0
        %956 = vmatpush1.bf16.msra.mxu0 %v935
        %957 = vmatprep.subr.bf16.mxu0 0
        %958 = vmatpush1.bf16.msra.mxu0 %v936
        %959 = vmatprep.subr.bf16.mxu0 0
        %960 = vmatpush1.bf16.msra.mxu0 %v937
        %961 = vmatprep.subr.bf16.mxu0 0
        %962 = vmatpush1.bf16.msra.mxu0 %v938
        %963 = vmatprep.subr.bf16.mxu0 0
        %964 = vmatpush1.bf16.msra.mxu0 0
        %965 = vmatprep.subr.bf16.mxu0 0
        %966 = vmatpush1.bf16.msra.mxu0 0
        %967 = vmatprep.subr.bf16.mxu0 0
        %968 = vmatpush1.bf16.msra.mxu0 0
        %969 = vmatprep.subr.bf16.mxu0 0
        %970 = vmatpush1.bf16.msra.mxu0 0
        %971 = vmatprep.subr.bf16.mxu0 0
        %972 = vmatpush1.bf16.msra.mxu0 0
        %973 = vmatprep.subr.bf16.mxu0 0
        %974 = vmatpush1.bf16.msra.mxu0 0
        %975 = vmatprep.subr.bf16.mxu0 0
        %976 = vmatpush1.bf16.msra.mxu0 0
        %977 = vmatprep.subr.bf16.mxu0 0
        %978 = vmatpush1.bf16.msra.mxu0 0
        %979 = vmatprep.mubr.bf16.mxu0 0
        %980 = vmatmul.mubr.bf16.gmra.mrb[0].mxu0 %v878
        %v981 = vpop.f32.mrb[0].mxu0
        %v982 = vadd.f32 0.0, %v981
        %v983 = vpop.f32.mrb[0].mxu0
        %v984 = vpop.f32.mrb[0].mxu0
        %v985 = vadd.f32 0.0, %v984
        %v986 = vpop.f32.mrb[0].mxu0
        %987 = vmatprep.mubr.bf16.mxu0 0
        %988 = vmatmul.mubr.bf16.gmra.mrb[0].mxu0 %v879
        %v989 = vpop.f32.mrb[0].mxu0
        %v990 = vadd.f32 0.0, %v989
        %v991 = vpop.f32.mrb[0].mxu0
        %v992 = vpop.f32.mrb[0].mxu0
        %v993 = vadd.f32 0.0, %v992
        %v994 = vpop.f32.mrb[0].mxu0
        %995 = vmatprep.mubr.bf16.mxu0 0
        %996 = vmatmul.mubr.bf16.gmra.mrb[0].mxu0 %v880
        %v997 = vpop.f32.mrb[0].mxu0
        %v998 = vadd.f32 0.0, %v997
        %v999 = vpop.f32.mrb[0].mxu0
        %v1000 = vpop.f32.mrb[0].mxu0
        %v1001 = vadd.f32 0.0, %v1000
        %v1002 = vpop.f32.mrb[0].mxu0
        %1003 = vmatprep.mubr.bf16.mxu0 0
        %1004 = vmatmul.mubr.bf16.gmra.mrb[0].mxu0 %v881
        %v1005 = vpop.f32.mrb[0].mxu0
        %v1006 = vadd.f32 0.0, %v1005
        %v1007 = vpop.f32.mrb[0].mxu0
        %v1008 = vpop.f32.mrb[0].mxu0
        %v1009 = vadd.f32 0.0, %v1008
        %v1010 = vpop.f32.mrb[0].mxu0
        %1011 = vdwg.mxu0
        %v1012 = vadd.f32 %v784, %v982
        %v1013 = vadd.f32 %v787, %v985
        %v1014 = vadd.f32 %v792, %v990
        %v1015 = vadd.f32 %v795, %v993
        %v1016 = vadd.f32 %v800, %v998
        %v1017 = vadd.f32 %v803, %v1001
        %v1018 = vadd.f32 %v808, %v1006
        %v1019 = vadd.f32 %v811, %v1009
        %v1020 = vld [vmem:[#allocation2 + $0x8] sm:$0xff]
        %v1021 = vld [vmem:[#allocation2 + $0x10] sm:$0xff]
        %v1022 = vld [vmem:[#allocation2 + $0x18] sm:$0xff]
        %v1023 = vld [vmem:[#allocation2 + $0x20] sm:$0xff]
        %v1024 = vld [vmem:[#allocation2 + $0x28] sm:$0xff]
        %v1025 = vld [vmem:[#allocation2 + $0x30] sm:$0xff]
        %v1026 = vld [vmem:[#allocation2 + $0x38] sm:$0xff]
        %v1027 = vld [vmem:[#allocation2 + $0x40] sm:$0xff]
        %v1028 = vmul.f32 %v1020, %v494
        %v1029 = vmul.f32 %v1021, %v499
        %v1030 = vmul.f32 %v1022, %v504
        %v1031 = vmul.f32 %v1023, %v509
        %v1032 = vmul.f32 %v1024, %v514
        %v1033 = vmul.f32 %v1025, %v519
        %v1034 = vmul.f32 %v1026, %v524
        %v1035 = vmul.f32 %v1027, %v529
        %v1036 = vpack.c.bf16 %v1029, %v1028
        %v1037 = vpack.c.bf16 %v1031, %v1030
        %v1038 = vpack.c.bf16 %v1033, %v1032
        %v1039 = vpack.c.bf16 %v1035, %v1034
        %s1040 = scalar_lea.vmem [#allocation9], 192
        %v1041 = vld [vmem:[%s1040] sm:$0xf]
        %v1042 = vld [vmem:[%s1040 + $0x4] sm:$0xf]
        %v1043 = vld [vmem:[%s1040 + $0x8] sm:$0xf]
        %v1044 = vld [vmem:[%s1040 + $0xc] sm:$0xf]
        %v1045 = vld [vmem:[%s1040 + $0x10] sm:$0xf]
        %v1046 = vld [vmem:[%s1040 + $0x14] sm:$0xf]
        %v1047 = vld [vmem:[%s1040 + $0x18] sm:$0xf]
        %v1048 = vld [vmem:[%s1040 + $0x1c] sm:$0xf]
        %v1049 = vld [vmem:[%s1040 + $0x20] sm:$0xf]
        %v1050 = vld [vmem:[%s1040 + $0x24] sm:$0xf]
        %v1051 = vld [vmem:[%s1040 + $0x28] sm:$0xf]
        %v1052 = vld [vmem:[%s1040 + $0x2c] sm:$0xf]
        %v1053 = vld [vmem:[%s1040 + $0x30] sm:$0xf]
        %v1054 = vld [vmem:[%s1040 + $0x34] sm:$0xf]
        %v1055 = vld [vmem:[%s1040 + $0x38] sm:$0xf]
        %v1056 = vld [vmem:[%s1040 + $0x3c] sm:$0xf]
        %v1073 = vunpack.c.l.b16 %v1041
        %v1074 = vunpack.c.l.b16 %v1042
        %v1075 = vunpack.c.l.b16 %v1043
        %v1076 = vunpack.c.l.b16 %v1044
        %v1077 = vunpack.c.l.b16 %v1045
        %v1078 = vunpack.c.l.b16 %v1046
        %v1079 = vunpack.c.l.b16 %v1047
        %v1080 = vunpack.c.l.b16 %v1048
        %v1081 = vunpack.c.l.b16 %v1049
        %v1082 = vunpack.c.l.b16 %v1050
        %v1083 = vunpack.c.l.b16 %v1051
        %v1084 = vunpack.c.l.b16 %v1052
        %v1085 = vunpack.c.l.b16 %v1053
        %v1086 = vunpack.c.l.b16 %v1054
        %v1087 = vunpack.c.l.b16 %v1055
        %v1088 = vunpack.c.l.b16 %v1056
        %v1089 = vpack.c.b16 %v1074, %v1073
        %v1090 = vpack.c.b16 %v1076, %v1075
        %v1091 = vpack.c.b16 %v1078, %v1077
        %v1092 = vpack.c.b16 %v1080, %v1079
        %v1093 = vpack.c.b16 %v1082, %v1081
        %v1094 = vpack.c.b16 %v1084, %v1083
        %v1095 = vpack.c.b16 %v1086, %v1085
        %v1096 = vpack.c.b16 %v1088, %v1087
        %1105 = vmatprep.subr.bf16.mxu0 0
        %1106 = vmatpush1.bf16.msra.mxu0 %v1089
        %1107 = vmatprep.subr.bf16.mxu0 0
        %1108 = vmatpush1.bf16.msra.mxu0 %v1090
        %1109 = vmatprep.subr.bf16.mxu0 0
        %1110 = vmatpush1.bf16.msra.mxu0 %v1091
        %1111 = vmatprep.subr.bf16.mxu0 0
        %1112 = vmatpush1.bf16.msra.mxu0 %v1092
        %1113 = vmatprep.subr.bf16.mxu0 0
        %1114 = vmatpush1.bf16.msra.mxu0 %v1093
        %1115 = vmatprep.subr.bf16.mxu0 0
        %1116 = vmatpush1.bf16.msra.mxu0 %v1094
        %1117 = vmatprep.subr.bf16.mxu0 0
        %1118 = vmatpush1.bf16.msra.mxu0 %v1095
        %1119 = vmatprep.subr.bf16.mxu0 0
        %1120 = vmatpush1.bf16.msra.mxu0 %v1096
        %1121 = vmatprep.subr.bf16.mxu0 0
        %1122 = vmatpush1.bf16.msra.mxu0 0
        %1123 = vmatprep.subr.bf16.mxu0 0
        %1124 = vmatpush1.bf16.msra.mxu0 0
        %1125 = vmatprep.subr.bf16.mxu0 0
        %1126 = vmatpush1.bf16.msra.mxu0 0
        %1127 = vmatprep.subr.bf16.mxu0 0
        %1128 = vmatpush1.bf16.msra.mxu0 0
        %1129 = vmatprep.subr.bf16.mxu0 0
        %1130 = vmatpush1.bf16.msra.mxu0 0
        %1131 = vmatprep.subr.bf16.mxu0 0
        %1132 = vmatpush1.bf16.msra.mxu0 0
        %1133 = vmatprep.subr.bf16.mxu0 0
        %1134 = vmatpush1.bf16.msra.mxu0 0
        %1135 = vmatprep.subr.bf16.mxu0 0
        %1136 = vmatpush1.bf16.msra.mxu0 0
        %1137 = vmatprep.mubr.bf16.mxu0 0
        %1138 = vmatmul.mubr.bf16.gmra.mrb[0].mxu0 %v1036
        %v1139 = vpop.f32.mrb[0].mxu0
        %v1140 = vadd.f32 0.0, %v1139
        %v1141 = vpop.f32.mrb[0].mxu0
        %v1142 = vpop.f32.mrb[0].mxu0
        %v1143 = vadd.f32 0.0, %v1142
        %v1144 = vpop.f32.mrb[0].mxu0
        %1145 = vmatprep.mubr.bf16.mxu0 0
        %1146 = vmatmul.mubr.bf16.gmra.mrb[0].mxu0 %v1037
        %v1147 = vpop.f32.mrb[0].mxu0
        %v1148 = vadd.f32 0.0, %v1147
        %v1149 = vpop.f32.mrb[0].mxu0
        %v1150 = vpop.f32.mrb[0].mxu0
        %v1151 = vadd.f32 0.0, %v1150
        %v1152 = vpop.f32.mrb[0].mxu0
        %1153 = vmatprep.mubr.bf16.mxu0 0
        %1154 = vmatmul.mubr.bf16.gmra.mrb[0].mxu0 %v1038
        %v1155 = vpop.f32.mrb[0].mxu0
        %v1156 = vadd.f32 0.0, %v1155
        %v1157 = vpop.f32.mrb[0].mxu0
        %v1158 = vpop.f32.mrb[0].mxu0
        %v1159 = vadd.f32 0.0, %v1158
        %v1160 = vpop.f32.mrb[0].mxu0
        %1161 = vmatprep.mubr.bf16.mxu0 0
        %1162 = vmatmul.mubr.bf16.gmra.mrb[0].mxu0 %v1039
        %v1163 = vpop.f32.mrb[0].mxu0
        %v1164 = vadd.f32 0.0, %v1163
        %v1165 = vpop.f32.mrb[0].mxu0
        %v1166 = vpop.f32.mrb[0].mxu0
        %v1167 = vadd.f32 0.0, %v1166
        %v1168 = vpop.f32.mrb[0].mxu0
        %1169 = vdwg.mxu0
        %v1170 = vadd.f32 %v1012, %v1140
        %v1171 = vadd.f32 %v1013, %v1143
        %v1172 = vadd.f32 %v1014, %v1148
        %v1173 = vadd.f32 %v1015, %v1151
        %v1174 = vadd.f32 %v1016, %v1156
        %v1175 = vadd.f32 %v1017, %v1159
        %v1176 = vadd.f32 %v1018, %v1164
        %v1177 = vadd.f32 %v1019, %v1167
        %v1178 = vld [vmem:[#allocation2 + $0x9] sm:$0xff]
        %v1179 = vld [vmem:[#allocation2 + $0x11] sm:$0xff]
        %v1180 = vld [vmem:[#allocation2 + $0x19] sm:$0xff]
        %v1181 = vld [vmem:[#allocation2 + $0x21] sm:$0xff]
        %v1182 = vld [vmem:[#allocation2 + $0x29] sm:$0xff]
        %v1183 = vld [vmem:[#allocation2 + $0x31] sm:$0xff]
        %v1184 = vld [vmem:[#allocation2 + $0x39] sm:$0xff]
        %v1185 = vld [vmem:[#allocation2 + $0x41] sm:$0xff]
        %v1186 = vpack.c.bf16 %v1179, %v1178
        %v1187 = vpack.c.bf16 %v1181, %v1180
        %v1188 = vpack.c.bf16 %v1183, %v1182
        %v1189 = vpack.c.bf16 %v1185, %v1184
        %s1190 = scalar_lea.vmem [#allocation9], 256
        %v1191 = vld [vmem:[%s1190] sm:$0xf]
        %v1192 = vld [vmem:[%s1190 + $0x4] sm:$0xf]
        %v1193 = vld [vmem:[%s1190 + $0x8] sm:$0xf]
        %v1194 = vld [vmem:[%s1190 + $0xc] sm:$0xf]
        %v1195 = vld [vmem:[%s1190 + $0x10] sm:$0xf]
        %v1196 = vld [vmem:[%s1190 + $0x14] sm:$0xf]
        %v1197 = vld [vmem:[%s1190 + $0x18] sm:$0xf]
        %v1198 = vld [vmem:[%s1190 + $0x1c] sm:$0xf]
        %v1199 = vld [vmem:[%s1190 + $0x20] sm:$0xf]
        %v1200 = vld [vmem:[%s1190 + $0x24] sm:$0xf]
        %v1201 = vld [vmem:[%s1190 + $0x28] sm:$0xf]
        %v1202 = vld [vmem:[%s1190 + $0x2c] sm:$0xf]
        %v1203 = vld [vmem:[%s1190 + $0x30] sm:$0xf]
        %v1204 = vld [vmem:[%s1190 + $0x34] sm:$0xf]
        %v1205 = vld [vmem:[%s1190 + $0x38] sm:$0xf]
        %v1206 = vld [vmem:[%s1190 + $0x3c] sm:$0xf]
        %v1223 = vunpack.c.l.b16 %v1191
        %v1224 = vunpack.c.l.b16 %v1192
        %v1225 = vunpack.c.l.b16 %v1193
        %v1226 = vunpack.c.l.b16 %v1194
        %v1227 = vunpack.c.l.b16 %v1195
        %v1228 = vunpack.c.l.b16 %v1196
        %v1229 = vunpack.c.l.b16 %v1197
        %v1230 = vunpack.c.l.b16 %v1198
        %v1231 = vunpack.c.l.b16 %v1199
        %v1232 = vunpack.c.l.b16 %v1200
        %v1233 = vunpack.c.l.b16 %v1201
        %v1234 = vunpack.c.l.b16 %v1202
        %v1235 = vunpack.c.l.b16 %v1203
        %v1236 = vunpack.c.l.b16 %v1204
        %v1237 = vunpack.c.l.b16 %v1205
        %v1238 = vunpack.c.l.b16 %v1206
        %v1239 = vpack.c.b16 %v1224, %v1223
        %v1240 = vpack.c.b16 %v1226, %v1225
        %v1241 = vpack.c.b16 %v1228, %v1227
        %v1242 = vpack.c.b16 %v1230, %v1229
        %v1243 = vpack.c.b16 %v1232, %v1231
        %v1244 = vpack.c.b16 %v1234, %v1233
        %v1245 = vpack.c.b16 %v1236, %v1235
        %v1246 = vpack.c.b16 %v1238, %v1237
        %1255 = vmatprep.subr.bf16.mxu0 0
        %1256 = vmatpush1.bf16.msra.mxu0 %v1239
        %1257 = vmatprep.subr.bf16.mxu0 0
        %1258 = vmatpush1.bf16.msra.mxu0 %v1240
        %1259 = vmatprep.subr.bf16.mxu0 0
        %1260 = vmatpush1.bf16.msra.mxu0 %v1241
        %1261 = vmatprep.subr.bf16.mxu0 0
        %1262 = vmatpush1.bf16.msra.mxu0 %v1242
        %1263 = vmatprep.subr.bf16.mxu0 0
        %1264 = vmatpush1.bf16.msra.mxu0 %v1243
        %1265 = vmatprep.subr.bf16.mxu0 0
        %1266 = vmatpush1.bf16.msra.mxu0 %v1244
        %1267 = vmatprep.subr.bf16.mxu0 0
        %1268 = vmatpush1.bf16.msra.mxu0 %v1245
        %1269 = vmatprep.subr.bf16.mxu0 0
        %1270 = vmatpush1.bf16.msra.mxu0 %v1246
        %1271 = vmatprep.subr.bf16.mxu0 0
        %1272 = vmatpush1.bf16.msra.mxu0 0
        %1273 = vmatprep.subr.bf16.mxu0 0
        %1274 = vmatpush1.bf16.msra.mxu0 0
        %1275 = vmatprep.subr.bf16.mxu0 0
        %1276 = vmatpush1.bf16.msra.mxu0 0
        %1277 = vmatprep.subr.bf16.mxu0 0
        %1278 = vmatpush1.bf16.msra.mxu0 0
        %1279 = vmatprep.subr.bf16.mxu0 0
        %1280 = vmatpush1.bf16.msra.mxu0 0
        %1281 = vmatprep.subr.bf16.mxu0 0
        %1282 = vmatpush1.bf16.msra.mxu0 0
        %1283 = vmatprep.subr.bf16.mxu0 0
        %1284 = vmatpush1.bf16.msra.mxu0 0
        %1285 = vmatprep.subr.bf16.mxu0 0
        %1286 = vmatpush1.bf16.msra.mxu0 0
        %1287 = vmatprep.mubr.bf16.mxu0 0
        %1288 = vmatmul.mubr.bf16.gmra.mrb[0].mxu0 %v1186
        %v1289 = vpop.f32.mrb[0].mxu0
        %v1290 = vadd.f32 0.0, %v1289
        %v1291 = vpop.f32.mrb[0].mxu0
        %v1292 = vpop.f32.mrb[0].mxu0
        %v1293 = vadd.f32 0.0, %v1292
        %v1294 = vpop.f32.mrb[0].mxu0
        %1295 = vmatprep.mubr.bf16.mxu0 0
        %1296 = vmatmul.mubr.bf16.gmra.mrb[0].mxu0 %v1187
        %v1297 = vpop.f32.mrb[0].mxu0
        %v1298 = vadd.f32 0.0, %v1297
        %v1299 = vpop.f32.mrb[0].mxu0
        %v1300 = vpop.f32.mrb[0].mxu0
        %v1301 = vadd.f32 0.0, %v1300
        %v1302 = vpop.f32.mrb[0].mxu0
        %1303 = vmatprep.mubr.bf16.mxu0 0
        %1304 = vmatmul.mubr.bf16.gmra.mrb[0].mxu0 %v1188
        %v1305 = vpop.f32.mrb[0].mxu0
        %v1306 = vadd.f32 0.0, %v1305
        %v1307 = vpop.f32.mrb[0].mxu0
        %v1308 = vpop.f32.mrb[0].mxu0
        %v1309 = vadd.f32 0.0, %v1308
        %v1310 = vpop.f32.mrb[0].mxu0
        %1311 = vmatprep.mubr.bf16.mxu0 0
        %1312 = vmatmul.mubr.bf16.gmra.mrb[0].mxu0 %v1189
        %v1313 = vpop.f32.mrb[0].mxu0
        %v1314 = vadd.f32 0.0, %v1313
        %v1315 = vpop.f32.mrb[0].mxu0
        %v1316 = vpop.f32.mrb[0].mxu0
        %v1317 = vadd.f32 0.0, %v1316
        %v1318 = vpop.f32.mrb[0].mxu0
        %1319 = vdwg.mxu0
        %v1320 = vadd.f32 %v1170, %v1290
        %v1321 = vadd.f32 %v1171, %v1293
        %v1322 = vadd.f32 %v1172, %v1298
        %v1323 = vadd.f32 %v1173, %v1301
        %v1324 = vadd.f32 %v1174, %v1306
        %v1325 = vadd.f32 %v1175, %v1309
        %v1326 = vadd.f32 %v1176, %v1314
        %v1327 = vadd.f32 %v1177, %v1317
        %v1328 = vld [vmem:[#allocation2 + $0xa] sm:$0xff]
        %v1329 = vld [vmem:[#allocation2 + $0x12] sm:$0xff]
        %v1330 = vld [vmem:[#allocation2 + $0x1a] sm:$0xff]
        %v1331 = vld [vmem:[#allocation2 + $0x22] sm:$0xff]
        %v1332 = vld [vmem:[#allocation2 + $0x2a] sm:$0xff]
        %v1333 = vld [vmem:[#allocation2 + $0x32] sm:$0xff]
        %v1334 = vld [vmem:[#allocation2 + $0x3a] sm:$0xff]
        %v1335 = vld [vmem:[#allocation2 + $0x42] sm:$0xff]
        %v1336 = vmul.f32 %v1328, %v833
        %v1337 = vmul.f32 %v1329, %v838
        %v1338 = vmul.f32 %v1330, %v843
        %v1339 = vmul.f32 %v1331, %v848
        %v1340 = vmul.f32 %v1332, %v853
        %v1341 = vmul.f32 %v1333, %v858
        %v1342 = vmul.f32 %v1334, %v863
        %v1343 = vmul.f32 %v1335, %v868
        %v1344 = vpack.c.bf16 %v1337, %v1336
        %v1345 = vpack.c.bf16 %v1339, %v1338
        %v1346 = vpack.c.bf16 %v1341, %v1340
        %v1347 = vpack.c.bf16 %v1343, %v1342
        %s1348 = scalar_lea.vmem [#allocation9], 320
        %v1349 = vld [vmem:[%s1348] sm:$0xf]
        %v1350 = vld [vmem:[%s1348 + $0x4] sm:$0xf]
        %v1351 = vld [vmem:[%s1348 + $0x8] sm:$0xf]
        %v1352 = vld [vmem:[%s1348 + $0xc] sm:$0xf]
        %v1353 = vld [vmem:[%s1348 + $0x10] sm:$0xf]
        %v1354 = vld [vmem:[%s1348 + $0x14] sm:$0xf]
        %v1355 = vld [vmem:[%s1348 + $0x18] sm:$0xf]
        %v1356 = vld [vmem:[%s1348 + $0x1c] sm:$0xf]
        %v1357 = vld [vmem:[%s1348 + $0x20] sm:$0xf]
        %v1358 = vld [vmem:[%s1348 + $0x24] sm:$0xf]
        %v1359 = vld [vmem:[%s1348 + $0x28] sm:$0xf]
        %v1360 = vld [vmem:[%s1348 + $0x2c] sm:$0xf]
        %v1361 = vld [vmem:[%s1348 + $0x30] sm:$0xf]
        %v1362 = vld [vmem:[%s1348 + $0x34] sm:$0xf]
        %v1363 = vld [vmem:[%s1348 + $0x38] sm:$0xf]
        %v1364 = vld [vmem:[%s1348 + $0x3c] sm:$0xf]
        %v1381 = vunpack.c.l.b16 %v1349
        %v1382 = vunpack.c.l.b16 %v1350
        %v1383 = vunpack.c.l.b16 %v1351
        %v1384 = vunpack.c.l.b16 %v1352
        %v1385 = vunpack.c.l.b16 %v1353
        %v1386 = vunpack.c.l.b16 %v1354
        %v1387 = vunpack.c.l.b16 %v1355
        %v1388 = vunpack.c.l.b16 %v1356
        %v1389 = vunpack.c.l.b16 %v1357
        %v1390 = vunpack.c.l.b16 %v1358
        %v1391 = vunpack.c.l.b16 %v1359
        %v1392 = vunpack.c.l.b16 %v1360
        %v1393 = vunpack.c.l.b16 %v1361
        %v1394 = vunpack.c.l.b16 %v1362
        %v1395 = vunpack.c.l.b16 %v1363
        %v1396 = vunpack.c.l.b16 %v1364
        %v1397 = vpack.c.b16 %v1382, %v1381
        %v1398 = vpack.c.b16 %v1384, %v1383
        %v1399 = vpack.c.b16 %v1386, %v1385
        %v1400 = vpack.c.b16 %v1388, %v1387
        %v1401 = vpack.c.b16 %v1390, %v1389
        %v1402 = vpack.c.b16 %v1392, %v1391
        %v1403 = vpack.c.b16 %v1394, %v1393
        %v1404 = vpack.c.b16 %v1396, %v1395
        %1413 = vmatprep.subr.bf16.mxu0 0
        %1414 = vmatpush1.bf16.msra.mxu0 %v1397
        %1415 = vmatprep.subr.bf16.mxu0 0
        %1416 = vmatpush1.bf16.msra.mxu0 %v1398
        %1417 = vmatprep.subr.bf16.mxu0 0
        %1418 = vmatpush1.bf16.msra.mxu0 %v1399
        %1419 = vmatprep.subr.bf16.mxu0 0
        %1420 = vmatpush1.bf16.msra.mxu0 %v1400
        %1421 = vmatprep.subr.bf16.mxu0 0
        %1422 = vmatpush1.bf16.msra.mxu0 %v1401
        %1423 = vmatprep.subr.bf16.mxu0 0
        %1424 = vmatpush1.bf16.msra.mxu0 %v1402
        %1425 = vmatprep.subr.bf16.mxu0 0
        %1426 = vmatpush1.bf16.msra.mxu0 %v1403
        %1427 = vmatprep.subr.bf16.mxu0 0
        %1428 = vmatpush1.bf16.msra.mxu0 %v1404
        %1429 = vmatprep.subr.bf16.mxu0 0
        %1430 = vmatpush1.bf16.msra.mxu0 0
        %1431 = vmatprep.subr.bf16.mxu0 0
        %1432 = vmatpush1.bf16.msra.mxu0 0
        %1433 = vmatprep.subr.bf16.mxu0 0
        %1434 = vmatpush1.bf16.msra.mxu0 0
        %1435 = vmatprep.subr.bf16.mxu0 0
        %1436 = vmatpush1.bf16.msra.mxu0 0
        %1437 = vmatprep.subr.bf16.mxu0 0
        %1438 = vmatpush1.bf16.msra.mxu0 0
        %1439 = vmatprep.subr.bf16.mxu0 0
        %1440 = vmatpush1.bf16.msra.mxu0 0
        %1441 = vmatprep.subr.bf16.mxu0 0
        %1442 = vmatpush1.bf16.msra.mxu0 0
        %1443 = vmatprep.subr.bf16.mxu0 0
        %1444 = vmatpush1.bf16.msra.mxu0 0
        %1445 = vmatprep.mubr.bf16.mxu0 0
        %1446 = vmatmul.mubr.bf16.gmra.mrb[0].mxu0 %v1344
        %v1447 = vpop.f32.mrb[0].mxu0
        %v1448 = vadd.f32 0.0, %v1447
        %v1449 = vpop.f32.mrb[0].mxu0
        %v1450 = vpop.f32.mrb[0].mxu0
        %v1451 = vadd.f32 0.0, %v1450
        %v1452 = vpop.f32.mrb[0].mxu0
        %1453 = vmatprep.mubr.bf16.mxu0 0
        %1454 = vmatmul.mubr.bf16.gmra.mrb[0].mxu0 %v1345
        %v1455 = vpop.f32.mrb[0].mxu0
        %v1456 = vadd.f32 0.0, %v1455
        %v1457 = vpop.f32.mrb[0].mxu0
        %v1458 = vpop.f32.mrb[0].mxu0
        %v1459 = vadd.f32 0.0, %v1458
        %v1460 = vpop.f32.mrb[0].mxu0
        %1461 = vmatprep.mubr.bf16.mxu0 0
        %1462 = vmatmul.mubr.bf16.gmra.mrb[0].mxu0 %v1346
        %v1463 = vpop.f32.mrb[0].mxu0
        %v1464 = vadd.f32 0.0, %v1463
        %v1465 = vpop.f32.mrb[0].mxu0
        %v1466 = vpop.f32.mrb[0].mxu0
        %v1467 = vadd.f32 0.0, %v1466
        %v1468 = vpop.f32.mrb[0].mxu0
        %1469 = vmatprep.mubr.bf16.mxu0 0
        %1470 = vmatmul.mubr.bf16.gmra.mrb[0].mxu0 %v1347
        %v1471 = vpop.f32.mrb[0].mxu0
        %v1472 = vadd.f32 0.0, %v1471
        %v1473 = vpop.f32.mrb[0].mxu0
        %v1474 = vpop.f32.mrb[0].mxu0
        %v1475 = vadd.f32 0.0, %v1474
        %v1476 = vpop.f32.mrb[0].mxu0
        %1477 = vdwg.mxu0
        %v1478 = vadd.f32 %v1320, %v1448
        %v1479 = vadd.f32 %v1321, %v1451
        %v1480 = vadd.f32 %v1322, %v1456
        %v1481 = vadd.f32 %v1323, %v1459
        %v1482 = vadd.f32 %v1324, %v1464
        %v1483 = vadd.f32 %v1325, %v1467
        %v1484 = vadd.f32 %v1326, %v1472
        %v1485 = vadd.f32 %v1327, %v1475
        %v1486 = vld [vmem:[#allocation2 + $0x10] sm:$0xff]
        %v1487 = vld [vmem:[#allocation2 + $0x18] sm:$0xff]
        %v1488 = vld [vmem:[#allocation2 + $0x20] sm:$0xff]
        %v1489 = vld [vmem:[#allocation2 + $0x28] sm:$0xff]
        %v1490 = vld [vmem:[#allocation2 + $0x30] sm:$0xff]
        %v1491 = vld [vmem:[#allocation2 + $0x38] sm:$0xff]
        %v1492 = vld [vmem:[#allocation2 + $0x40] sm:$0xff]
        %v1493 = vld [vmem:[#allocation2 + $0x48] sm:$0xff]
        %v1494 = vmul.f32 %v1486, %v494
        %v1495 = vmul.f32 %v1487, %v499
        %v1496 = vmul.f32 %v1488, %v504
        %v1497 = vmul.f32 %v1489, %v509
        %v1498 = vmul.f32 %v1490, %v514
        %v1499 = vmul.f32 %v1491, %v519
        %v1500 = vmul.f32 %v1492, %v524
        %v1501 = vmul.f32 %v1493, %v529
        %v1502 = vpack.c.bf16 %v1495, %v1494
        %v1503 = vpack.c.bf16 %v1497, %v1496
        %v1504 = vpack.c.bf16 %v1499, %v1498
        %v1505 = vpack.c.bf16 %v1501, %v1500
        %s1506 = scalar_lea.vmem [#allocation9], 384
        %v1507 = vld [vmem:[%s1506] sm:$0xf]
        %v1508 = vld [vmem:[%s1506 + $0x4] sm:$0xf]
        %v1509 = vld [vmem:[%s1506 + $0x8] sm:$0xf]
        %v1510 = vld [vmem:[%s1506 + $0xc] sm:$0xf]
        %v1511 = vld [vmem:[%s1506 + $0x10] sm:$0xf]
        %v1512 = vld [vmem:[%s1506 + $0x14] sm:$0xf]
        %v1513 = vld [vmem:[%s1506 + $0x18] sm:$0xf]
        %v1514 = vld [vmem:[%s1506 + $0x1c] sm:$0xf]
        %v1515 = vld [vmem:[%s1506 + $0x20] sm:$0xf]
        %v1516 = vld [vmem:[%s1506 + $0x24] sm:$0xf]
        %v1517 = vld [vmem:[%s1506 + $0x28] sm:$0xf]
        %v1518 = vld [vmem:[%s1506 + $0x2c] sm:$0xf]
        %v1519 = vld [vmem:[%s1506 + $0x30] sm:$0xf]
        %v1520 = vld [vmem:[%s1506 + $0x34] sm:$0xf]
        %v1521 = vld [vmem:[%s1506 + $0x38] sm:$0xf]
        %v1522 = vld [vmem:[%s1506 + $0x3c] sm:$0xf]
        %v1539 = vunpack.c.l.b16 %v1507
        %v1540 = vunpack.c.l.b16 %v1508
        %v1541 = vunpack.c.l.b16 %v1509
        %v1542 = vunpack.c.l.b16 %v1510
        %v1543 = vunpack.c.l.b16 %v1511
        %v1544 = vunpack.c.l.b16 %v1512
        %v1545 = vunpack.c.l.b16 %v1513
        %v1546 = vunpack.c.l.b16 %v1514
        %v1547 = vunpack.c.l.b16 %v1515
        %v1548 = vunpack.c.l.b16 %v1516
        %v1549 = vunpack.c.l.b16 %v1517
        %v1550 = vunpack.c.l.b16 %v1518
        %v1551 = vunpack.c.l.b16 %v1519
        %v1552 = vunpack.c.l.b16 %v1520
        %v1553 = vunpack.c.l.b16 %v1521
        %v1554 = vunpack.c.l.b16 %v1522
        %v1555 = vpack.c.b16 %v1540, %v1539
        %v1556 = vpack.c.b16 %v1542, %v1541
        %v1557 = vpack.c.b16 %v1544, %v1543
        %v1558 = vpack.c.b16 %v1546, %v1545
        %v1559 = vpack.c.b16 %v1548, %v1547
        %v1560 = vpack.c.b16 %v1550, %v1549
        %v1561 = vpack.c.b16 %v1552, %v1551
        %v1562 = vpack.c.b16 %v1554, %v1553
        %1571 = vmatprep.subr.bf16.mxu0 0
        %1572 = vmatpush1.bf16.msra.mxu0 %v1555
        %1573 = vmatprep.subr.bf16.mxu0 0
        %1574 = vmatpush1.bf16.msra.mxu0 %v1556
        %1575 = vmatprep.subr.bf16.mxu0 0
        %1576 = vmatpush1.bf16.msra.mxu0 %v1557
        %1577 = vmatprep.subr.bf16.mxu0 0
        %1578 = vmatpush1.bf16.msra.mxu0 %v1558
        %1579 = vmatprep.subr.bf16.mxu0 0
        %1580 = vmatpush1.bf16.msra.mxu0 %v1559
        %1581 = vmatprep.subr.bf16.mxu0 0
        %1582 = vmatpush1.bf16.msra.mxu0 %v1560
        %1583 = vmatprep.subr.bf16.mxu0 0
        %1584 = vmatpush1.bf16.msra.mxu0 %v1561
        %1585 = vmatprep.subr.bf16.mxu0 0
        %1586 = vmatpush1.bf16.msra.mxu0 %v1562
        %1587 = vmatprep.subr.bf16.mxu0 0
        %1588 = vmatpush1.bf16.msra.mxu0 0
        %1589 = vmatprep.subr.bf16.mxu0 0
        %1590 = vmatpush1.bf16.msra.mxu0 0
        %1591 = vmatprep.subr.bf16.mxu0 0
        %1592 = vmatpush1.bf16.msra.mxu0 0
        %1593 = vmatprep.subr.bf16.mxu0 0
        %1594 = vmatpush1.bf16.msra.mxu0 0
        %1595 = vmatprep.subr.bf16.mxu0 0
        %1596 = vmatpush1.bf16.msra.mxu0 0
        %1597 = vmatprep.subr.bf16.mxu0 0
        %1598 = vmatpush1.bf16.msra.mxu0 0
        %1599 = vmatprep.subr.bf16.mxu0 0
        %1600 = vmatpush1.bf16.msra.mxu0 0
        %1601 = vmatprep.subr.bf16.mxu0 0
        %1602 = vmatpush1.bf16.msra.mxu0 0
        %1603 = vmatprep.mubr.bf16.mxu0 0
        %1604 = vmatmul.mubr.bf16.gmra.mrb[0].mxu0 %v1502
        %v1605 = vpop.f32.mrb[0].mxu0
        %v1606 = vadd.f32 0.0, %v1605
        %v1607 = vpop.f32.mrb[0].mxu0
        %v1608 = vpop.f32.mrb[0].mxu0
        %v1609 = vadd.f32 0.0, %v1608
        %v1610 = vpop.f32.mrb[0].mxu0
        %1611 = vmatprep.mubr.bf16.mxu0 0
        %1612 = vmatmul.mubr.bf16.gmra.mrb[0].mxu0 %v1503
        %v1613 = vpop.f32.mrb[0].mxu0
        %v1614 = vadd.f32 0.0, %v1613
        %v1615 = vpop.f32.mrb[0].mxu0
        %v1616 = vpop.f32.mrb[0].mxu0
        %v1617 = vadd.f32 0.0, %v1616
        %v1618 = vpop.f32.mrb[0].mxu0
        %1619 = vmatprep.mubr.bf16.mxu0 0
        %1620 = vmatmul.mubr.bf16.gmra.mrb[0].mxu0 %v1504
        %v1621 = vpop.f32.mrb[0].mxu0
        %v1622 = vadd.f32 0.0, %v1621
        %v1623 = vpop.f32.mrb[0].mxu0
        %v1624 = vpop.f32.mrb[0].mxu0
        %v1625 = vadd.f32 0.0, %v1624
        %v1626 = vpop.f32.mrb[0].mxu0
        %1627 = vmatprep.mubr.bf16.mxu0 0
        %1628 = vmatmul.mubr.bf16.gmra.mrb[0].mxu0 %v1505
        %v1629 = vpop.f32.mrb[0].mxu0
        %v1630 = vadd.f32 0.0, %v1629
        %v1631 = vpop.f32.mrb[0].mxu0
        %v1632 = vpop.f32.mrb[0].mxu0
        %v1633 = vadd.f32 0.0, %v1632
        %v1634 = vpop.f32.mrb[0].mxu0
        %1635 = vdwg.mxu0
        %v1636 = vadd.f32 %v1478, %v1606
        %v1637 = vadd.f32 %v1479, %v1609
        %v1638 = vadd.f32 %v1480, %v1614
        %v1639 = vadd.f32 %v1481, %v1617
        %v1640 = vadd.f32 %v1482, %v1622
        %v1641 = vadd.f32 %v1483, %v1625
        %v1642 = vadd.f32 %v1484, %v1630
        %v1643 = vadd.f32 %v1485, %v1633
        %v1644 = vld [vmem:[#allocation2 + $0x11] sm:$0xff]
        %v1645 = vld [vmem:[#allocation2 + $0x19] sm:$0xff]
        %v1646 = vld [vmem:[#allocation2 + $0x21] sm:$0xff]
        %v1647 = vld [vmem:[#allocation2 + $0x29] sm:$0xff]
        %v1648 = vld [vmem:[#allocation2 + $0x31] sm:$0xff]
        %v1649 = vld [vmem:[#allocation2 + $0x39] sm:$0xff]
        %v1650 = vld [vmem:[#allocation2 + $0x41] sm:$0xff]
        %v1651 = vld [vmem:[#allocation2 + $0x49] sm:$0xff]
        %v1652 = vpack.c.bf16 %v1645, %v1644
        %v1653 = vpack.c.bf16 %v1647, %v1646
        %v1654 = vpack.c.bf16 %v1649, %v1648
        %v1655 = vpack.c.bf16 %v1651, %v1650
        %s1656 = scalar_lea.vmem [#allocation9], 448
        %v1657 = vld [vmem:[%s1656] sm:$0xf]
        %v1658 = vld [vmem:[%s1656 + $0x4] sm:$0xf]
        %v1659 = vld [vmem:[%s1656 + $0x8] sm:$0xf]
        %v1660 = vld [vmem:[%s1656 + $0xc] sm:$0xf]
        %v1661 = vld [vmem:[%s1656 + $0x10] sm:$0xf]
        %v1662 = vld [vmem:[%s1656 + $0x14] sm:$0xf]
        %v1663 = vld [vmem:[%s1656 + $0x18] sm:$0xf]
        %v1664 = vld [vmem:[%s1656 + $0x1c] sm:$0xf]
        %v1665 = vld [vmem:[%s1656 + $0x20] sm:$0xf]
        %v1666 = vld [vmem:[%s1656 + $0x24] sm:$0xf]
        %v1667 = vld [vmem:[%s1656 + $0x28] sm:$0xf]
        %v1668 = vld [vmem:[%s1656 + $0x2c] sm:$0xf]
        %v1669 = vld [vmem:[%s1656 + $0x30] sm:$0xf]
        %v1670 = vld [vmem:[%s1656 + $0x34] sm:$0xf]
        %v1671 = vld [vmem:[%s1656 + $0x38] sm:$0xf]
        %v1672 = vld [vmem:[%s1656 + $0x3c] sm:$0xf]
        %v1689 = vunpack.c.l.b16 %v1657
        %v1690 = vunpack.c.l.b16 %v1658
        %v1691 = vunpack.c.l.b16 %v1659
        %v1692 = vunpack.c.l.b16 %v1660
        %v1693 = vunpack.c.l.b16 %v1661
        %v1694 = vunpack.c.l.b16 %v1662
        %v1695 = vunpack.c.l.b16 %v1663
        %v1696 = vunpack.c.l.b16 %v1664
        %v1697 = vunpack.c.l.b16 %v1665
        %v1698 = vunpack.c.l.b16 %v1666
        %v1699 = vunpack.c.l.b16 %v1667
        %v1700 = vunpack.c.l.b16 %v1668
        %v1701 = vunpack.c.l.b16 %v1669
        %v1702 = vunpack.c.l.b16 %v1670
        %v1703 = vunpack.c.l.b16 %v1671
        %v1704 = vunpack.c.l.b16 %v1672
        %v1705 = vpack.c.b16 %v1690, %v1689
        %v1706 = vpack.c.b16 %v1692, %v1691
        %v1707 = vpack.c.b16 %v1694, %v1693
        %v1708 = vpack.c.b16 %v1696, %v1695
        %v1709 = vpack.c.b16 %v1698, %v1697
        %v1710 = vpack.c.b16 %v1700, %v1699
        %v1711 = vpack.c.b16 %v1702, %v1701
        %v1712 = vpack.c.b16 %v1704, %v1703
        %1721 = vmatprep.subr.bf16.mxu0 0
        %1722 = vmatpush1.bf16.msra.mxu0 %v1705
        %1723 = vmatprep.subr.bf16.mxu0 0
        %1724 = vmatpush1.bf16.msra.mxu0 %v1706
        %1725 = vmatprep.subr.bf16.mxu0 0
        %1726 = vmatpush1.bf16.msra.mxu0 %v1707
        %1727 = vmatprep.subr.bf16.mxu0 0
        %1728 = vmatpush1.bf16.msra.mxu0 %v1708
        %1729 = vmatprep.subr.bf16.mxu0 0
        %1730 = vmatpush1.bf16.msra.mxu0 %v1709
        %1731 = vmatprep.subr.bf16.mxu0 0
        %1732 = vmatpush1.bf16.msra.mxu0 %v1710
        %1733 = vmatprep.subr.bf16.mxu0 0
        %1734 = vmatpush1.bf16.msra.mxu0 %v1711
        %1735 = vmatprep.subr.bf16.mxu0 0
        %1736 = vmatpush1.bf16.msra.mxu0 %v1712
        %1737 = vmatprep.subr.bf16.mxu0 0
        %1738 = vmatpush1.bf16.msra.mxu0 0
        %1739 = vmatprep.subr.bf16.mxu0 0
        %1740 = vmatpush1.bf16.msra.mxu0 0
        %1741 = vmatprep.subr.bf16.mxu0 0
        %1742 = vmatpush1.bf16.msra.mxu0 0
        %1743 = vmatprep.subr.bf16.mxu0 0
        %1744 = vmatpush1.bf16.msra.mxu0 0
        %1745 = vmatprep.subr.bf16.mxu0 0
        %1746 = vmatpush1.bf16.msra.mxu0 0
        %1747 = vmatprep.subr.bf16.mxu0 0
        %1748 = vmatpush1.bf16.msra.mxu0 0
        %1749 = vmatprep.subr.bf16.mxu0 0
        %1750 = vmatpush1.bf16.msra.mxu0 0
        %1751 = vmatprep.subr.bf16.mxu0 0
        %1752 = vmatpush1.bf16.msra.mxu0 0
        %1753 = vmatprep.mubr.bf16.mxu0 0
        %1754 = vmatmul.mubr.bf16.gmra.mrb[0].mxu0 %v1652
        %v1755 = vpop.f32.mrb[0].mxu0
        %v1756 = vadd.f32 0.0, %v1755
        %v1757 = vpop.f32.mrb[0].mxu0
        %v1758 = vpop.f32.mrb[0].mxu0
        %v1759 = vadd.f32 0.0, %v1758
        %v1760 = vpop.f32.mrb[0].mxu0
        %1761 = vmatprep.mubr.bf16.mxu0 0
        %1762 = vmatmul.mubr.bf16.gmra.mrb[0].mxu0 %v1653
        %v1763 = vpop.f32.mrb[0].mxu0
        %v1764 = vadd.f32 0.0, %v1763
        %v1765 = vpop.f32.mrb[0].mxu0
        %v1766 = vpop.f32.mrb[0].mxu0
        %v1767 = vadd.f32 0.0, %v1766
        %v1768 = vpop.f32.mrb[0].mxu0
        %1769 = vmatprep.mubr.bf16.mxu0 0
        %1770 = vmatmul.mubr.bf16.gmra.mrb[0].mxu0 %v1654
        %v1771 = vpop.f32.mrb[0].mxu0
        %v1772 = vadd.f32 0.0, %v1771
        %v1773 = vpop.f32.mrb[0].mxu0
        %v1774 = vpop.f32.mrb[0].mxu0
        %v1775 = vadd.f32 0.0, %v1774
        %v1776 = vpop.f32.mrb[0].mxu0
        %1777 = vmatprep.mubr.bf16.mxu0 0
        %1778 = vmatmul.mubr.bf16.gmra.mrb[0].mxu0 %v1655
        %v1779 = vpop.f32.mrb[0].mxu0
        %v1780 = vadd.f32 0.0, %v1779
        %v1781 = vpop.f32.mrb[0].mxu0
        %v1782 = vpop.f32.mrb[0].mxu0
        %v1783 = vadd.f32 0.0, %v1782
        %v1784 = vpop.f32.mrb[0].mxu0
        %1785 = vdwg.mxu0
        %v1786 = vadd.f32 %v1636, %v1756
        %v1787 = vadd.f32 %v1637, %v1759
        %v1788 = vadd.f32 %v1638, %v1764
        %v1789 = vadd.f32 %v1639, %v1767
        %v1790 = vadd.f32 %v1640, %v1772
        %v1791 = vadd.f32 %v1641, %v1775
        %v1792 = vadd.f32 %v1642, %v1780
        %v1793 = vadd.f32 %v1643, %v1783
        %v1794 = vld [vmem:[#allocation2 + $0x12] sm:$0xff]
        %v1795 = vld [vmem:[#allocation2 + $0x1a] sm:$0xff]
        %v1796 = vld [vmem:[#allocation2 + $0x22] sm:$0xff]
        %v1797 = vld [vmem:[#allocation2 + $0x2a] sm:$0xff]
        %v1798 = vld [vmem:[#allocation2 + $0x32] sm:$0xff]
        %v1799 = vld [vmem:[#allocation2 + $0x3a] sm:$0xff]
        %v1800 = vld [vmem:[#allocation2 + $0x42] sm:$0xff]
        %v1801 = vld [vmem:[#allocation2 + $0x4a] sm:$0xff]
        %v1802 = vmul.f32 %v1794, %v833
        %v1803 = vmul.f32 %v1795, %v838
        %v1804 = vmul.f32 %v1796, %v843
        %v1805 = vmul.f32 %v1797, %v848
        %v1806 = vmul.f32 %v1798, %v853
        %v1807 = vmul.f32 %v1799, %v858
        %v1808 = vmul.f32 %v1800, %v863
        %v1809 = vmul.f32 %v1801, %v868
        %v1810 = vpack.c.bf16 %v1803, %v1802
        %v1811 = vpack.c.bf16 %v1805, %v1804
        %v1812 = vpack.c.bf16 %v1807, %v1806
        %v1813 = vpack.c.bf16 %v1809, %v1808
        %s1814 = scalar_lea.vmem [#allocation9], 512
        %v1815 = vld [vmem:[%s1814] sm:$0xf]
        %v1816 = vld [vmem:[%s1814 + $0x4] sm:$0xf]
        %v1817 = vld [vmem:[%s1814 + $0x8] sm:$0xf]
        %v1818 = vld [vmem:[%s1814 + $0xc] sm:$0xf]
        %v1819 = vld [vmem:[%s1814 + $0x10] sm:$0xf]
        %v1820 = vld [vmem:[%s1814 + $0x14] sm:$0xf]
        %v1821 = vld [vmem:[%s1814 + $0x18] sm:$0xf]
        %v1822 = vld [vmem:[%s1814 + $0x1c] sm:$0xf]
        %v1823 = vld [vmem:[%s1814 + $0x20] sm:$0xf]
        %v1824 = vld [vmem:[%s1814 + $0x24] sm:$0xf]
        %v1825 = vld [vmem:[%s1814 + $0x28] sm:$0xf]
        %v1826 = vld [vmem:[%s1814 + $0x2c] sm:$0xf]
        %v1827 = vld [vmem:[%s1814 + $0x30] sm:$0xf]
        %v1828 = vld [vmem:[%s1814 + $0x34] sm:$0xf]
        %v1829 = vld [vmem:[%s1814 + $0x38] sm:$0xf]
        %v1830 = vld [vmem:[%s1814 + $0x3c] sm:$0xf]
        %v1847 = vunpack.c.l.b16 %v1815
        %v1848 = vunpack.c.l.b16 %v1816
        %v1849 = vunpack.c.l.b16 %v1817
        %v1850 = vunpack.c.l.b16 %v1818
        %v1851 = vunpack.c.l.b16 %v1819
        %v1852 = vunpack.c.l.b16 %v1820
        %v1853 = vunpack.c.l.b16 %v1821
        %v1854 = vunpack.c.l.b16 %v1822
        %v1855 = vunpack.c.l.b16 %v1823
        %v1856 = vunpack.c.l.b16 %v1824
        %v1857 = vunpack.c.l.b16 %v1825
        %v1858 = vunpack.c.l.b16 %v1826
        %v1859 = vunpack.c.l.b16 %v1827
        %v1860 = vunpack.c.l.b16 %v1828
        %v1861 = vunpack.c.l.b16 %v1829
        %v1862 = vunpack.c.l.b16 %v1830
        %v1863 = vpack.c.b16 %v1848, %v1847
        %v1864 = vpack.c.b16 %v1850, %v1849
        %v1865 = vpack.c.b16 %v1852, %v1851
        %v1866 = vpack.c.b16 %v1854, %v1853
        %v1867 = vpack.c.b16 %v1856, %v1855
        %v1868 = vpack.c.b16 %v1858, %v1857
        %v1869 = vpack.c.b16 %v1860, %v1859
        %v1870 = vpack.c.b16 %v1862, %v1861
        %1879 = vmatprep.subr.bf16.mxu0 0
        %1880 = vmatpush1.bf16.msra.mxu0 %v1863
        %1881 = vmatprep.subr.bf16.mxu0 0
        %1882 = vmatpush1.bf16.msra.mxu0 %v1864
        %1883 = vmatprep.subr.bf16.mxu0 0
        %1884 = vmatpush1.bf16.msra.mxu0 %v1865
        %1885 = vmatprep.subr.bf16.mxu0 0
        %1886 = vmatpush1.bf16.msra.mxu0 %v1866
        %1887 = vmatprep.subr.bf16.mxu0 0
        %1888 = vmatpush1.bf16.msra.mxu0 %v1867
        %1889 = vmatprep.subr.bf16.mxu0 0
        %1890 = vmatpush1.bf16.msra.mxu0 %v1868
        %1891 = vmatprep.subr.bf16.mxu0 0
        %1892 = vmatpush1.bf16.msra.mxu0 %v1869
        %1893 = vmatprep.subr.bf16.mxu0 0
        %1894 = vmatpush1.bf16.msra.mxu0 %v1870
        %1895 = vmatprep.subr.bf16.mxu0 0
        %1896 = vmatpush1.bf16.msra.mxu0 0
        %1897 = vmatprep.subr.bf16.mxu0 0
        %1898 = vmatpush1.bf16.msra.mxu0 0
        %1899 = vmatprep.subr.bf16.mxu0 0
        %1900 = vmatpush1.bf16.msra.mxu0 0
        %1901 = vmatprep.subr.bf16.mxu0 0
        %1902 = vmatpush1.bf16.msra.mxu0 0
        %1903 = vmatprep.subr.bf16.mxu0 0
        %1904 = vmatpush1.bf16.msra.mxu0 0
        %1905 = vmatprep.subr.bf16.mxu0 0
        %1906 = vmatpush1.bf16.msra.mxu0 0
        %1907 = vmatprep.subr.bf16.mxu0 0
        %1908 = vmatpush1.bf16.msra.mxu0 0
        %1909 = vmatprep.subr.bf16.mxu0 0
        %1910 = vmatpush1.bf16.msra.mxu0 0
        %1911 = vmatprep.mubr.bf16.mxu0 0
        %1912 = vmatmul.mubr.bf16.gmra.mrb[0].mxu0 %v1810
        %v1913 = vpop.f32.mrb[0].mxu0
        %v1914 = vadd.f32 0.0, %v1913
        %v1915 = vpop.f32.mrb[0].mxu0
        %v1916 = vpop.f32.mrb[0].mxu0
        %v1917 = vadd.f32 0.0, %v1916
        %v1918 = vpop.f32.mrb[0].mxu0
        %1919 = vmatprep.mubr.bf16.mxu0 0
        %1920 = vmatmul.mubr.bf16.gmra.mrb[0].mxu0 %v1811
        %v1921 = vpop.f32.mrb[0].mxu0
        %v1922 = vadd.f32 0.0, %v1921
        %v1923 = vpop.f32.mrb[0].mxu0
        %v1924 = vpop.f32.mrb[0].mxu0
        %v1925 = vadd.f32 0.0, %v1924
        %v1926 = vpop.f32.mrb[0].mxu0
        %1927 = vmatprep.mubr.bf16.mxu0 0
        %1928 = vmatmul.mubr.bf16.gmra.mrb[0].mxu0 %v1812
        %v1929 = vpop.f32.mrb[0].mxu0
        %v1930 = vadd.f32 0.0, %v1929
        %v1931 = vpop.f32.mrb[0].mxu0
        %v1932 = vpop.f32.mrb[0].mxu0
        %v1933 = vadd.f32 0.0, %v1932
        %v1934 = vpop.f32.mrb[0].mxu0
        %1935 = vmatprep.mubr.bf16.mxu0 0
        %1936 = vmatmul.mubr.bf16.gmra.mrb[0].mxu0 %v1813
        %v1937 = vpop.f32.mrb[0].mxu0
        %v1938 = vadd.f32 0.0, %v1937
        %v1939 = vpop.f32.mrb[0].mxu0
        %v1940 = vpop.f32.mrb[0].mxu0
        %v1941 = vadd.f32 0.0, %v1940
        %v1942 = vpop.f32.mrb[0].mxu0
        %1943 = vdwg.mxu0
        %v1944 = vadd.f32 %v1786, %v1914
        %v1945 = vadd.f32 %v1787, %v1917
        %v1946 = vadd.f32 %v1788, %v1922
        %v1947 = vadd.f32 %v1789, %v1925
        %v1948 = vadd.f32 %v1790, %v1930
        %v1949 = vadd.f32 %v1791, %v1933
        %v1950 = vadd.f32 %v1792, %v1938
        %v1951 = vadd.f32 %v1793, %v1941
        %v1952 = vld [vmem:[#allocation11] sm:$0x1]
        %v1954 = vlaneseq
        %v1955 = vshrl.u32 %v1954, 7
        %v1956 = vsub.s32 0, %v1955
        %v1957 = vrot.slane %v1952, %v1956
        %v1959 = vadd.f32 %v1944, %v1957
        %v1960 = vadd.f32 %v1945, %v1957
        %v1961 = vadd.f32 %v1946, %v1957
        %v1962 = vadd.f32 %v1947, %v1957
        %v1963 = vadd.f32 %v1948, %v1957
        %v1964 = vadd.f32 %v1949, %v1957
        %v1965 = vadd.f32 %v1950, %v1957
        %v1966 = vadd.f32 %v1951, %v1957
        %1967 = vst [vmem:[%s408] sm:$0xff] %v1959
        %1968 = vst [vmem:[%s408 + $0x8] sm:$0xff] %v1960
        %1969 = vst [vmem:[%s408 + $0x10] sm:$0xff] %v1961
        %1970 = vst [vmem:[%s408 + $0x18] sm:$0xff] %v1962
        %1971 = vst [vmem:[%s408 + $0x20] sm:$0xff] %v1963
        %1972 = vst [vmem:[%s408 + $0x28] sm:$0xff] %v1964
        %1973 = vst [vmem:[%s408 + $0x30] sm:$0xff] %v1965
        %1974 = vst [vmem:[%s408 + $0x38] sm:$0xff] %v1966
        %v1975 = vadd.f32 %v1959, %v1960
        %v1976 = vadd.f32 %v1975, %v1961
        %v1977 = vadd.f32 %v1976, %v1962
        %v1978 = vadd.f32 %v1977, %v1963
        %v1979 = vadd.f32 %v1978, %v1964
        %v1980 = vadd.f32 %v1979, %v1965
        %v1981 = vadd.f32 %v1980, %v1966
        %v1982 = vrot.slane %v1981, 4
        %v1983 = vadd.f32 %v1981, %v1982
        %v1984 = vrot.slane %v1983, 2
        %v1985 = vadd.f32 %v1983, %v1984
        %v1986 = vrot.slane %v1985, 1
        %v1987 = vadd.f32 %v1985, %v1986
        %1988 = vst [vmem:[%s415] sm:$0x1] %v1987
        %v1989 = vmul.f32 %v1959, %v1959
        %v1990 = vmul.f32 %v1960, %v1960
        %v1991 = vmul.f32 %v1961, %v1961
        %v1992 = vmul.f32 %v1962, %v1962
        %v1993 = vmul.f32 %v1963, %v1963
        %v1994 = vmul.f32 %v1964, %v1964
        %v1995 = vmul.f32 %v1965, %v1965
        %v1996 = vmul.f32 %v1966, %v1966
        %v1997 = vadd.f32 %v1989, %v1990
        %v1998 = vadd.f32 %v1997, %v1991
        %v1999 = vadd.f32 %v1998, %v1992
        %v2000 = vadd.f32 %v1999, %v1993
        %v2001 = vadd.f32 %v2000, %v1994
        %v2002 = vadd.f32 %v2001, %v1995
        %v2003 = vadd.f32 %v2002, %v1996
        %v2004 = vrot.slane %v2003, 4
        %v2005 = vadd.f32 %v2003, %v2004
        %v2006 = vrot.slane %v2005, 2
        %v2007 = vadd.f32 %v2005, %v2006
        %v2008 = vrot.slane %v2007, 1
        %v2009 = vadd.f32 %v2007, %v2008
        %2010 = vst [vmem:[%s415 + $0x1] sm:$0x1] %v2009
        %s2011 = sand.u32 %s192, 1
        %s2012 = scalar_lea.sflag [#allocation5], %s2011
        %s2013 = sand.u32 %s192, 1
        %s2014 = smul.addr %s2013, 64
        %s2015 = scalar_lea.vmem [#allocation15], %s2014
        %s2016 = sand.u32 %s218, 1
        %s2017 = scalar_lea.sflag [#allocation17], %s2016
        %s2018 = sand.u32 %s218, 1
        %s2019 = smul.addr %s2018, 2
        %s2020 = scalar_lea.vmem [#allocation16], %s2019
        // Predicated region
        $region77: #{basic_block_forward.4} parent=47 // pred_check
          %p2021 = pneg %p202
        $region78: #{basic_block_forward.4} parent=47 // pred_check_branch
          %2023 = sbr.rel (%p2021) target = $region80
        $region79: #{basic_block_forward.4} parent=47 // pred_region
          %s2025 = ssub.s32 1024, 1024
          %2026 = vsyncadd %s2012, %s2025
          %s2027 = smul.addr %s32, 8
          %s2028 = smul.addr %s2027, 128
          %s2029 = scalar_lea.hbm %s7, %s2028
          %s2030 = sshll.u32 %s2015, 4
          %s2031 = int_to_ptr.vmem [resolvable:$true] %s2030
          %2036 = dma.vmem_to_hbm [thread:$0]  %s2031, 1024, %s2029, %s2012, 128, 128, 8
        $region80: #{basic_block_forward.4} parent=47 // pred_fallthru
          _
        // Predicated region
        $region81: #{basic_block_forward.4} parent=47 // pred_check
          %p2037 = pneg %p228
        $region82: #{basic_block_forward.4} parent=47 // pred_check_branch
          %2039 = sbr.rel (%p2037) target = $region84
        $region83: #{basic_block_forward.4} parent=47 // pred_region
          %s2041 = ssub.s32 32, 32
          %2042 = vsyncadd %s2017, %s2041
          %s2043 = smul.addr %s32, 32
          %s2044 = scalar_lea.hbm %s8, %s2043
          %s2046 = sshll.u32 %s2020, 4
          %s2047 = int_to_ptr.vmem [resolvable:$true] %s2046
          %2049 = dma.vmem_to_hbm [thread:$0]  %s2047, 32, %s2044, %s2017
        $region84: #{basic_block_forward.4} parent=47 // pred_fallthru
          _
      $region48: #{basic_block_forward.4} parent=5 // pred_fallthru
        _
      %p2050 = scmp.le.s32.totalorder 2, %s27
      // Predicated region
      $region85: #{basic_block_forward.4} parent=5 // pred_check
        %p2051 = pneg %p2050
      $region86: #{basic_block_forward.4} parent=5 // pred_check_branch
        %2053 = sbr.rel (%p2051) target = $region88
      $region87: #{basic_block_forward.4} parent=5 // pred_region
        %s2054 = ssub.s32 %s27, 2
        // Predicated region
        $region89: #{basic_block_forward.4} parent=87 // pred_check
          %p2055 = pneg %p208
        $region90: #{basic_block_forward.4} parent=87 // pred_check_branch
          %2057 = sbr.rel (%p2055) target = $region92
        $region91: #{basic_block_forward.4} parent=87 // pred_region
          %s2058 = sand.u32 %s193, 1
          %s2059 = scalar_lea.sflag [#allocation5], %s2058
          %s2060 = sand.u32 %s193, 1
          %s2061 = smul.addr %s2060, 64
          %s2062 = scalar_lea.vmem [#allocation15], %s2061
          %2063 = dma.done %s2059, 1024
        $region92: #{basic_block_forward.4} parent=87 // pred_fallthru
          _
        // Predicated region
        $region93: #{basic_block_forward.4} parent=87 // pred_check
          %p2064 = pneg %p234
        $region94: #{basic_block_forward.4} parent=87 // pred_check_branch
          %2066 = sbr.rel (%p2064) target = $region96
        $region95: #{basic_block_forward.4} parent=87 // pred_region
          %s2067 = sand.u32 %s219, 1
          %s2068 = scalar_lea.sflag [#allocation17], %s2067
          %s2069 = sand.u32 %s219, 1
          %s2070 = smul.addr %s2069, 2
          %s2071 = scalar_lea.vmem [#allocation16], %s2070
          %2072 = dma.done %s2068, 32
        $region96: #{basic_block_forward.4} parent=87 // pred_fallthru
          _
      $region88: #{basic_block_forward.4} parent=5 // pred_fallthru
        _
    $region6: #{basic_block_forward.4} parent=1 // loop_footer
      %s31 = sadd.s32 1, %s27
    $region7: #{basic_block_forward.4} parent=1 // loop_footer_branch
      %26 = sbr.rel target = $region3
    $region8: #{basic_block_forward.4} parent=1 // loop_exit
      _
    %2073 = vsyncpa [#allocation4], 1
    %s2074 = scalar_lea.sflag [#allocation4], 1
    %2075 = vsyncpa %s2074, 1
    %2076 = vsyncpa [#allocation7], 1
    %2077 = vsyncpa [#allocation10], 1
    %2078 = vsyncpa [#allocation13], 1
    %2079 = vsyncpa [#allocation5], 1
    %s2080 = scalar_lea.sflag [#allocation5], 1
    %2081 = vsyncpa %s2080, 1
    %2082 = vsyncpa [#allocation17], 1
    %s2083 = scalar_lea.sflag [#allocation17], 1
    %2084 = vsyncpa %s2083, 1

</llo_original>
